<compile_context>
chip_gen: v7x
topology: tpu7x:2x2x1
jax: 0.10.0
libtpu: 0.0.40
codegen_flags: <defaults>
</compile_context>

<pallas_src>
import jax
import jax.numpy as jnp
from jax.experimental import pallas as pl
from jax.experimental.pallas import tpu as pltpu

# ---------------------------------------------------------------------------
# Toy CLIP ViT config
# ---------------------------------------------------------------------------
BATCH = 4
B_TILE = 2                         # images stacked into matmul M per grid step
NUM_B_TILES = BATCH // B_TILE
IN_CHANS = 3
IMG = 32
PATCH = 16
EMBED = 64
DEPTH = 2
HEADS = 4
HEAD_DIM = EMBED // HEADS
MLP_HIDDEN = 4 * EMBED
OUT_DIM = 128                      # visual.proj width (512 in real CLIP); keeps final store lane-dense
NUM_PATCHES = (IMG // PATCH) ** 2
SEQ = NUM_PATCHES + 1              # +1 CLS token
M_ROWS = B_TILE * SEQ              # batch-stacked token rows per grid step
PATCH_DIM = IN_CHANS * PATCH * PATCH
LN_EPS = 1e-5                      # CLIP LayerNorm eps (PyTorch default)
ATTN_SCALE = HEAD_DIM ** -0.5
NEG_INF = -1e30


# ---------------------------------------------------------------------------
# In-kernel helpers
# ---------------------------------------------------------------------------
def _mm(a, w_bf16):
    """MXU matmul: bf16 operands (weights already stored bf16), f32 accumulation."""
    return jnp.dot(a.astype(jnp.bfloat16), w_bf16, preferred_element_type=jnp.float32)


def _ln(x, g, b):
    x = x.astype(jnp.float32)
    mu = jnp.mean(x, axis=-1, keepdims=True)
    xc = x - mu
    var = jnp.mean(xc * xc, axis=-1, keepdims=True)
    return xc * jax.lax.rsqrt(var + LN_EPS) * g.astype(jnp.float32) + b.astype(jnp.float32)


# ---------------------------------------------------------------------------
# The fused kernel: one (batch_tile, layer) grid step per invocation
# ---------------------------------------------------------------------------
def _clip_vit_kernel(
    patches_ref, attn_bias_ref, patch_w_ref, embed_add_ref,
    ln_pre_g_ref, ln_pre_b_ref,
    ln1_g_ref, ln1_b_ref, qkv_w_ref, qkv_b_ref, proj_w_ref, proj_b_ref,
    ln2_g_ref, ln2_b_ref, fc1_w_ref, fc1_b_ref, fc2_w_ref, fc2_b_ref,
    ln_post_g_ref, ln_post_b_ref, head_w_ref,
    out_ref, h_scr):
    layer = pl.program_id(1)

    # ---- first layer only: patch embed + class/pos embed + ln_pre ----------
    @pl.when(layer == 0)
    def _embed():
        # patches rows for B_TILE images are already stacked; each image's CLS
        # slot row is all zeros, and embed_add holds [class+pos0; pos1:] tiled
        # per image -> one (M_ROWS, PATCH_DIM) x (PATCH_DIM, EMBED) matmul.
        tok = _mm(patches_ref[0], patch_w_ref[...])
        h0 = tok + embed_add_ref[...].astype(jnp.float32)
        h_scr[...] = _ln(h0, ln_pre_g_ref[...], ln_pre_b_ref[...])

    h = h_scr[...]                                            # (M_ROWS, EMBED) f32

    # ---- multi-head self-attention (pre-LN), heads batched ------------------
    y = _ln(h, ln1_g_ref[0], ln1_b_ref[0])
    qkv = _mm(y, qkv_w_ref[0]) + qkv_b_ref[0]                 # (M_ROWS, 3E) f32

    def head_slices(base):
        return [qkv[:, base + hh * HEAD_DIM: base + (hh + 1) * HEAD_DIM]
                for hh in range(HEADS)]

    # (HEADS, M_ROWS, HEAD_DIM), bf16 operands for the MXU
    q_h = jnp.stack(head_slices(0), axis=0).astype(jnp.bfloat16)
    k_h = jnp.stack(head_slices(EMBED), axis=0).astype(jnp.bfloat16)
    v_h = jnp.stack(head_slices(2 * EMBED), axis=0).astype(jnp.bfloat16)

    # One batched contraction for scores (no explicit k.T) and one for PV.
    s = jnp.einsum('hqd,hkd->hqk', q_h, k_h,
                   preferred_element_type=jnp.float32)        # (H, M, M)
    # Block-diagonal bias keeps the B_TILE stacked images independent.
    s = s * ATTN_SCALE + attn_bias_ref[...]
    s = s - jnp.max(s, axis=-1, keepdims=True)
    p = jnp.exp(s)
    p = p * pl.reciprocal(jnp.sum(p, axis=-1, keepdims=True), approx=True)
    o = jnp.einsum('hqk,hkd->hqd', p.astype(jnp.bfloat16), v_h,
                   preferred_element_type=jnp.float32)        # (H, M, HEAD_DIM)

    # Concat heads back on the lane axis -> single (M, E) x (E, E) out-proj.
    o_slab = jnp.concatenate([o[hh] for hh in range(HEADS)], axis=-1)
    h = h + _mm(o_slab, proj_w_ref[0]) + proj_b_ref[0]

    # ---- MLP with quick_gelu -------------------------------------------------
    y = _ln(h, ln2_g_ref[0], ln2_b_ref[0])
    y = _mm(y, fc1_w_ref[0]) + fc1_b_ref[0]                   # (M_ROWS, 4E) stays in VMEM
    y = y * pl.reciprocal(1.0 + jnp.exp(-1.702 * y), approx=True)   # quick_gelu
    y = _mm(y, fc2_w_ref[0]) + fc2_b_ref[0]
    h = h + y

    h_scr[...] = h                                            # carry to next layer

    # ---- last layer only: ln_post on CLS tokens + visual projection ---------
    @pl.when(layer == DEPTH - 1)
    def _head():
        cls = jnp.concatenate(
            [h[b * SEQ: b * SEQ + 1, :] for b in range(B_TILE)], axis=0)  # (B_TILE, E)
        c = _ln(cls, ln_post_g_ref[...], ln_post_b_ref[...])
        out_ref[0] = _mm(c, head_w_ref[...]).astype(out_ref.dtype)


# ---------------------------------------------------------------------------
# Wrapper (one-time layout plumbing in plain JAX, then ONE pallas_call)
# ---------------------------------------------------------------------------
def clip_encode_image(x, params):
    B, C, H, W = x.shape
    assert B % B_TILE == 0 and C == IN_CHANS and H == IMG and W == IMG
    nbt = B // B_TILE
    Hp, Wp = H // PATCH, W // PATCH

    # im2col: Conv2d(k=P, s=P, bias=False) == per-patch linear on (C,P,P) vectors.
    patches = x.reshape(B, C, Hp, PATCH, Wp, PATCH).transpose(0, 2, 4, 1, 3, 5)
    patches = patches.reshape(B, Hp * Wp, PATCH_DIM)
    # Zero row in each image's CLS slot so the kernel does one full-slab matmul.
    patches = jnp.concatenate(
        [jnp.zeros((B, 1, PATCH_DIM), patches.dtype), patches], axis=1)
    # Pre-flatten B_TILE images into the matmul M dimension (XLA-side reshape).
    patches = patches.reshape(nbt, M_ROWS, PATCH_DIM)

    # Fold class_embedding + positional_embedding into one additive table,
    # tiled per stacked image.
    embed_add = jnp.concatenate(
        [params["class_emb"] + params["pos_emb"][0:1], params["pos_emb"][1:]], axis=0)
    embed_add = jnp.tile(embed_add, (B_TILE, 1))                       # (M_ROWS, EMBED)

    # Block-diagonal attention bias: stacked images never attend to each other.
    img_id = jnp.arange(M_ROWS) // SEQ
    attn_bias = jnp.where(img_id[:, None] == img_id[None, :],
                          0.0, NEG_INF).astype(jnp.float32)            # (M_ROWS, M_ROWS)

    def const_spec(shape):
        zeros = (0,) * len(shape)
        return pl.BlockSpec(shape, lambda bt, l: zeros)

    def layer_spec(shape):   # per-layer param stacked on a leading depth axis
        zeros = (0,) * len(shape)
        return pl.BlockSpec((1,) + shape, lambda bt, l: (l,) + zeros)

    out = pl.pallas_call(
        _clip_vit_kernel,
        out_shape=jax.ShapeDtypeStruct((nbt, B_TILE, OUT_DIM), jnp.float32),
        grid=(nbt, DEPTH),
        in_specs=[
            pl.BlockSpec((1, M_ROWS, PATCH_DIM), lambda bt, l: (bt, 0, 0)),  # patches
            const_spec((M_ROWS, M_ROWS)),                                    # attn_bias
            const_spec((PATCH_DIM, EMBED)),                                  # patch_w (bf16)
            const_spec((M_ROWS, EMBED)),                                     # embed_add
            const_spec((1, EMBED)), const_spec((1, EMBED)),                  # ln_pre
            layer_spec((1, EMBED)), layer_spec((1, EMBED)),                  # ln1
            layer_spec((EMBED, 3 * EMBED)), layer_spec((1, 3 * EMBED)),      # qkv
            layer_spec((EMBED, EMBED)), layer_spec((1, EMBED)),              # out_proj
            layer_spec((1, EMBED)), layer_spec((1, EMBED)),                  # ln2
            layer_spec((EMBED, MLP_HIDDEN)), layer_spec((1, MLP_HIDDEN)),    # fc1
            layer_spec((MLP_HIDDEN, EMBED)), layer_spec((1, EMBED)),         # fc2
            const_spec((1, EMBED)), const_spec((1, EMBED)),                  # ln_post
            const_spec((EMBED, OUT_DIM)),                                    # visual.proj
        ],
        out_specs=pl.BlockSpec((1, B_TILE, OUT_DIM), lambda bt, l: (bt, 0, 0)),
        scratch_shapes=[pltpu.VMEM((M_ROWS, EMBED), jnp.float32)],
        compiler_params=pltpu.CompilerParams(
            dimension_semantics=("parallel", "arbitrary"),
            vmem_limit_bytes=32 * 1024 * 1024),
    )(
        patches, attn_bias, params["patch_w"], embed_add,
        params["ln_pre_g"], params["ln_pre_b"],
        params["ln1_g"], params["ln1_b"],
        params["qkv_w"], params["qkv_b"],
        params["proj_w"], params["proj_b"],
        params["ln2_g"], params["ln2_b"],
        params["fc1_w"], params["fc1_b"],
        params["fc2_w"], params["fc2_b"],
        params["ln_post_g"], params["ln_post_b"],
        params["head_w"],
    )
    return out.reshape(B, OUT_DIM)


# ---------------------------------------------------------------------------
# Deterministic parameter init (random stand-in for pretrained CLIP weights)
# ---------------------------------------------------------------------------
def init_params(key):
    std = 0.02
    ks = jax.random.split(key, 8)

    def nrm(k, shape, dtype=jnp.bfloat16):
        return (std * jax.random.normal(k, shape, jnp.float32)).astype(dtype)

    ones = lambda s: jnp.ones(s, jnp.float32)
    zeros = lambda s: jnp.zeros(s, jnp.float32)
    # TODO(synk): to load real CLIP weights, patch_w = conv1.weight.reshape(EMBED, -1).T
    #             (matching the im2col above); bf16-cast once here.
    return {
        # large matmul weights stored bf16 in HBM (halves weight DMA + VMEM)
        "patch_w": nrm(ks[0], (PATCH_DIM, EMBED)),
        "qkv_w": nrm(ks[3], (DEPTH, EMBED, 3 * EMBED)),
        "proj_w": nrm(ks[4], (DEPTH, EMBED, EMBED)),
        "fc1_w": nrm(ks[5], (DEPTH, EMBED, MLP_HIDDEN)),
        "fc2_w": nrm(ks[6], (DEPTH, MLP_HIDDEN, EMBED)),
        "head_w": nrm(ks[7], (EMBED, OUT_DIM)),
        # small params stay f32 (LN/softmax math stays f32, incl. on v5e)
        "class_emb": nrm(ks[1], (1, EMBED), jnp.float32),
        "pos_emb": nrm(ks[2], (SEQ, EMBED), jnp.float32),
        "ln_pre_g": ones((1, EMBED)), "ln_pre_b": zeros((1, EMBED)),
        "ln1_g": ones((DEPTH, 1, EMBED)), "ln1_b": zeros((DEPTH, 1, EMBED)),
        "qkv_b": zeros((DEPTH, 1, 3 * EMBED)),
        "proj_b": zeros((DEPTH, 1, EMBED)),
        "ln2_g": ones((DEPTH, 1, EMBED)), "ln2_b": zeros((DEPTH, 1, EMBED)),
        "fc1_b": zeros((DEPTH, 1, MLP_HIDDEN)),
        "fc2_b": zeros((DEPTH, 1, EMBED)),
        "ln_post_g": ones((1, EMBED)), "ln_post_b": zeros((1, EMBED)),
    }


if __name__ == "__main__":
    root = jax.random.PRNGKey(0)
    pkey, xkey = jax.random.split(root)
    params = init_params(pkey)
    x = jax.random.normal(xkey, (BATCH, IN_CHANS, IMG, IMG), jnp.float32)

    fwd = jax.jit(clip_encode_image)
    out = jax.block_until_ready(fwd(x, params))

    assert out.shape == (BATCH, OUT_DIM), out.shape
    assert bool(jnp.all(jnp.isfinite(out)))
    print("KERNEL_OK")
</pallas_src>

<mosaic_0001>
module attributes {stable_mosaic.version = 11 : i64} {
  func.func @_clip_vit_kernel(%arg0: i32, %arg1: i32, %arg2: memref<1x10x768xf32, #tpu.memory_space<vmem>>, %arg3: memref<10x10xf32, #tpu.memory_space<vmem>>, %arg4: memref<768x64xbf16, #tpu.memory_space<vmem>>, %arg5: memref<10x64xf32, #tpu.memory_space<vmem>>, %arg6: memref<1x64xf32, #tpu.memory_space<vmem>>, %arg7: memref<1x64xf32, #tpu.memory_space<vmem>>, %arg8: memref<1x1x64xf32, #tpu.memory_space<vmem>>, %arg9: memref<1x1x64xf32, #tpu.memory_space<vmem>>, %arg10: memref<1x64x192xbf16, #tpu.memory_space<vmem>>, %arg11: memref<1x1x192xf32, #tpu.memory_space<vmem>>, %arg12: memref<1x64x64xbf16, #tpu.memory_space<vmem>>, %arg13: memref<1x1x64xf32, #tpu.memory_space<vmem>>, %arg14: memref<1x1x64xf32, #tpu.memory_space<vmem>>, %arg15: memref<1x1x64xf32, #tpu.memory_space<vmem>>, %arg16: memref<1x64x256xbf16, #tpu.memory_space<vmem>>, %arg17: memref<1x1x256xf32, #tpu.memory_space<vmem>>, %arg18: memref<1x256x64xbf16, #tpu.memory_space<vmem>>, %arg19: memref<1x1x64xf32, #tpu.memory_space<vmem>>, %arg20: memref<1x64xf32, #tpu.memory_space<vmem>>, %arg21: memref<1x64xf32, #tpu.memory_space<vmem>>, %arg22: memref<64x128xbf16, #tpu.memory_space<vmem>>, %arg23: memref<1x2x128xf32, #tpu.memory_space<vmem>>, %arg24: memref<10x64xf32, #tpu.memory_space<vmem>>) attributes {dimension_semantics = [#tpu.dimension_semantics<parallel>, #tpu.dimension_semantics<arbitrary>], iteration_bounds = array<i64: 2, 2>, scalar_prefetch = 0 : i64, scratch_operands = 1 : i64, tpu.core_type = #tpu.core_type<tc>, window_params = [{transform_indices = @transform_0, window_bounds = array<i64: 1, 10, 768>}, {pipeline_mode = #tpu.pipeline_mode<synchronous>, transform_indices = @transform_1, window_bounds = array<i64: 10, 10>}, {pipeline_mode = #tpu.pipeline_mode<synchronous>, transform_indices = @transform_2, window_bounds = array<i64: 768, 64>}, {pipeline_mode = #tpu.pipeline_mode<synchronous>, transform_indices = @transform_3, window_bounds = array<i64: 10, 64>}, {pipeline_mode = #tpu.pipeline_mode<synchronous>, transform_indices = @transform_4, window_bounds = array<i64: 1, 64>}, {pipeline_mode = #tpu.pipeline_mode<synchronous>, transform_indices = @transform_5, window_bounds = array<i64: 1, 64>}, {transform_indices = @transform_6, window_bounds = array<i64: 1, 1, 64>}, {transform_indices = @transform_7, window_bounds = array<i64: 1, 1, 64>}, {transform_indices = @transform_8, window_bounds = array<i64: 1, 64, 192>}, {transform_indices = @transform_9, window_bounds = array<i64: 1, 1, 192>}, {transform_indices = @transform_10, window_bounds = array<i64: 1, 64, 64>}, {transform_indices = @transform_11, window_bounds = array<i64: 1, 1, 64>}, {transform_indices = @transform_12, window_bounds = array<i64: 1, 1, 64>}, {transform_indices = @transform_13, window_bounds = array<i64: 1, 1, 64>}, {transform_indices = @transform_14, window_bounds = array<i64: 1, 64, 256>}, {transform_indices = @transform_15, window_bounds = array<i64: 1, 1, 256>}, {transform_indices = @transform_16, window_bounds = array<i64: 1, 256, 64>}, {transform_indices = @transform_17, window_bounds = array<i64: 1, 1, 64>}, {pipeline_mode = #tpu.pipeline_mode<synchronous>, transform_indices = @transform_18, window_bounds = array<i64: 1, 64>}, {pipeline_mode = #tpu.pipeline_mode<synchronous>, transform_indices = @transform_19, window_bounds = array<i64: 1, 64>}, {pipeline_mode = #tpu.pipeline_mode<synchronous>, transform_indices = @transform_20, window_bounds = array<i64: 64, 128>}, {transform_indices = @transform_21, window_bounds = array<i64: 1, 2, 128>}]} {
    %c0_i32 = arith.constant 0 : i32
    %0 = arith.cmpi eq, %arg1, %c0_i32 : i32
    %1 = arith.extui %0 : i1 to i32
    %c0_i32_0 = arith.constant 0 : i32
    %2 = arith.cmpi ne, %1, %c0_i32_0 : i32
    scf.if %2 {
      %c0_63 = arith.constant 0 : index
      %c0_64 = arith.constant 0 : index
      %c0_65 = arith.constant 0 : index
      %155 = vector.load %arg2[%c0_63, %c0_64, %c0_65] : memref<1x10x768xf32, #tpu.memory_space<vmem>>, vector<1x10x768xf32>
      %156 = vector.shape_cast %155 : vector<1x10x768xf32> to vector<10x768xf32>
      %c0_66 = arith.constant 0 : index
      %c0_67 = arith.constant 0 : index
      %157 = vector.load %arg4[%c0_66, %c0_67] : memref<768x64xbf16, #tpu.memory_space<vmem>>, vector<768x64xbf16>
      %158 = arith.truncf %156 : vector<10x768xf32> to vector<10x768xbf16>
      %cst_68 = arith.constant dense<0.000000e+00> : vector<10x64xf32>
      %159 = tpu.matmul %158, %157, %cst_68 {dimension_numbers = #tpu.dot_dimension_numbers<[1], [0], [0], [1], [0, 0, 1, 1], [], []>} : vector<10x768xbf16>, vector<768x64xbf16>, vector<10x64xf32> -> vector<10x64xf32>
      %c0_69 = arith.constant 0 : index
      %c0_70 = arith.constant 0 : index
      %160 = vector.load %arg5[%c0_69, %c0_70] : memref<10x64xf32, #tpu.memory_space<vmem>>, vector<10x64xf32>
      %161 = arith.addf %159, %160 : vector<10x64xf32>
      %c0_71 = arith.constant 0 : index
      %c0_72 = arith.constant 0 : index
      %162 = vector.load %arg6[%c0_71, %c0_72] : memref<1x64xf32, #tpu.memory_space<vmem>>, vector<1x64xf32>
      %c0_73 = arith.constant 0 : index
      %c0_74 = arith.constant 0 : index
      %163 = vector.load %arg7[%c0_73, %c0_74] : memref<1x64xf32, #tpu.memory_space<vmem>>, vector<1x64xf32>
      %cst_75 = arith.constant dense<0.000000e+00> : vector<10xf32>
      %164 = vector.multi_reduction <add>, %161, %cst_75 [1] : vector<10x64xf32> to vector<10xf32>
      %165 = vector.shape_cast %164 : vector<10xf32> to vector<10x1xf32>
      %cst_76 = arith.constant 6.400000e+01 : f32
      %166 = vector.broadcast %cst_76 : f32 to vector<10x1xf32>
      %167 = arith.divf %165, %166 : vector<10x1xf32>
      %168 = vector.broadcast %167 : vector<10x1xf32> to vector<10x64xf32>
      %169 = arith.subf %161, %168 : vector<10x64xf32>
      %170 = arith.mulf %169, %169 : vector<10x64xf32>
      %cst_77 = arith.constant dense<0.000000e+00> : vector<10xf32>
      %171 = vector.multi_reduction <add>, %170, %cst_77 [1] : vector<10x64xf32> to vector<10xf32>
      %172 = vector.shape_cast %171 : vector<10xf32> to vector<10x1xf32>
      %cst_78 = arith.constant 6.400000e+01 : f32
      %173 = vector.broadcast %cst_78 : f32 to vector<10x1xf32>
      %174 = arith.divf %172, %173 : vector<10x1xf32>
      %cst_79 = arith.constant 9.99999974E-6 : f32
      %175 = vector.broadcast %cst_79 : f32 to vector<10x1xf32>
      %176 = arith.addf %174, %175 : vector<10x1xf32>
      %177 = math.rsqrt %176 : vector<10x1xf32>
      %178 = vector.broadcast %177 : vector<10x1xf32> to vector<10x64xf32>
      %179 = arith.mulf %169, %178 : vector<10x64xf32>
      %180 = vector.broadcast %162 : vector<1x64xf32> to vector<10x64xf32>
      %181 = arith.mulf %179, %180 : vector<10x64xf32>
      %182 = vector.broadcast %163 : vector<1x64xf32> to vector<10x64xf32>
      %183 = arith.addf %181, %182 : vector<10x64xf32>
      %c0_80 = arith.constant 0 : index
      %c0_81 = arith.constant 0 : index
      %184 = vector.load %arg24[%c0_80, %c0_81] : memref<10x64xf32, #tpu.memory_space<vmem>>, vector<10x64xf32>
      tpu.vector_store %arg24[%c0_80, %c0_81], %183 {strides = array<i32>} : memref<10x64xf32, #tpu.memory_space<vmem>>, vector<10x64xf32>,
    } else {
    }
    %c0 = arith.constant 0 : index
    %c0_1 = arith.constant 0 : index
    %3 = vector.load %arg24[%c0, %c0_1] : memref<10x64xf32, #tpu.memory_space<vmem>>, vector<10x64xf32>
    %c0_2 = arith.constant 0 : index
    %c0_3 = arith.constant 0 : index
    %c0_4 = arith.constant 0 : index
    %4 = vector.load %arg8[%c0_2, %c0_3, %c0_4] : memref<1x1x64xf32, #tpu.memory_space<vmem>>, vector<1x1x64xf32>
    %5 = vector.shape_cast %4 : vector<1x1x64xf32> to vector<1x64xf32>
    %c0_5 = arith.constant 0 : index
    %c0_6 = arith.constant 0 : index
    %c0_7 = arith.constant 0 : index
    %6 = vector.load %arg9[%c0_5, %c0_6, %c0_7] : memref<1x1x64xf32, #tpu.memory_space<vmem>>, vector<1x1x64xf32>
    %7 = vector.shape_cast %6 : vector<1x1x64xf32> to vector<1x64xf32>
    %cst = arith.constant dense<0.000000e+00> : vector<10xf32>
    %8 = vector.multi_reduction <add>, %3, %cst [1] : vector<10x64xf32> to vector<10xf32>
    %9 = vector.shape_cast %8 : vector<10xf32> to vector<10x1xf32>
    %cst_8 = arith.constant 6.400000e+01 : f32
    %10 = vector.broadcast %cst_8 : f32 to vector<10x1xf32>
    %11 = arith.divf %9, %10 : vector<10x1xf32>
    %12 = vector.broadcast %11 : vector<10x1xf32> to vector<10x64xf32>
    %13 = arith.subf %3, %12 : vector<10x64xf32>
    %14 = arith.mulf %13, %13 : vector<10x64xf32>
    %cst_9 = arith.constant dense<0.000000e+00> : vector<10xf32>
    %15 = vector.multi_reduction <add>, %14, %cst_9 [1] : vector<10x64xf32> to vector<10xf32>
    %16 = vector.shape_cast %15 : vector<10xf32> to vector<10x1xf32>
    %cst_10 = arith.constant 6.400000e+01 : f32
    %17 = vector.broadcast %cst_10 : f32 to vector<10x1xf32>
    %18 = arith.divf %16, %17 : vector<10x1xf32>
    %cst_11 = arith.constant 9.99999974E-6 : f32
    %19 = vector.broadcast %cst_11 : f32 to vector<10x1xf32>
    %20 = arith.addf %18, %19 : vector<10x1xf32>
    %21 = math.rsqrt %20 : vector<10x1xf32>
    %22 = vector.broadcast %21 : vector<10x1xf32> to vector<10x64xf32>
    %23 = arith.mulf %13, %22 : vector<10x64xf32>
    %24 = vector.broadcast %5 : vector<1x64xf32> to vector<10x64xf32>
    %25 = arith.mulf %23, %24 : vector<10x64xf32>
    %26 = vector.broadcast %7 : vector<1x64xf32> to vector<10x64xf32>
    %27 = arith.addf %25, %26 : vector<10x64xf32>
    %c0_12 = arith.constant 0 : index
    %c0_13 = arith.constant 0 : index
    %c0_14 = arith.constant 0 : index
    %28 = vector.load %arg10[%c0_12, %c0_13, %c0_14] : memref<1x64x192xbf16, #tpu.memory_space<vmem>>, vector<1x64x192xbf16>
    %29 = vector.shape_cast %28 : vector<1x64x192xbf16> to vector<64x192xbf16>
    %30 = arith.truncf %27 : vector<10x64xf32> to vector<10x64xbf16>
    %cst_15 = arith.constant dense<0.000000e+00> : vector<10x192xf32>
    %31 = tpu.matmul %30, %29, %cst_15 {dimension_numbers = #tpu.dot_dimension_numbers<[1], [0], [0], [1], [0, 0, 1, 1], [], []>} : vector<10x64xbf16>, vector<64x192xbf16>, vector<10x192xf32> -> vector<10x192xf32>
    %c0_16 = arith.constant 0 : index
    %c0_17 = arith.constant 0 : index
    %c0_18 = arith.constant 0 : index
    %32 = vector.load %arg11[%c0_16, %c0_17, %c0_18] : memref<1x1x192xf32, #tpu.memory_space<vmem>>, vector<1x1x192xf32>
    %33 = vector.shape_cast %32 : vector<1x1x192xf32> to vector<1x192xf32>
    %34 = vector.broadcast %33 : vector<1x192xf32> to vector<10x192xf32>
    %35 = arith.addf %31, %34 : vector<10x192xf32>
    %36 = vector.extract_strided_slice %35 {offsets = [0, 0], sizes = [10, 16], strides = [1, 1]} : vector<10x192xf32> to vector<10x16xf32>
    %37 = vector.extract_strided_slice %35 {offsets = [0, 16], sizes = [10, 16], strides = [1, 1]} : vector<10x192xf32> to vector<10x16xf32>
    %38 = vector.extract_strided_slice %35 {offsets = [0, 32], sizes = [10, 16], strides = [1, 1]} : vector<10x192xf32> to vector<10x16xf32>
    %39 = vector.extract_strided_slice %35 {offsets = [0, 48], sizes = [10, 16], strides = [1, 1]} : vector<10x192xf32> to vector<10x16xf32>
    %40 = vector.shape_cast %36 : vector<10x16xf32> to vector<1x10x16xf32>
    %41 = vector.shape_cast %37 : vector<10x16xf32> to vector<1x10x16xf32>
    %42 = vector.shape_cast %38 : vector<10x16xf32> to vector<1x10x16xf32>
    %43 = vector.shape_cast %39 : vector<10x16xf32> to vector<1x10x16xf32>
    %44 = tpu.concatenate %40, %41, %42, %43 in 0 : vector<1x10x16xf32>, vector<1x10x16xf32>, vector<1x10x16xf32>, vector<1x10x16xf32> -> vector<4x10x16xf32>
    %45 = arith.truncf %44 : vector<4x10x16xf32> to vector<4x10x16xbf16>
    %46 = vector.extract_strided_slice %35 {offsets = [0, 64], sizes = [10, 16], strides = [1, 1]} : vector<10x192xf32> to vector<10x16xf32>
    %47 = vector.extract_strided_slice %35 {offsets = [0, 80], sizes = [10, 16], strides = [1, 1]} : vector<10x192xf32> to vector<10x16xf32>
    %48 = vector.extract_strided_slice %35 {offsets = [0, 96], sizes = [10, 16], strides = [1, 1]} : vector<10x192xf32> to vector<10x16xf32>
    %49 = vector.extract_strided_slice %35 {offsets = [0, 112], sizes = [10, 16], strides = [1, 1]} : vector<10x192xf32> to vector<10x16xf32>
    %50 = vector.shape_cast %46 : vector<10x16xf32> to vector<1x10x16xf32>
    %51 = vector.shape_cast %47 : vector<10x16xf32> to vector<1x10x16xf32>
    %52 = vector.shape_cast %48 : vector<10x16xf32> to vector<1x10x16xf32>
    %53 = vector.shape_cast %49 : vector<10x16xf32> to vector<1x10x16xf32>
    %54 = tpu.concatenate %50, %51, %52, %53 in 0 : vector<1x10x16xf32>, vector<1x10x16xf32>, vector<1x10x16xf32>, vector<1x10x16xf32> -> vector<4x10x16xf32>
    %55 = arith.truncf %54 : vector<4x10x16xf32> to vector<4x10x16xbf16>
    %56 = vector.extract_strided_slice %35 {offsets = [0, 128], sizes = [10, 16], strides = [1, 1]} : vector<10x192xf32> to vector<10x16xf32>
    %57 = vector.extract_strided_slice %35 {offsets = [0, 144], sizes = [10, 16], strides = [1, 1]} : vector<10x192xf32> to vector<10x16xf32>
    %58 = vector.extract_strided_slice %35 {offsets = [0, 160], sizes = [10, 16], strides = [1, 1]} : vector<10x192xf32> to vector<10x16xf32>
    %59 = vector.extract_strided_slice %35 {offsets = [0, 176], sizes = [10, 16], strides = [1, 1]} : vector<10x192xf32> to vector<10x16xf32>
    %60 = vector.shape_cast %56 : vector<10x16xf32> to vector<1x10x16xf32>
    %61 = vector.shape_cast %57 : vector<10x16xf32> to vector<1x10x16xf32>
    %62 = vector.shape_cast %58 : vector<10x16xf32> to vector<1x10x16xf32>
    %63 = vector.shape_cast %59 : vector<10x16xf32> to vector<1x10x16xf32>
    %64 = tpu.concatenate %60, %61, %62, %63 in 0 : vector<1x10x16xf32>, vector<1x10x16xf32>, vector<1x10x16xf32>, vector<1x10x16xf32> -> vector<4x10x16xf32>
    %65 = arith.truncf %64 : vector<4x10x16xf32> to vector<4x10x16xbf16>
    "tpu.trace_start"() <{level = 10 : i32, message = "hqd,hkd->hqk"}> : () -> ()
    %cst_19 = arith.constant dense<0.000000e+00> : vector<4x10x10xf32>
    %66 = tpu.matmul %45, %55, %cst_19 {dimension_numbers = #tpu.dot_dimension_numbers<[2], [2], [1], [1], [0, 0, 0, 1, 1, 1], [0], [0]>} : vector<4x10x16xbf16>, vector<4x10x16xbf16>, vector<4x10x10xf32> -> vector<4x10x10xf32>
    "tpu.trace_stop"() : () -> ()
    %cst_20 = arith.constant 2.500000e-01 : f32
    %67 = vector.broadcast %cst_20 : f32 to vector<4x10x10xf32>
    %68 = arith.mulf %66, %67 : vector<4x10x10xf32>
    %c0_21 = arith.constant 0 : index
    %c0_22 = arith.constant 0 : index
    %69 = vector.load %arg3[%c0_21, %c0_22] : memref<10x10xf32, #tpu.memory_space<vmem>>, vector<10x10xf32>
    %70 = vector.shape_cast %69 : vector<10x10xf32> to vector<1x10x10xf32>
    %71 = vector.broadcast %70 : vector<1x10x10xf32> to vector<4x10x10xf32>
    %72 = arith.addf %68, %71 : vector<4x10x10xf32>
    %cst_23 = arith.constant dense<0xFF800000> : vector<4x10xf32>
    %73 = vector.multi_reduction <maximumf>, %72, %cst_23 [2] : vector<4x10x10xf32> to vector<4x10xf32>
    %74 = vector.shape_cast %73 : vector<4x10xf32> to vector<4x10x1xf32>
    %75 = vector.broadcast %74 : vector<4x10x1xf32> to vector<4x10x10xf32>
    %76 = arith.subf %72, %75 : vector<4x10x10xf32>
    %77 = math.exp %76 : vector<4x10x10xf32>
    %cst_24 = arith.constant dense<0.000000e+00> : vector<4x10xf32>
    %78 = vector.multi_reduction <add>, %77, %cst_24 [2] : vector<4x10x10xf32> to vector<4x10xf32>
    %79 = vector.shape_cast %78 : vector<4x10xf32> to vector<4x10x1xf32>
    %80 = tpu.reciprocal %79 {approx = true} : vector<4x10x1xf32> -> vector<4x10x1xf32>
    %81 = vector.broadcast %80 : vector<4x10x1xf32> to vector<4x10x10xf32>
    %82 = arith.mulf %77, %81 : vector<4x10x10xf32>
    %83 = arith.truncf %82 : vector<4x10x10xf32> to vector<4x10x10xbf16>
    "tpu.trace_start"() <{level = 10 : i32, message = "hqk,hkd->hqd"}> : () -> ()
    %cst_25 = arith.constant dense<0.000000e+00> : vector<4x10x16xf32>
    %84 = tpu.matmul %83, %65, %cst_25 {dimension_numbers = #tpu.dot_dimension_numbers<[2], [1], [1], [2], [0, 0, 0, 1, 1, 2], [0], [0]>} : vector<4x10x10xbf16>, vector<4x10x16xbf16>, vector<4x10x16xf32> -> vector<4x10x16xf32>
    "tpu.trace_stop"() : () -> ()
    %85 = vector.extract_strided_slice %84 {offsets = [0, 0, 0], sizes = [1, 10, 16], strides = [1, 1, 1]} : vector<4x10x16xf32> to vector<1x10x16xf32>
    %86 = vector.shape_cast %85 : vector<1x10x16xf32> to vector<10x16xf32>
    %87 = vector.extract_strided_slice %84 {offsets = [1, 0, 0], sizes = [1, 10, 16], strides = [1, 1, 1]} : vector<4x10x16xf32> to vector<1x10x16xf32>
    %88 = vector.shape_cast %87 : vector<1x10x16xf32> to vector<10x16xf32>
    %89 = vector.extract_strided_slice %84 {offsets = [2, 0, 0], sizes = [1, 10, 16], strides = [1, 1, 1]} : vector<4x10x16xf32> to vector<1x10x16xf32>
    %90 = vector.shape_cast %89 : vector<1x10x16xf32> to vector<10x16xf32>
    %91 = vector.extract_strided_slice %84 {offsets = [3, 0, 0], sizes = [1, 10, 16], strides = [1, 1, 1]} : vector<4x10x16xf32> to vector<1x10x16xf32>
    %92 = vector.shape_cast %91 : vector<1x10x16xf32> to vector<10x16xf32>
    %93 = tpu.concatenate %86, %88, %90, %92 in 1 : vector<10x16xf32>, vector<10x16xf32>, vector<10x16xf32>, vector<10x16xf32> -> vector<10x64xf32>
    %c0_26 = arith.constant 0 : index
    %c0_27 = arith.constant 0 : index
    %c0_28 = arith.constant 0 : index
    %94 = vector.load %arg12[%c0_26, %c0_27, %c0_28] : memref<1x64x64xbf16, #tpu.memory_space<vmem>>, vector<1x64x64xbf16>
    %95 = vector.shape_cast %94 : vector<1x64x64xbf16> to vector<64x64xbf16>
    %96 = arith.truncf %93 : vector<10x64xf32> to vector<10x64xbf16>
    %cst_29 = arith.constant dense<0.000000e+00> : vector<10x64xf32>
    %97 = tpu.matmul %96, %95, %cst_29 {dimension_numbers = #tpu.dot_dimension_numbers<[1], [0], [0], [1], [0, 0, 1, 1], [], []>} : vector<10x64xbf16>, vector<64x64xbf16>, vector<10x64xf32> -> vector<10x64xf32>
    %98 = arith.addf %3, %97 : vector<10x64xf32>
    %c0_30 = arith.constant 0 : index
    %c0_31 = arith.constant 0 : index
    %c0_32 = arith.constant 0 : index
    %99 = vector.load %arg13[%c0_30, %c0_31, %c0_32] : memref<1x1x64xf32, #tpu.memory_space<vmem>>, vector<1x1x64xf32>
    %100 = vector.shape_cast %99 : vector<1x1x64xf32> to vector<1x64xf32>
    %101 = vector.broadcast %100 : vector<1x64xf32> to vector<10x64xf32>
    %102 = arith.addf %98, %101 : vector<10x64xf32>
    %c0_33 = arith.constant 0 : index
    %c0_34 = arith.constant 0 : index
    %c0_35 = arith.constant 0 : index
    %103 = vector.load %arg14[%c0_33, %c0_34, %c0_35] : memref<1x1x64xf32, #tpu.memory_space<vmem>>, vector<1x1x64xf32>
    %104 = vector.shape_cast %103 : vector<1x1x64xf32> to vector<1x64xf32>
    %c0_36 = arith.constant 0 : index
    %c0_37 = arith.constant 0 : index
    %c0_38 = arith.constant 0 : index
    %105 = vector.load %arg15[%c0_36, %c0_37, %c0_38] : memref<1x1x64xf32, #tpu.memory_space<vmem>>, vector<1x1x64xf32>
    %106 = vector.shape_cast %105 : vector<1x1x64xf32> to vector<1x64xf32>
    %cst_39 = arith.constant dense<0.000000e+00> : vector<10xf32>
    %107 = vector.multi_reduction <add>, %102, %cst_39 [1] : vector<10x64xf32> to vector<10xf32>
    %108 = vector.shape_cast %107 : vector<10xf32> to vector<10x1xf32>
    %cst_40 = arith.constant 6.400000e+01 : f32
    %109 = vector.broadcast %cst_40 : f32 to vector<10x1xf32>
    %110 = arith.divf %108, %109 : vector<10x1xf32>
    %111 = vector.broadcast %110 : vector<10x1xf32> to vector<10x64xf32>
    %112 = arith.subf %102, %111 : vector<10x64xf32>
    %113 = arith.mulf %112, %112 : vector<10x64xf32>
    %cst_41 = arith.constant dense<0.000000e+00> : vector<10xf32>
    %114 = vector.multi_reduction <add>, %113, %cst_41 [1] : vector<10x64xf32> to vector<10xf32>
    %115 = vector.shape_cast %114 : vector<10xf32> to vector<10x1xf32>
    %cst_42 = arith.constant 6.400000e+01 : f32
    %116 = vector.broadcast %cst_42 : f32 to vector<10x1xf32>
    %117 = arith.divf %115, %116 : vector<10x1xf32>
    %cst_43 = arith.constant 9.99999974E-6 : f32
    %118 = vector.broadcast %cst_43 : f32 to vector<10x1xf32>
    %119 = arith.addf %117, %118 : vector<10x1xf32>
    %120 = math.rsqrt %119 : vector<10x1xf32>
    %121 = vector.broadcast %120 : vector<10x1xf32> to vector<10x64xf32>
    %122 = arith.mulf %112, %121 : vector<10x64xf32>
    %123 = vector.broadcast %104 : vector<1x64xf32> to vector<10x64xf32>
    %124 = arith.mulf %122, %123 : vector<10x64xf32>
    %125 = vector.broadcast %106 : vector<1x64xf32> to vector<10x64xf32>
    %126 = arith.addf %124, %125 : vector<10x64xf32>
    %c0_44 = arith.constant 0 : index
    %c0_45 = arith.constant 0 : index
    %c0_46 = arith.constant 0 : index
    %127 = vector.load %arg16[%c0_44, %c0_45, %c0_46] : memref<1x64x256xbf16, #tpu.memory_space<vmem>>, vector<1x64x256xbf16>
    %128 = vector.shape_cast %127 : vector<1x64x256xbf16> to vector<64x256xbf16>
    %129 = arith.truncf %126 : vector<10x64xf32> to vector<10x64xbf16>
    %cst_47 = arith.constant dense<0.000000e+00> : vector<10x256xf32>
    %130 = tpu.matmul %129, %128, %cst_47 {dimension_numbers = #tpu.dot_dimension_numbers<[1], [0], [0], [1], [0, 0, 1, 1], [], []>} : vector<10x64xbf16>, vector<64x256xbf16>, vector<10x256xf32> -> vector<10x256xf32>
    %c0_48 = arith.constant 0 : index
    %c0_49 = arith.constant 0 : index
    %c0_50 = arith.constant 0 : index
    %131 = vector.load %arg17[%c0_48, %c0_49, %c0_50] : memref<1x1x256xf32, #tpu.memory_space<vmem>>, vector<1x1x256xf32>
    %132 = vector.shape_cast %131 : vector<1x1x256xf32> to vector<1x256xf32>
    %133 = vector.broadcast %132 : vector<1x256xf32> to vector<10x256xf32>
    %134 = arith.addf %130, %133 : vector<10x256xf32>
    %cst_51 = arith.constant -1.702000e+00 : f32
    %135 = vector.broadcast %cst_51 : f32 to vector<10x256xf32>
    %136 = arith.mulf %135, %134 : vector<10x256xf32>
    %137 = math.exp %136 : vector<10x256xf32>
    %cst_52 = arith.constant 1.000000e+00 : f32
    %138 = vector.broadcast %cst_52 : f32 to vector<10x256xf32>
    %139 = arith.addf %138, %137 : vector<10x256xf32>
    %140 = tpu.reciprocal %139 {approx = true} : vector<10x256xf32> -> vector<10x256xf32>
    %141 = arith.mulf %134, %140 : vector<10x256xf32>
    %c0_53 = arith.constant 0 : index
    %c0_54 = arith.constant 0 : index
    %c0_55 = arith.constant 0 : index
    %142 = vector.load %arg18[%c0_53, %c0_54, %c0_55] : memref<1x256x64xbf16, #tpu.memory_space<vmem>>, vector<1x256x64xbf16>
    %143 = vector.shape_cast %142 : vector<1x256x64xbf16> to vector<256x64xbf16>
    %144 = arith.truncf %141 : vector<10x256xf32> to vector<10x256xbf16>
    %cst_56 = arith.constant dense<0.000000e+00> : vector<10x64xf32>
    %145 = tpu.matmul %144, %143, %cst_56 {dimension_numbers = #tpu.dot_dimension_numbers<[1], [0], [0], [1], [0, 0, 1, 1], [], []>} : vector<10x256xbf16>, vector<256x64xbf16>, vector<10x64xf32> -> vector<10x64xf32>
    %c0_57 = arith.constant 0 : index
    %c0_58 = arith.constant 0 : index
    %c0_59 = arith.constant 0 : index
    %146 = vector.load %arg19[%c0_57, %c0_58, %c0_59] : memref<1x1x64xf32, #tpu.memory_space<vmem>>, vector<1x1x64xf32>
    %147 = vector.shape_cast %146 : vector<1x1x64xf32> to vector<1x64xf32>
    %148 = vector.broadcast %147 : vector<1x64xf32> to vector<10x64xf32>
    %149 = arith.addf %145, %148 : vector<10x64xf32>
    %150 = arith.addf %102, %149 : vector<10x64xf32>
    %c0_60 = arith.constant 0 : index
    %c0_61 = arith.constant 0 : index
    %151 = vector.load %arg24[%c0_60, %c0_61] : memref<10x64xf32, #tpu.memory_space<vmem>>, vector<10x64xf32>
    tpu.vector_store %arg24[%c0_60, %c0_61], %150 {strides = array<i32>} : memref<10x64xf32, #tpu.memory_space<vmem>>, vector<10x64xf32>,
    %c1_i32 = arith.constant 1 : i32
    %152 = arith.cmpi eq, %arg1, %c1_i32 : i32
    %153 = arith.extui %152 : i1 to i32
    %c0_i32_62 = arith.constant 0 : i32
    %154 = arith.cmpi ne, %153, %c0_i32_62 : i32
    scf.if %154 {
      %155 = vector.extract_strided_slice %150 {offsets = [0, 0], sizes = [1, 64], strides = [1, 1]} : vector<10x64xf32> to vector<1x64xf32>
      %156 = vector.extract_strided_slice %150 {offsets = [5, 0], sizes = [1, 64], strides = [1, 1]} : vector<10x64xf32> to vector<1x64xf32>
      %157 = tpu.concatenate %155, %156 in 0 : vector<1x64xf32>, vector<1x64xf32> -> vector<2x64xf32>
      %c0_63 = arith.constant 0 : index
      %c0_64 = arith.constant 0 : index
      %158 = vector.load %arg20[%c0_63, %c0_64] : memref<1x64xf32, #tpu.memory_space<vmem>>, vector<1x64xf32>
      %c0_65 = arith.constant 0 : index
      %c0_66 = arith.constant 0 : index
      %159 = vector.load %arg21[%c0_65, %c0_66] : memref<1x64xf32, #tpu.memory_space<vmem>>, vector<1x64xf32>
      %cst_67 = arith.constant dense<0.000000e+00> : vector<2xf32>
      %160 = vector.multi_reduction <add>, %157, %cst_67 [1] : vector<2x64xf32> to vector<2xf32>
      %161 = vector.shape_cast %160 : vector<2xf32> to vector<2x1xf32>
      %cst_68 = arith.constant 6.400000e+01 : f32
      %162 = vector.broadcast %cst_68 : f32 to vector<2x1xf32>
      %163 = arith.divf %161, %162 : vector<2x1xf32>
      %164 = vector.broadcast %163 : vector<2x1xf32> to vector<2x64xf32>
      %165 = arith.subf %157, %164 : vector<2x64xf32>
      %166 = arith.mulf %165, %165 : vector<2x64xf32>
      %cst_69 = arith.constant dense<0.000000e+00> : vector<2xf32>
      %167 = vector.multi_reduction <add>, %166, %cst_69 [1] : vector<2x64xf32> to vector<2xf32>
      %168 = vector.shape_cast %167 : vector<2xf32> to vector<2x1xf32>
      %cst_70 = arith.constant 6.400000e+01 : f32
      %169 = vector.broadcast %cst_70 : f32 to vector<2x1xf32>
      %170 = arith.divf %168, %169 : vector<2x1xf32>
      %cst_71 = arith.constant 9.99999974E-6 : f32
      %171 = vector.broadcast %cst_71 : f32 to vector<2x1xf32>
      %172 = arith.addf %170, %171 : vector<2x1xf32>
      %173 = math.rsqrt %172 : vector<2x1xf32>
      %174 = vector.broadcast %173 : vector<2x1xf32> to vector<2x64xf32>
      %175 = arith.mulf %165, %174 : vector<2x64xf32>
      %176 = vector.broadcast %158 : vector<1x64xf32> to vector<2x64xf32>
      %177 = arith.mulf %175, %176 : vector<2x64xf32>
      %178 = vector.broadcast %159 : vector<1x64xf32> to vector<2x64xf32>
      %179 = arith.addf %177, %178 : vector<2x64xf32>
      %c0_72 = arith.constant 0 : index
      %c0_73 = arith.constant 0 : index
      %180 = vector.load %arg22[%c0_72, %c0_73] : memref<64x128xbf16, #tpu.memory_space<vmem>>, vector<64x128xbf16>
      %181 = arith.truncf %179 : vector<2x64xf32> to vector<2x64xbf16>
      %cst_74 = arith.constant dense<0.000000e+00> : vector<2x128xf32>
      %182 = tpu.matmul %181, %180, %cst_74 {dimension_numbers = #tpu.dot_dimension_numbers<[1], [0], [0], [1], [0, 0, 1, 1], [], []>} : vector<2x64xbf16>, vector<64x128xbf16>, vector<2x128xf32> -> vector<2x128xf32>
      %c0_75 = arith.constant 0 : index
      %c0_76 = arith.constant 0 : index
      %c0_77 = arith.constant 0 : index
      %183 = vector.load %arg23[%c0_75, %c0_76, %c0_77] : memref<1x2x128xf32, #tpu.memory_space<vmem>>, vector<1x2x128xf32>
      %184 = vector.shape_cast %183 : vector<1x2x128xf32> to vector<2x128xf32>
      %185 = vector.shape_cast %182 : vector<2x128xf32> to vector<1x2x128xf32>
      tpu.vector_store %arg23[%c0_75, %c0_76, %c0_77], %185 {strides = array<i32>} : memref<1x2x128xf32, #tpu.memory_space<vmem>>, vector<1x2x128xf32>,
    } else {
    }
    return
  }
  func.func @transform_0(%arg0: i32, %arg1: i32) -> (i32, i32, i32) {
    %c0_i32 = arith.constant 0 : i32
    %c0_i32_0 = arith.constant 0 : i32
    %c0_i32_1 = arith.constant 0 : i32
    return %arg0, %c0_i32, %c0_i32_0 : i32, i32, i32
  }
  func.func @transform_1(%arg0: i32, %arg1: i32) -> (i32, i32) {
    %c0_i32 = arith.constant 0 : i32
    %c0_i32_0 = arith.constant 0 : i32
    %c0_i32_1 = arith.constant 0 : i32
    return %c0_i32, %c0_i32_0 : i32, i32
  }
  func.func @transform_2(%arg0: i32, %arg1: i32) -> (i32, i32) {
    %c0_i32 = arith.constant 0 : i32
    %c0_i32_0 = arith.constant 0 : i32
    %c0_i32_1 = arith.constant 0 : i32
    return %c0_i32, %c0_i32_0 : i32, i32
  }
  func.func @transform_3(%arg0: i32, %arg1: i32) -> (i32, i32) {
    %c0_i32 = arith.constant 0 : i32
    %c0_i32_0 = arith.constant 0 : i32
    %c0_i32_1 = arith.constant 0 : i32
    return %c0_i32, %c0_i32_0 : i32, i32
  }
  func.func @transform_4(%arg0: i32, %arg1: i32) -> (i32, i32) {
    %c0_i32 = arith.constant 0 : i32
    %c0_i32_0 = arith.constant 0 : i32
    %c0_i32_1 = arith.constant 0 : i32
    return %c0_i32, %c0_i32_0 : i32, i32
  }
  func.func @transform_5(%arg0: i32, %arg1: i32) -> (i32, i32) {
    %c0_i32 = arith.constant 0 : i32
    %c0_i32_0 = arith.constant 0 : i32
    %c0_i32_1 = arith.constant 0 : i32
    return %c0_i32, %c0_i32_0 : i32, i32
  }
  func.func @transform_6(%arg0: i32, %arg1: i32) -> (i32, i32, i32) {
    %c0_i32 = arith.constant 0 : i32
    %c0_i32_0 = arith.constant 0 : i32
    %c0_i32_1 = arith.constant 0 : i32
    return %arg1, %c0_i32, %c0_i32_0 : i32, i32, i32
  }
  func.func @transform_7(%arg0: i32, %arg1: i32) -> (i32, i32, i32) {
    %c0_i32 = arith.constant 0 : i32
    %c0_i32_0 = arith.constant 0 : i32
    %c0_i32_1 = arith.constant 0 : i32
    return %arg1, %c0_i32, %c0_i32_0 : i32, i32, i32
  }
  func.func @transform_8(%arg0: i32, %arg1: i32) -> (i32, i32, i32) {
    %c0_i32 = arith.constant 0 : i32
    %c0_i32_0 = arith.constant 0 : i32
    %c0_i32_1 = arith.constant 0 : i32
    return %arg1, %c0_i32, %c0_i32_0 : i32, i32, i32
  }
  func.func @transform_9(%arg0: i32, %arg1: i32) -> (i32, i32, i32) {
    %c0_i32 = arith.constant 0 : i32
    %c0_i32_0 = arith.constant 0 : i32
    %c0_i32_1 = arith.constant 0 : i32
    return %arg1, %c0_i32, %c0_i32_0 : i32, i32, i32
  }
  func.func @transform_10(%arg0: i32, %arg1: i32) -> (i32, i32, i32) {
    %c0_i32 = arith.constant 0 : i32
    %c0_i32_0 = arith.constant 0 : i32
    %c0_i32_1 = arith.constant 0 : i32
    return %arg1, %c0_i32, %c0_i32_0 : i32, i32, i32
  }
  func.func @transform_11(%arg0: i32, %arg1: i32) -> (i32, i32, i32) {
    %c0_i32 = arith.constant 0 : i32
    %c0_i32_0 = arith.constant 0 : i32
    %c0_i32_1 = arith.constant 0 : i32
    return %arg1, %c0_i32, %c0_i32_0 : i32, i32, i32
  }
  func.func @transform_12(%arg0: i32, %arg1: i32) -> (i32, i32, i32) {
    %c0_i32 = arith.constant 0 : i32
    %c0_i32_0 = arith.constant 0 : i32
    %c0_i32_1 = arith.constant 0 : i32
    return %arg1, %c0_i32, %c0_i32_0 : i32, i32, i32
  }
  func.func @transform_13(%arg0: i32, %arg1: i32) -> (i32, i32, i32) {
    %c0_i32 = arith.constant 0 : i32
    %c0_i32_0 = arith.constant 0 : i32
    %c0_i32_1 = arith.constant 0 : i32
    return %arg1, %c0_i32, %c0_i32_0 : i32, i32, i32
  }
  func.func @transform_14(%arg0: i32, %arg1: i32) -> (i32, i32, i32) {
    %c0_i32 = arith.constant 0 : i32
    %c0_i32_0 = arith.constant 0 : i32
    %c0_i32_1 = arith.constant 0 : i32
    return %arg1, %c0_i32, %c0_i32_0 : i32, i32, i32
  }
  func.func @transform_15(%arg0: i32, %arg1: i32) -> (i32, i32, i32) {
    %c0_i32 = arith.constant 0 : i32
    %c0_i32_0 = arith.constant 0 : i32
    %c0_i32_1 = arith.constant 0 : i32
    return %arg1, %c0_i32, %c0_i32_0 : i32, i32, i32
  }
  func.func @transform_16(%arg0: i32, %arg1: i32) -> (i32, i32, i32) {
    %c0_i32 = arith.constant 0 : i32
    %c0_i32_0 = arith.constant 0 : i32
    %c0_i32_1 = arith.constant 0 : i32
    return %arg1, %c0_i32, %c0_i32_0 : i32, i32, i32
  }
  func.func @transform_17(%arg0: i32, %arg1: i32) -> (i32, i32, i32) {
    %c0_i32 = arith.constant 0 : i32
    %c0_i32_0 = arith.constant 0 : i32
    %c0_i32_1 = arith.constant 0 : i32
    return %arg1, %c0_i32, %c0_i32_0 : i32, i32, i32
  }
  func.func @transform_18(%arg0: i32, %arg1: i32) -> (i32, i32) {
    %c0_i32 = arith.constant 0 : i32
    %c0_i32_0 = arith.constant 0 : i32
    %c0_i32_1 = arith.constant 0 : i32
    return %c0_i32, %c0_i32_0 : i32, i32
  }
  func.func @transform_19(%arg0: i32, %arg1: i32) -> (i32, i32) {
    %c0_i32 = arith.constant 0 : i32
    %c0_i32_0 = arith.constant 0 : i32
    %c0_i32_1 = arith.constant 0 : i32
    return %c0_i32, %c0_i32_0 : i32, i32
  }
  func.func @transform_20(%arg0: i32, %arg1: i32) -> (i32, i32) {
    %c0_i32 = arith.constant 0 : i32
    %c0_i32_0 = arith.constant 0 : i32
    %c0_i32_1 = arith.constant 0 : i32
    return %c0_i32, %c0_i32_0 : i32, i32
  }
  func.func @transform_21(%arg0: i32, %arg1: i32) -> (i32, i32, i32) {
    %c0_i32 = arith.constant 0 : i32
    %c0_i32_0 = arith.constant 0 : i32
    %c0_i32_1 = arith.constant 0 : i32
    return %arg0, %c0_i32, %c0_i32_0 : i32, i32, i32
  }
}

</mosaic_0001>

<llo_original>
// kernel: tile.9
$region0: #{tile.9}
  %s0 = inlined_call_operand.vmem [shape: f32[2,5,64], index: 0, kind: input, shape index: {}]
  %s1 = inlined_call_operand.vmem [shape: f32[10,64], index: 1, kind: output, shape index: {}]
  %v2 = vld [vmem:[%s0] sm:$0x1f]
  %vm3 = vcmask 523264
  %4 = vst.msk [vmem:[%s1] sm:$0x1f] %vm3, %v2
  %s5 = scalar_lea.vmem %s0, 8
  %v6 = vld [vmem:[%s5] sm:$0x1f]
  %vm7 = vcmask 523264
  %s8 = scalar_lea.vmem %s1, 5
  %9 = vst.msk [vmem:[%s8] sm:$0x1f] %vm7, %v6

// kernel: clip_encode_image.1
$region0: #{clip_encode_image.1}
  #allocation0 [shape = 'u32[]', space=smem, size = 0x4, offset = 0x4, fixed_abs, tag = 'smem constant byte address 0x4 - core index']
  #allocation1 [shape = 'u32[144,128]{1,0:T(1,128)}', space=vmem, size = 0x12000, scoped, tag = 'internal scratch']
  #allocation2 [shape = 'f32[10,64]{1,0:T(8,128)}', space=vmem, size = 0x2000, scoped, tag = 'scratch operand']
  %s0 = inlined_call_operand.vmem [shape: f32[2,10,768], index: 0, kind: input, shape index: {}]
  %s1 = inlined_call_operand.vmem [shape: f32[10,10], index: 1, kind: input, shape index: {}]
  %s2 = inlined_call_operand.vmem [shape: bf16[768,64], index: 2, kind: input, shape index: {}]
  %s3 = inlined_call_operand.vmem [shape: f32[10,64], index: 3, kind: input, shape index: {}]
  %s4 = inlined_call_operand.vmem [shape: f32[1,64], index: 4, kind: input, shape index: {}]
  %s5 = inlined_call_operand.vmem [shape: f32[1,64], index: 5, kind: input, shape index: {}]
  %s6 = inlined_call_operand.vmem [shape: f32[2,1,64], index: 6, kind: input, shape index: {}]
  %s7 = inlined_call_operand.vmem [shape: f32[2,1,64], index: 7, kind: input, shape index: {}]
  %s8 = inlined_call_operand.vmem [shape: bf16[2,64,192], index: 8, kind: input, shape index: {}]
  %s9 = inlined_call_operand.vmem [shape: f32[2,1,192], index: 9, kind: input, shape index: {}]
  %s10 = inlined_call_operand.vmem [shape: bf16[2,64,64], index: 10, kind: input, shape index: {}]
  %s11 = inlined_call_operand.vmem [shape: f32[2,1,64], index: 11, kind: input, shape index: {}]
  %s12 = inlined_call_operand.vmem [shape: f32[2,1,64], index: 12, kind: input, shape index: {}]
  %s13 = inlined_call_operand.vmem [shape: f32[2,1,64], index: 13, kind: input, shape index: {}]
  %s14 = inlined_call_operand.vmem [shape: bf16[2,64,256], index: 14, kind: input, shape index: {}]
  %s15 = inlined_call_operand.vmem [shape: f32[2,1,256], index: 15, kind: input, shape index: {}]
  %s16 = inlined_call_operand.vmem [shape: bf16[2,256,64], index: 16, kind: input, shape index: {}]
  %s17 = inlined_call_operand.vmem [shape: f32[2,1,64], index: 17, kind: input, shape index: {}]
  %s18 = inlined_call_operand.vmem [shape: f32[1,64], index: 18, kind: input, shape index: {}]
  %s19 = inlined_call_operand.vmem [shape: f32[1,64], index: 19, kind: input, shape index: {}]
  %s20 = inlined_call_operand.vmem [shape: bf16[64,128], index: 20, kind: input, shape index: {}]
  %s21 = inlined_call_operand.hbm [shape: f32[2,2,128], index: 21, kind: output, shape index: {}]
  %s22 = sld [smem:[#allocation0]]
  $region125: #{clip_encode_image.1} parent=0
    _
  %s24 = ssub.s32 1, %s22
  %s25 = scalar_select 0, %s24, %s22
  $region1: #{clip_encode_image.1} parent=0
    #allocation3 [shape = 'u8[2048]{0}', space=vmem, size = 0x800, scoped, tag = 'output window, operand 0']
    #allocation4 [shape = 's32[2]{0}', space=sflag, size = 0x8, scoped, tag = 'scoped memory for clip_encode_image.1']
    %26 = vsyncpa [#allocation4], 0
    %s27 = scalar_lea.sflag [#allocation4], 1
    %28 = vsyncpa %s27, 0
    loop: start=0, step=1, limit=6
    $region2: #{clip_encode_image.1} parent=1 // loop_pre_header
      _
    $region3: #{clip_encode_image.1} parent=1 // loop_header
      %s30 = sphi 0, %s34
      %p31 = scmp.ge.s32.totalorder %s30, 6
      %s37 = sphi 0, %s49
      %s38 = sphi 0, %s45
      %s39 = sphi 0, %s37
      %s40 = sphi 0, %s38
      %s41 = sphi 0, %s39
      %s42 = sphi 0, %s40
      %s52 = sphi 0, %s54
      %s55 = sphi 0, %s52
      %s56 = sphi 0, %s55
      %s72 = sphi 0, %s56
      %s76 = sphi 0, %s76
      %s78 = sphi 0, %s76
      %s79 = sphi 0, %s78
      %s93 = sphi 0, %s79
      %s97 = sphi 0, %s97
      %s99 = sphi 0, %s97
      %s100 = sphi 0, %s99
      %s114 = sphi 0, %s100
      %s118 = sphi 0, %s118
      %s120 = sphi 0, %s118
      %s121 = sphi 0, %s120
      %s135 = sphi 0, %s121
      %s139 = sphi 0, %s139
      %s141 = sphi 0, %s139
      %s142 = sphi 0, %s141
      %s156 = sphi 0, %s142
      %s160 = sphi 0, %s160
      %s162 = sphi 0, %s160
      %s163 = sphi 0, %s162
      %s177 = sphi 0, %s163
      %s183 = sphi 0, %s185
      %s186 = sphi 0, %s183
      %s187 = sphi 0, %s186
      %s203 = sphi 0, %s187
      %s209 = sphi 0, %s211
      %s212 = sphi 0, %s209
      %s213 = sphi 0, %s212
      %s229 = sphi 0, %s213
      %s235 = sphi 0, %s237
      %s238 = sphi 0, %s235
      %s239 = sphi 0, %s238
      %s255 = sphi 0, %s239
      %s261 = sphi 0, %s263
      %s264 = sphi 0, %s261
      %s265 = sphi 0, %s264
      %s281 = sphi 0, %s265
      %s287 = sphi 0, %s289
      %s290 = sphi 0, %s287
      %s291 = sphi 0, %s290
      %s307 = sphi 0, %s291
      %s313 = sphi 0, %s315
      %s316 = sphi 0, %s313
      %s317 = sphi 0, %s316
      %s333 = sphi 0, %s317
      %s339 = sphi 0, %s341
      %s342 = sphi 0, %s339
      %s343 = sphi 0, %s342
      %s359 = sphi 0, %s343
      %s365 = sphi 0, %s367
      %s368 = sphi 0, %s365
      %s369 = sphi 0, %s368
      %s385 = sphi 0, %s369
      %s391 = sphi 0, %s393
      %s394 = sphi 0, %s391
      %s395 = sphi 0, %s394
      %s411 = sphi 0, %s395
      %s417 = sphi 0, %s419
      %s420 = sphi 0, %s417
      %s421 = sphi 0, %s420
      %s437 = sphi 0, %s421
      %s443 = sphi 0, %s445
      %s446 = sphi 0, %s443
      %s447 = sphi 0, %s446
      %s463 = sphi 0, %s447
      %s469 = sphi 0, %s471
      %s472 = sphi 0, %s469
      %s473 = sphi 0, %s472
      %s489 = sphi 0, %s473
      %s493 = sphi 0, %s493
      %s495 = sphi 0, %s493
      %s496 = sphi 0, %s495
      %s510 = sphi 0, %s496
      %s514 = sphi 0, %s514
      %s516 = sphi 0, %s514
      %s517 = sphi 0, %s516
      %s531 = sphi 0, %s517
      %s535 = sphi 0, %s535
      %s537 = sphi 0, %s535
      %s538 = sphi 0, %s537
      %s552 = sphi 0, %s538
      %s558 = sphi 0, %s560
      %s561 = sphi 0, %s558
      %s562 = sphi 0, %s561
      %s578 = sphi 0, %s562
    $region4: #{clip_encode_image.1} parent=1 // loop_header_branch
      %33 = sbr.rel (%p31) target = $region8
    $region5: #{clip_encode_image.1} parent=1 // loop_body
      %s35 = ssub.s32 %s30, 1
      %s36 = ssub.s32 %s30, 2
      %s43 = sadd.s32 1, %s38
      %p44 = scmp.ge.s32.totalorder %s43, 2
      %s45 = scalar_select %p44, 0, %s43
      %s46 = sadd.s32 1, %s37
      %s47 = scalar_select %p44, %s46, %s37
      %p48 = scmp.ge.s32.totalorder %s47, 2
      %s49 = scalar_select %p48, 0, %s47
      %s50 = ssub.s32 %s37, %s49
      %p51 = scmp.eq.s32.totalorder %s50, 0
      %s53 = sadd.s32 %s52, 1
      %s54 = scalar_select %p51, %s52, %s53
      %p57 = pneg %p51
      %p58 = scmp.eq.s32.totalorder %s30, 3
      %p59 = por %p57, %p58
      %p60 = scmp.ne.s32.totalorder %s52, %s55
      %p61 = scmp.eq.s32.totalorder %s30, 0
      %p62 = por %p60, %p61
      %p63 = scmp.ne.s32.totalorder %s52, %s55
      %p64 = scmp.eq.s32.totalorder %s35, 3
      %p65 = por %p63, %p64
      %p66 = scmp.ne.s32.totalorder %s55, %s56
      %p67 = scmp.eq.s32.totalorder %s35, 0
      %p68 = por %p66, %p67
      %p69 = scmp.ne.s32.totalorder %s55, %s56
      %p70 = scmp.eq.s32.totalorder %s36, 3
      %p71 = por %p69, %p70
      %p73 = scmp.ne.s32.totalorder %s56, %s72
      %p74 = scmp.eq.s32.totalorder %s36, 0
      %p75 = por %p73, %p74
      %s77 = sadd.s32 %s76, 1
      %p80 = scmp.eq.s32.totalorder %s30, 3
      %p81 = scmp.ne.s32.totalorder %s76, %s78
      %p82 = scmp.eq.s32.totalorder %s30, 0
      %p83 = por %p81, %p82
      %p84 = scmp.ne.s32.totalorder %s76, %s78
      %p85 = scmp.eq.s32.totalorder %s35, 3
      %p86 = por %p84, %p85
      %p87 = scmp.ne.s32.totalorder %s78, %s79
      %p88 = scmp.eq.s32.totalorder %s35, 0
      %p89 = por %p87, %p88
      %p90 = scmp.ne.s32.totalorder %s78, %s79
      %p91 = scmp.eq.s32.totalorder %s36, 3
      %p92 = por %p90, %p91
      %p94 = scmp.ne.s32.totalorder %s79, %s93
      %p95 = scmp.eq.s32.totalorder %s36, 0
      %p96 = por %p94, %p95
      %s98 = sadd.s32 %s97, 1
      %p101 = scmp.eq.s32.totalorder %s30, 3
      %p102 = scmp.ne.s32.totalorder %s97, %s99
      %p103 = scmp.eq.s32.totalorder %s30, 0
      %p104 = por %p102, %p103
      %p105 = scmp.ne.s32.totalorder %s97, %s99
      %p106 = scmp.eq.s32.totalorder %s35, 3
      %p107 = por %p105, %p106
      %p108 = scmp.ne.s32.totalorder %s99, %s100
      %p109 = scmp.eq.s32.totalorder %s35, 0
      %p110 = por %p108, %p109
      %p111 = scmp.ne.s32.totalorder %s99, %s100
      %p112 = scmp.eq.s32.totalorder %s36, 3
      %p113 = por %p111, %p112
      %p115 = scmp.ne.s32.totalorder %s100, %s114
      %p116 = scmp.eq.s32.totalorder %s36, 0
      %p117 = por %p115, %p116
      %s119 = sadd.s32 %s118, 1
      %p122 = scmp.eq.s32.totalorder %s30, 3
      %p123 = scmp.ne.s32.totalorder %s118, %s120
      %p124 = scmp.eq.s32.totalorder %s30, 0
      %p125 = por %p123, %p124
      %p126 = scmp.ne.s32.totalorder %s118, %s120
      %p127 = scmp.eq.s32.totalorder %s35, 3
      %p128 = por %p126, %p127
      %p129 = scmp.ne.s32.totalorder %s120, %s121
      %p130 = scmp.eq.s32.totalorder %s35, 0
      %p131 = por %p129, %p130
      %p132 = scmp.ne.s32.totalorder %s120, %s121
      %p133 = scmp.eq.s32.totalorder %s36, 3
      %p134 = por %p132, %p133
      %p136 = scmp.ne.s32.totalorder %s121, %s135
      %p137 = scmp.eq.s32.totalorder %s36, 0
      %p138 = por %p136, %p137
      %s140 = sadd.s32 %s139, 1
      %p143 = scmp.eq.s32.totalorder %s30, 3
      %p144 = scmp.ne.s32.totalorder %s139, %s141
      %p145 = scmp.eq.s32.totalorder %s30, 0
      %p146 = por %p144, %p145
      %p147 = scmp.ne.s32.totalorder %s139, %s141
      %p148 = scmp.eq.s32.totalorder %s35, 3
      %p149 = por %p147, %p148
      %p150 = scmp.ne.s32.totalorder %s141, %s142
      %p151 = scmp.eq.s32.totalorder %s35, 0
      %p152 = por %p150, %p151
      %p153 = scmp.ne.s32.totalorder %s141, %s142
      %p154 = scmp.eq.s32.totalorder %s36, 3
      %p155 = por %p153, %p154
      %p157 = scmp.ne.s32.totalorder %s142, %s156
      %p158 = scmp.eq.s32.totalorder %s36, 0
      %p159 = por %p157, %p158
      %s161 = sadd.s32 %s160, 1
      %p164 = scmp.eq.s32.totalorder %s30, 3
      %p165 = scmp.ne.s32.totalorder %s160, %s162
      %p166 = scmp.eq.s32.totalorder %s30, 0
      %p167 = por %p165, %p166
      %p168 = scmp.ne.s32.totalorder %s160, %s162
      %p169 = scmp.eq.s32.totalorder %s35, 3
      %p170 = por %p168, %p169
      %p171 = scmp.ne.s32.totalorder %s162, %s163
      %p172 = scmp.eq.s32.totalorder %s35, 0
      %p173 = por %p171, %p172
      %p174 = scmp.ne.s32.totalorder %s162, %s163
      %p175 = scmp.eq.s32.totalorder %s36, 3
      %p176 = por %p174, %p175
      %p178 = scmp.ne.s32.totalorder %s163, %s177
      %p179 = scmp.eq.s32.totalorder %s36, 0
      %p180 = por %p178, %p179
      %s181 = ssub.s32 %s38, %s45
      %p182 = scmp.eq.s32.totalorder %s181, 0
      %s184 = sadd.s32 %s183, 1
      %s185 = scalar_select %p182, %s183, %s184
      %p188 = pneg %p182
      %p189 = scmp.eq.s32.totalorder %s30, 3
      %p190 = por %p188, %p189
      %p191 = scmp.ne.s32.totalorder %s183, %s186
      %p192 = scmp.eq.s32.totalorder %s30, 0
      %p193 = por %p191, %p192
      %p194 = scmp.ne.s32.totalorder %s183, %s186
      %p195 = scmp.eq.s32.totalorder %s35, 3
      %p196 = por %p194, %p195
      %p197 = scmp.ne.s32.totalorder %s186, %s187
      %p198 = scmp.eq.s32.totalorder %s35, 0
      %p199 = por %p197, %p198
      %p200 = scmp.ne.s32.totalorder %s186, %s187
      %p201 = scmp.eq.s32.totalorder %s36, 3
      %p202 = por %p200, %p201
      %p204 = scmp.ne.s32.totalorder %s187, %s203
      %p205 = scmp.eq.s32.totalorder %s36, 0
      %p206 = por %p204, %p205
      %s207 = ssub.s32 %s38, %s45
      %p208 = scmp.eq.s32.totalorder %s207, 0
      %s210 = sadd.s32 %s209, 1
      %s211 = scalar_select %p208, %s209, %s210
      %p214 = pneg %p208
      %p215 = scmp.eq.s32.totalorder %s30, 3
      %p216 = por %p214, %p215
      %p217 = scmp.ne.s32.totalorder %s209, %s212
      %p218 = scmp.eq.s32.totalorder %s30, 0
      %p219 = por %p217, %p218
      %p220 = scmp.ne.s32.totalorder %s209, %s212
      %p221 = scmp.eq.s32.totalorder %s35, 3
      %p222 = por %p220, %p221
      %p223 = scmp.ne.s32.totalorder %s212, %s213
      %p224 = scmp.eq.s32.totalorder %s35, 0
      %p225 = por %p223, %p224
      %p226 = scmp.ne.s32.totalorder %s212, %s213
      %p227 = scmp.eq.s32.totalorder %s36, 3
      %p228 = por %p226, %p227
      %p230 = scmp.ne.s32.totalorder %s213, %s229
      %p231 = scmp.eq.s32.totalorder %s36, 0
      %p232 = por %p230, %p231
      %s233 = ssub.s32 %s38, %s45
      %p234 = scmp.eq.s32.totalorder %s233, 0
      %s236 = sadd.s32 %s235, 1
      %s237 = scalar_select %p234, %s235, %s236
      %p240 = pneg %p234
      %p241 = scmp.eq.s32.totalorder %s30, 3
      %p242 = por %p240, %p241
      %p243 = scmp.ne.s32.totalorder %s235, %s238
      %p244 = scmp.eq.s32.totalorder %s30, 0
      %p245 = por %p243, %p244
      %p246 = scmp.ne.s32.totalorder %s235, %s238
      %p247 = scmp.eq.s32.totalorder %s35, 3
      %p248 = por %p246, %p247
      %p249 = scmp.ne.s32.totalorder %s238, %s239
      %p250 = scmp.eq.s32.totalorder %s35, 0
      %p251 = por %p249, %p250
      %p252 = scmp.ne.s32.totalorder %s238, %s239
      %p253 = scmp.eq.s32.totalorder %s36, 3
      %p254 = por %p252, %p253
      %p256 = scmp.ne.s32.totalorder %s239, %s255
      %p257 = scmp.eq.s32.totalorder %s36, 0
      %p258 = por %p256, %p257
      %s259 = ssub.s32 %s38, %s45
      %p260 = scmp.eq.s32.totalorder %s259, 0
      %s262 = sadd.s32 %s261, 1
      %s263 = scalar_select %p260, %s261, %s262
      %p266 = pneg %p260
      %p267 = scmp.eq.s32.totalorder %s30, 3
      %p268 = por %p266, %p267
      %p269 = scmp.ne.s32.totalorder %s261, %s264
      %p270 = scmp.eq.s32.totalorder %s30, 0
      %p271 = por %p269, %p270
      %p272 = scmp.ne.s32.totalorder %s261, %s264
      %p273 = scmp.eq.s32.totalorder %s35, 3
      %p274 = por %p272, %p273
      %p275 = scmp.ne.s32.totalorder %s264, %s265
      %p276 = scmp.eq.s32.totalorder %s35, 0
      %p277 = por %p275, %p276
      %p278 = scmp.ne.s32.totalorder %s264, %s265
      %p279 = scmp.eq.s32.totalorder %s36, 3
      %p280 = por %p278, %p279
      %p282 = scmp.ne.s32.totalorder %s265, %s281
      %p283 = scmp.eq.s32.totalorder %s36, 0
      %p284 = por %p282, %p283
      %s285 = ssub.s32 %s38, %s45
      %p286 = scmp.eq.s32.totalorder %s285, 0
      %s288 = sadd.s32 %s287, 1
      %s289 = scalar_select %p286, %s287, %s288
      %p292 = pneg %p286
      %p293 = scmp.eq.s32.totalorder %s30, 3
      %p294 = por %p292, %p293
      %p295 = scmp.ne.s32.totalorder %s287, %s290
      %p296 = scmp.eq.s32.totalorder %s30, 0
      %p297 = por %p295, %p296
      %p298 = scmp.ne.s32.totalorder %s287, %s290
      %p299 = scmp.eq.s32.totalorder %s35, 3
      %p300 = por %p298, %p299
      %p301 = scmp.ne.s32.totalorder %s290, %s291
      %p302 = scmp.eq.s32.totalorder %s35, 0
      %p303 = por %p301, %p302
      %p304 = scmp.ne.s32.totalorder %s290, %s291
      %p305 = scmp.eq.s32.totalorder %s36, 3
      %p306 = por %p304, %p305
      %p308 = scmp.ne.s32.totalorder %s291, %s307
      %p309 = scmp.eq.s32.totalorder %s36, 0
      %p310 = por %p308, %p309
      %s311 = ssub.s32 %s38, %s45
      %p312 = scmp.eq.s32.totalorder %s311, 0
      %s314 = sadd.s32 %s313, 1
      %s315 = scalar_select %p312, %s313, %s314
      %p318 = pneg %p312
      %p319 = scmp.eq.s32.totalorder %s30, 3
      %p320 = por %p318, %p319
      %p321 = scmp.ne.s32.totalorder %s313, %s316
      %p322 = scmp.eq.s32.totalorder %s30, 0
      %p323 = por %p321, %p322
      %p324 = scmp.ne.s32.totalorder %s313, %s316
      %p325 = scmp.eq.s32.totalorder %s35, 3
      %p326 = por %p324, %p325
      %p327 = scmp.ne.s32.totalorder %s316, %s317
      %p328 = scmp.eq.s32.totalorder %s35, 0
      %p329 = por %p327, %p328
      %p330 = scmp.ne.s32.totalorder %s316, %s317
      %p331 = scmp.eq.s32.totalorder %s36, 3
      %p332 = por %p330, %p331
      %p334 = scmp.ne.s32.totalorder %s317, %s333
      %p335 = scmp.eq.s32.totalorder %s36, 0
      %p336 = por %p334, %p335
      %s337 = ssub.s32 %s38, %s45
      %p338 = scmp.eq.s32.totalorder %s337, 0
      %s340 = sadd.s32 %s339, 1
      %s341 = scalar_select %p338, %s339, %s340
      %p344 = pneg %p338
      %p345 = scmp.eq.s32.totalorder %s30, 3
      %p346 = por %p344, %p345
      %p347 = scmp.ne.s32.totalorder %s339, %s342
      %p348 = scmp.eq.s32.totalorder %s30, 0
      %p349 = por %p347, %p348
      %p350 = scmp.ne.s32.totalorder %s339, %s342
      %p351 = scmp.eq.s32.totalorder %s35, 3
      %p352 = por %p350, %p351
      %p353 = scmp.ne.s32.totalorder %s342, %s343
      %p354 = scmp.eq.s32.totalorder %s35, 0
      %p355 = por %p353, %p354
      %p356 = scmp.ne.s32.totalorder %s342, %s343
      %p357 = scmp.eq.s32.totalorder %s36, 3
      %p358 = por %p356, %p357
      %p360 = scmp.ne.s32.totalorder %s343, %s359
      %p361 = scmp.eq.s32.totalorder %s36, 0
      %p362 = por %p360, %p361
      %s363 = ssub.s32 %s38, %s45
      %p364 = scmp.eq.s32.totalorder %s363, 0
      %s366 = sadd.s32 %s365, 1
      %s367 = scalar_select %p364, %s365, %s366
      %p370 = pneg %p364
      %p371 = scmp.eq.s32.totalorder %s30, 3
      %p372 = por %p370, %p371
      %p373 = scmp.ne.s32.totalorder %s365, %s368
      %p374 = scmp.eq.s32.totalorder %s30, 0
      %p375 = por %p373, %p374
      %p376 = scmp.ne.s32.totalorder %s365, %s368
      %p377 = scmp.eq.s32.totalorder %s35, 3
      %p378 = por %p376, %p377
      %p379 = scmp.ne.s32.totalorder %s368, %s369
      %p380 = scmp.eq.s32.totalorder %s35, 0
      %p381 = por %p379, %p380
      %p382 = scmp.ne.s32.totalorder %s368, %s369
      %p383 = scmp.eq.s32.totalorder %s36, 3
      %p384 = por %p382, %p383
      %p386 = scmp.ne.s32.totalorder %s369, %s385
      %p387 = scmp.eq.s32.totalorder %s36, 0
      %p388 = por %p386, %p387
      %s389 = ssub.s32 %s38, %s45
      %p390 = scmp.eq.s32.totalorder %s389, 0
      %s392 = sadd.s32 %s391, 1
      %s393 = scalar_select %p390, %s391, %s392
      %p396 = pneg %p390
      %p397 = scmp.eq.s32.totalorder %s30, 3
      %p398 = por %p396, %p397
      %p399 = scmp.ne.s32.totalorder %s391, %s394
      %p400 = scmp.eq.s32.totalorder %s30, 0
      %p401 = por %p399, %p400
      %p402 = scmp.ne.s32.totalorder %s391, %s394
      %p403 = scmp.eq.s32.totalorder %s35, 3
      %p404 = por %p402, %p403
      %p405 = scmp.ne.s32.totalorder %s394, %s395
      %p406 = scmp.eq.s32.totalorder %s35, 0
      %p407 = por %p405, %p406
      %p408 = scmp.ne.s32.totalorder %s394, %s395
      %p409 = scmp.eq.s32.totalorder %s36, 3
      %p410 = por %p408, %p409
      %p412 = scmp.ne.s32.totalorder %s395, %s411
      %p413 = scmp.eq.s32.totalorder %s36, 0
      %p414 = por %p412, %p413
      %s415 = ssub.s32 %s38, %s45
      %p416 = scmp.eq.s32.totalorder %s415, 0
      %s418 = sadd.s32 %s417, 1
      %s419 = scalar_select %p416, %s417, %s418
      %p422 = pneg %p416
      %p423 = scmp.eq.s32.totalorder %s30, 3
      %p424 = por %p422, %p423
      %p425 = scmp.ne.s32.totalorder %s417, %s420
      %p426 = scmp.eq.s32.totalorder %s30, 0
      %p427 = por %p425, %p426
      %p428 = scmp.ne.s32.totalorder %s417, %s420
      %p429 = scmp.eq.s32.totalorder %s35, 3
      %p430 = por %p428, %p429
      %p431 = scmp.ne.s32.totalorder %s420, %s421
      %p432 = scmp.eq.s32.totalorder %s35, 0
      %p433 = por %p431, %p432
      %p434 = scmp.ne.s32.totalorder %s420, %s421
      %p435 = scmp.eq.s32.totalorder %s36, 3
      %p436 = por %p434, %p435
      %p438 = scmp.ne.s32.totalorder %s421, %s437
      %p439 = scmp.eq.s32.totalorder %s36, 0
      %p440 = por %p438, %p439
      %s441 = ssub.s32 %s38, %s45
      %p442 = scmp.eq.s32.totalorder %s441, 0
      %s444 = sadd.s32 %s443, 1
      %s445 = scalar_select %p442, %s443, %s444
      %p448 = pneg %p442
      %p449 = scmp.eq.s32.totalorder %s30, 3
      %p450 = por %p448, %p449
      %p451 = scmp.ne.s32.totalorder %s443, %s446
      %p452 = scmp.eq.s32.totalorder %s30, 0
      %p453 = por %p451, %p452
      %p454 = scmp.ne.s32.totalorder %s443, %s446
      %p455 = scmp.eq.s32.totalorder %s35, 3
      %p456 = por %p454, %p455
      %p457 = scmp.ne.s32.totalorder %s446, %s447
      %p458 = scmp.eq.s32.totalorder %s35, 0
      %p459 = por %p457, %p458
      %p460 = scmp.ne.s32.totalorder %s446, %s447
      %p461 = scmp.eq.s32.totalorder %s36, 3
      %p462 = por %p460, %p461
      %p464 = scmp.ne.s32.totalorder %s447, %s463
      %p465 = scmp.eq.s32.totalorder %s36, 0
      %p466 = por %p464, %p465
      %s467 = ssub.s32 %s38, %s45
      %p468 = scmp.eq.s32.totalorder %s467, 0
      %s470 = sadd.s32 %s469, 1
      %s471 = scalar_select %p468, %s469, %s470
      %p474 = pneg %p468
      %p475 = scmp.eq.s32.totalorder %s30, 3
      %p476 = por %p474, %p475
      %p477 = scmp.ne.s32.totalorder %s469, %s472
      %p478 = scmp.eq.s32.totalorder %s30, 0
      %p479 = por %p477, %p478
      %p480 = scmp.ne.s32.totalorder %s469, %s472
      %p481 = scmp.eq.s32.totalorder %s35, 3
      %p482 = por %p480, %p481
      %p483 = scmp.ne.s32.totalorder %s472, %s473
      %p484 = scmp.eq.s32.totalorder %s35, 0
      %p485 = por %p483, %p484
      %p486 = scmp.ne.s32.totalorder %s472, %s473
      %p487 = scmp.eq.s32.totalorder %s36, 3
      %p488 = por %p486, %p487
      %p490 = scmp.ne.s32.totalorder %s473, %s489
      %p491 = scmp.eq.s32.totalorder %s36, 0
      %p492 = por %p490, %p491
      %s494 = sadd.s32 %s493, 1
      %p497 = scmp.eq.s32.totalorder %s30, 3
      %p498 = scmp.ne.s32.totalorder %s493, %s495
      %p499 = scmp.eq.s32.totalorder %s30, 0
      %p500 = por %p498, %p499
      %p501 = scmp.ne.s32.totalorder %s493, %s495
      %p502 = scmp.eq.s32.totalorder %s35, 3
      %p503 = por %p501, %p502
      %p504 = scmp.ne.s32.totalorder %s495, %s496
      %p505 = scmp.eq.s32.totalorder %s35, 0
      %p506 = por %p504, %p505
      %p507 = scmp.ne.s32.totalorder %s495, %s496
      %p508 = scmp.eq.s32.totalorder %s36, 3
      %p509 = por %p507, %p508
      %p511 = scmp.ne.s32.totalorder %s496, %s510
      %p512 = scmp.eq.s32.totalorder %s36, 0
      %p513 = por %p511, %p512
      %s515 = sadd.s32 %s514, 1
      %p518 = scmp.eq.s32.totalorder %s30, 3
      %p519 = scmp.ne.s32.totalorder %s514, %s516
      %p520 = scmp.eq.s32.totalorder %s30, 0
      %p521 = por %p519, %p520
      %p522 = scmp.ne.s32.totalorder %s514, %s516
      %p523 = scmp.eq.s32.totalorder %s35, 3
      %p524 = por %p522, %p523
      %p525 = scmp.ne.s32.totalorder %s516, %s517
      %p526 = scmp.eq.s32.totalorder %s35, 0
      %p527 = por %p525, %p526
      %p528 = scmp.ne.s32.totalorder %s516, %s517
      %p529 = scmp.eq.s32.totalorder %s36, 3
      %p530 = por %p528, %p529
      %p532 = scmp.ne.s32.totalorder %s517, %s531
      %p533 = scmp.eq.s32.totalorder %s36, 0
      %p534 = por %p532, %p533
      %s536 = sadd.s32 %s535, 1
      %p539 = scmp.eq.s32.totalorder %s30, 3
      %p540 = scmp.ne.s32.totalorder %s535, %s537
      %p541 = scmp.eq.s32.totalorder %s30, 0
      %p542 = por %p540, %p541
      %p543 = scmp.ne.s32.totalorder %s535, %s537
      %p544 = scmp.eq.s32.totalorder %s35, 3
      %p545 = por %p543, %p544
      %p546 = scmp.ne.s32.totalorder %s537, %s538
      %p547 = scmp.eq.s32.totalorder %s35, 0
      %p548 = por %p546, %p547
      %p549 = scmp.ne.s32.totalorder %s537, %s538
      %p550 = scmp.eq.s32.totalorder %s36, 3
      %p551 = por %p549, %p550
      %p553 = scmp.ne.s32.totalorder %s538, %s552
      %p554 = scmp.eq.s32.totalorder %s36, 0
      %p555 = por %p553, %p554
      %s556 = ssub.s32 %s37, %s49
      %p557 = scmp.eq.s32.totalorder %s556, 0
      %s559 = sadd.s32 %s558, 1
      %s560 = scalar_select %p557, %s558, %s559
      %p563 = pneg %p557
      %p564 = scmp.eq.s32.totalorder %s30, 3
      %p565 = por %p563, %p564
      %p566 = scmp.ne.s32.totalorder %s558, %s561
      %p567 = scmp.eq.s32.totalorder %s30, 0
      %p568 = por %p566, %p567
      %p569 = scmp.ne.s32.totalorder %s558, %s561
      %p570 = scmp.eq.s32.totalorder %s35, 3
      %p571 = por %p569, %p570
      %p572 = scmp.ne.s32.totalorder %s561, %s562
      %p573 = scmp.eq.s32.totalorder %s35, 0
      %p574 = por %p572, %p573
      %p575 = scmp.ne.s32.totalorder %s561, %s562
      %p576 = scmp.eq.s32.totalorder %s36, 3
      %p577 = por %p575, %p576
      %p579 = scmp.ne.s32.totalorder %s562, %s578
      %p580 = scmp.eq.s32.totalorder %s36, 0
      %p581 = por %p579, %p580
      %p582 = scmp.le.s32.totalorder 1, %s30
      %p583 = scmp.lt.s32.totalorder %s30, 5
      %p584 = pnand %p582, %p583
      %p585 = pneg %p584
      // Predicated region
      $region9: #{clip_encode_image.1} parent=5 // pred_check
        _
      $region10: #{clip_encode_image.1} parent=5 // pred_check_branch
        %587 = sbr.rel (%p584) target = $region12
      $region11: #{clip_encode_image.1} parent=5 // pred_region
        %s588 = ssub.s32 %s30, 1
        // Predicated region
        $region13: #{clip_encode_image.1} parent=11 // pred_check
          %p589 = pneg %p89
        $region14: #{clip_encode_image.1} parent=11 // pred_check_branch
          %591 = sbr.rel (%p589) target = $region16
        $region15: #{clip_encode_image.1} parent=11 // pred_region
          _
        $region16: #{clip_encode_image.1} parent=11 // pred_fallthru
          _
        // Predicated region
        $region17: #{clip_encode_image.1} parent=11 // pred_check
          %p592 = pneg %p110
        $region18: #{clip_encode_image.1} parent=11 // pred_check_branch
          %594 = sbr.rel (%p592) target = $region20
        $region19: #{clip_encode_image.1} parent=11 // pred_region
          _
        $region20: #{clip_encode_image.1} parent=11 // pred_fallthru
          _
        // Predicated region
        $region21: #{clip_encode_image.1} parent=11 // pred_check
          %p595 = pneg %p131
        $region22: #{clip_encode_image.1} parent=11 // pred_check_branch
          %597 = sbr.rel (%p595) target = $region24
        $region23: #{clip_encode_image.1} parent=11 // pred_region
          _
        $region24: #{clip_encode_image.1} parent=11 // pred_fallthru
          _
        // Predicated region
        $region25: #{clip_encode_image.1} parent=11 // pred_check
          %p598 = pneg %p152
        $region26: #{clip_encode_image.1} parent=11 // pred_check_branch
          %600 = sbr.rel (%p598) target = $region28
        $region27: #{clip_encode_image.1} parent=11 // pred_region
          _
        $region28: #{clip_encode_image.1} parent=11 // pred_fallthru
          _
        // Predicated region
        $region29: #{clip_encode_image.1} parent=11 // pred_check
          %p601 = pneg %p173
        $region30: #{clip_encode_image.1} parent=11 // pred_check_branch
          %603 = sbr.rel (%p601) target = $region32
        $region31: #{clip_encode_image.1} parent=11 // pred_region
          _
        $region32: #{clip_encode_image.1} parent=11 // pred_fallthru
          _
        // Predicated region
        $region33: #{clip_encode_image.1} parent=11 // pred_check
          %p604 = pneg %p506
        $region34: #{clip_encode_image.1} parent=11 // pred_check_branch
          %606 = sbr.rel (%p604) target = $region36
        $region35: #{clip_encode_image.1} parent=11 // pred_region
          _
        $region36: #{clip_encode_image.1} parent=11 // pred_fallthru
          _
        // Predicated region
        $region37: #{clip_encode_image.1} parent=11 // pred_check
          %p607 = pneg %p527
        $region38: #{clip_encode_image.1} parent=11 // pred_check_branch
          %609 = sbr.rel (%p607) target = $region40
        $region39: #{clip_encode_image.1} parent=11 // pred_region
          _
        $region40: #{clip_encode_image.1} parent=11 // pred_fallthru
          _
        // Predicated region
        $region41: #{clip_encode_image.1} parent=11 // pred_check
          %p610 = pneg %p548
        $region42: #{clip_encode_image.1} parent=11 // pred_check_branch
          %612 = sbr.rel (%p610) target = $region44
        $region43: #{clip_encode_image.1} parent=11 // pred_region
          _
        $region44: #{clip_encode_image.1} parent=11 // pred_fallthru
          _
      $region12: #{clip_encode_image.1} parent=5 // pred_fallthru
        _
      %p613 = scmp.lt.s32.totalorder %s30, 4
      // Predicated region
      $region45: #{clip_encode_image.1} parent=5 // pred_check
        %p614 = pneg %p613
      $region46: #{clip_encode_image.1} parent=5 // pred_check_branch
        %616 = sbr.rel (%p614) target = $region48
      $region47: #{clip_encode_image.1} parent=5 // pred_region
        // Predicated region
        $region49: #{clip_encode_image.1} parent=47 // pred_check
          %p617 = pneg %p62
        $region50: #{clip_encode_image.1} parent=47 // pred_check_branch
          %619 = sbr.rel (%p617) target = $region52
        $region51: #{clip_encode_image.1} parent=47 // pred_region
          %p620 = scmp.lt.s32.totalorder %s37, 1
          %s621 = scalar_select %p620, %s37, 1
          %s622 = smul.addr %s621, 12
          %s623 = smul.addr %s622, 8
          %s624 = scalar_lea.vmem %s0, %s623
        $region52: #{clip_encode_image.1} parent=47 // pred_fallthru
          _
        // Predicated region
        $region53: #{clip_encode_image.1} parent=47 // pred_check
          %p625 = pneg %p193
        $region54: #{clip_encode_image.1} parent=47 // pred_check_branch
          %627 = sbr.rel (%p625) target = $region56
        $region55: #{clip_encode_image.1} parent=47 // pred_region
          %p628 = scmp.lt.s32.totalorder %s38, 1
          %s629 = scalar_select %p628, %s38, 1
          %s630 = scalar_lea.vmem %s6, %s629
        $region56: #{clip_encode_image.1} parent=47 // pred_fallthru
          _
        // Predicated region
        $region57: #{clip_encode_image.1} parent=47 // pred_check
          %p631 = pneg %p219
        $region58: #{clip_encode_image.1} parent=47 // pred_check_branch
          %633 = sbr.rel (%p631) target = $region60
        $region59: #{clip_encode_image.1} parent=47 // pred_region
          %p634 = scmp.lt.s32.totalorder %s38, 1
          %s635 = scalar_select %p634, %s38, 1
          %s636 = scalar_lea.vmem %s7, %s635
        $region60: #{clip_encode_image.1} parent=47 // pred_fallthru
          _
        // Predicated region
        $region61: #{clip_encode_image.1} parent=47 // pred_check
          %p637 = pneg %p245
        $region62: #{clip_encode_image.1} parent=47 // pred_check_branch
          %639 = sbr.rel (%p637) target = $region64
        $region63: #{clip_encode_image.1} parent=47 // pred_region
          %p640 = scmp.lt.s32.totalorder %s38, 1
          %s641 = scalar_select %p640, %s38, 1
          %s642 = smul.addr %s641, 16
          %s643 = smul.addr %s642, 4
          %s644 = scalar_lea.vmem %s8, %s643
        $region64: #{clip_encode_image.1} parent=47 // pred_fallthru
          _
        // Predicated region
        $region65: #{clip_encode_image.1} parent=47 // pred_check
          %p645 = pneg %p271
        $region66: #{clip_encode_image.1} parent=47 // pred_check_branch
          %647 = sbr.rel (%p645) target = $region68
        $region67: #{clip_encode_image.1} parent=47 // pred_region
          %p648 = scmp.lt.s32.totalorder %s38, 1
          %s649 = scalar_select %p648, %s38, 1
          %s650 = smul.addr %s649, 2
          %s651 = scalar_lea.vmem %s9, %s650
        $region68: #{clip_encode_image.1} parent=47 // pred_fallthru
          _
        // Predicated region
        $region69: #{clip_encode_image.1} parent=47 // pred_check
          %p652 = pneg %p297
        $region70: #{clip_encode_image.1} parent=47 // pred_check_branch
          %654 = sbr.rel (%p652) target = $region72
        $region71: #{clip_encode_image.1} parent=47 // pred_region
          %p655 = scmp.lt.s32.totalorder %s38, 1
          %s656 = scalar_select %p655, %s38, 1
          %s657 = smul.addr %s656, 8
          %s658 = smul.addr %s657, 4
          %s659 = scalar_lea.vmem %s10, %s658
        $region72: #{clip_encode_image.1} parent=47 // pred_fallthru
          _
        // Predicated region
        $region73: #{clip_encode_image.1} parent=47 // pred_check
          %p660 = pneg %p323
        $region74: #{clip_encode_image.1} parent=47 // pred_check_branch
          %662 = sbr.rel (%p660) target = $region76
        $region75: #{clip_encode_image.1} parent=47 // pred_region
          %p663 = scmp.lt.s32.totalorder %s38, 1
          %s664 = scalar_select %p663, %s38, 1
          %s665 = scalar_lea.vmem %s11, %s664
        $region76: #{clip_encode_image.1} parent=47 // pred_fallthru
          _
        // Predicated region
        $region77: #{clip_encode_image.1} parent=47 // pred_check
          %p666 = pneg %p349
        $region78: #{clip_encode_image.1} parent=47 // pred_check_branch
          %668 = sbr.rel (%p666) target = $region80
        $region79: #{clip_encode_image.1} parent=47 // pred_region
          %p669 = scmp.lt.s32.totalorder %s38, 1
          %s670 = scalar_select %p669, %s38, 1
          %s671 = scalar_lea.vmem %s12, %s670
        $region80: #{clip_encode_image.1} parent=47 // pred_fallthru
          _
        // Predicated region
        $region81: #{clip_encode_image.1} parent=47 // pred_check
          %p672 = pneg %p375
        $region82: #{clip_encode_image.1} parent=47 // pred_check_branch
          %674 = sbr.rel (%p672) target = $region84
        $region83: #{clip_encode_image.1} parent=47 // pred_region
          %p675 = scmp.lt.s32.totalorder %s38, 1
          %s676 = scalar_select %p675, %s38, 1
          %s677 = scalar_lea.vmem %s13, %s676
        $region84: #{clip_encode_image.1} parent=47 // pred_fallthru
          _
        // Predicated region
        $region85: #{clip_encode_image.1} parent=47 // pred_check
          %p678 = pneg %p401
        $region86: #{clip_encode_image.1} parent=47 // pred_check_branch
          %680 = sbr.rel (%p678) target = $region88
        $region87: #{clip_encode_image.1} parent=47 // pred_region
          %p681 = scmp.lt.s32.totalorder %s38, 1
          %s682 = scalar_select %p681, %s38, 1
          %s683 = smul.addr %s682, 16
          %s684 = smul.addr %s683, 4
          %s685 = scalar_lea.vmem %s14, %s684
        $region88: #{clip_encode_image.1} parent=47 // pred_fallthru
          _
        // Predicated region
        $region89: #{clip_encode_image.1} parent=47 // pred_check
          %p686 = pneg %p427
        $region90: #{clip_encode_image.1} parent=47 // pred_check_branch
          %688 = sbr.rel (%p686) target = $region92
        $region91: #{clip_encode_image.1} parent=47 // pred_region
          %p689 = scmp.lt.s32.totalorder %s38, 1
          %s690 = scalar_select %p689, %s38, 1
          %s691 = smul.addr %s690, 2
          %s692 = scalar_lea.vmem %s15, %s691
        $region92: #{clip_encode_image.1} parent=47 // pred_fallthru
          _
        // Predicated region
        $region93: #{clip_encode_image.1} parent=47 // pred_check
          %p693 = pneg %p453
        $region94: #{clip_encode_image.1} parent=47 // pred_check_branch
          %695 = sbr.rel (%p693) target = $region96
        $region95: #{clip_encode_image.1} parent=47 // pred_region
          %p696 = scmp.lt.s32.totalorder %s38, 1
          %s697 = scalar_select %p696, %s38, 1
          %s698 = smul.addr %s697, 32
          %s699 = smul.addr %s698, 4
          %s700 = scalar_lea.vmem %s16, %s699
        $region96: #{clip_encode_image.1} parent=47 // pred_fallthru
          _
        // Predicated region
        $region97: #{clip_encode_image.1} parent=47 // pred_check
          %p701 = pneg %p479
        $region98: #{clip_encode_image.1} parent=47 // pred_check_branch
          %703 = sbr.rel (%p701) target = $region100
        $region99: #{clip_encode_image.1} parent=47 // pred_region
          %p704 = scmp.lt.s32.totalorder %s38, 1
          %s705 = scalar_select %p704, %s38, 1
          %s706 = scalar_lea.vmem %s17, %s705
        $region100: #{clip_encode_image.1} parent=47 // pred_fallthru
          _
      $region48: #{clip_encode_image.1} parent=5 // pred_fallthru
        _
      %p707 = scmp.le.s32.totalorder 1, %s30
      %p708 = scmp.lt.s32.totalorder %s30, 5
      %p709 = pnand %p707, %p708
      %p710 = pneg %p709
      // Predicated region
      $region101: #{clip_encode_image.1} parent=5 // pred_check
        _
      $region102: #{clip_encode_image.1} parent=5 // pred_check_branch
        %712 = sbr.rel (%p709) target = $region104
      $region103: #{clip_encode_image.1} parent=5 // pred_region
        %s713 = ssub.s32 %s30, 1
        %p714 = scmp.lt.s32.totalorder %s39, 1
        %s715 = scalar_select %p714, %s39, 1
        %s716 = smul.addr %s715, 12
        %s717 = smul.addr %s716, 8
        %s718 = scalar_lea.vmem %s0, %s717
        %p719 = pneg %p68
        %p720 = pneg %p65
        %p721 = pneg %p89
        %p722 = pneg %p86
        %p723 = pneg %p110
        %p724 = pneg %p107
        %p725 = pneg %p131
        %p726 = pneg %p128
        %p727 = pneg %p152
        %p728 = pneg %p149
        %p729 = pneg %p173
        %p730 = pneg %p170
        %p731 = scmp.lt.s32.totalorder %s40, 1
        %s732 = scalar_select %p731, %s40, 1
        %s733 = scalar_lea.vmem %s6, %s732
        %p734 = pneg %p199
        %p735 = pneg %p196
        %p736 = scmp.lt.s32.totalorder %s40, 1
        %s737 = scalar_select %p736, %s40, 1
        %s738 = scalar_lea.vmem %s7, %s737
        %p739 = pneg %p225
        %p740 = pneg %p222
        %p741 = scmp.lt.s32.totalorder %s40, 1
        %s742 = scalar_select %p741, %s40, 1
        %s743 = smul.addr %s742, 16
        %s744 = smul.addr %s743, 4
        %s745 = scalar_lea.vmem %s8, %s744
        %p746 = pneg %p251
        %p747 = pneg %p248
        %p748 = scmp.lt.s32.totalorder %s40, 1
        %s749 = scalar_select %p748, %s40, 1
        %s750 = smul.addr %s749, 2
        %s751 = scalar_lea.vmem %s9, %s750
        %p752 = pneg %p277
        %p753 = pneg %p274
        %p754 = scmp.lt.s32.totalorder %s40, 1
        %s755 = scalar_select %p754, %s40, 1
        %s756 = smul.addr %s755, 8
        %s757 = smul.addr %s756, 4
        %s758 = scalar_lea.vmem %s10, %s757
        %p759 = pneg %p303
        %p760 = pneg %p300
        %p761 = scmp.lt.s32.totalorder %s40, 1
        %s762 = scalar_select %p761, %s40, 1
        %s763 = scalar_lea.vmem %s11, %s762
        %p764 = pneg %p329
        %p765 = pneg %p326
        %p766 = scmp.lt.s32.totalorder %s40, 1
        %s767 = scalar_select %p766, %s40, 1
        %s768 = scalar_lea.vmem %s12, %s767
        %p769 = pneg %p355
        %p770 = pneg %p352
        %p771 = scmp.lt.s32.totalorder %s40, 1
        %s772 = scalar_select %p771, %s40, 1
        %s773 = scalar_lea.vmem %s13, %s772
        %p774 = pneg %p381
        %p775 = pneg %p378
        %p776 = scmp.lt.s32.totalorder %s40, 1
        %s777 = scalar_select %p776, %s40, 1
        %s778 = smul.addr %s777, 16
        %s779 = smul.addr %s778, 4
        %s780 = scalar_lea.vmem %s14, %s779
        %p781 = pneg %p407
        %p782 = pneg %p404
        %p783 = scmp.lt.s32.totalorder %s40, 1
        %s784 = scalar_select %p783, %s40, 1
        %s785 = smul.addr %s784, 2
        %s786 = scalar_lea.vmem %s15, %s785
        %p787 = pneg %p433
        %p788 = pneg %p430
        %p789 = scmp.lt.s32.totalorder %s40, 1
        %s790 = scalar_select %p789, %s40, 1
        %s791 = smul.addr %s790, 32
        %s792 = smul.addr %s791, 4
        %s793 = scalar_lea.vmem %s16, %s792
        %p794 = pneg %p459
        %p795 = pneg %p456
        %p796 = scmp.lt.s32.totalorder %s40, 1
        %s797 = scalar_select %p796, %s40, 1
        %s798 = scalar_lea.vmem %s17, %s797
        %p799 = pneg %p485
        %p800 = pneg %p482
        %p801 = pneg %p506
        %p802 = pneg %p503
        %p803 = pneg %p527
        %p804 = pneg %p524
        %p805 = pneg %p548
        %p806 = pneg %p545
        %p807 = pneg %p574
        %p808 = pneg %p571
        %s809 = sand.u32 %s561, 1
        %s810 = scalar_lea.sflag [#allocation4], %s809
        %s811 = sand.u32 %s561, 1
        %s812 = smul.addr %s811, 2
        %s813 = scalar_lea.vmem [#allocation3], %s812
        %p814 = scmp.lt.s32.totalorder %s39, 1
        %s815 = scalar_select %p814, %s39, 1
        %s816 = smul.addr %s815, 12
        %s817 = smul.addr %s816, 8
        %s818 = scalar_lea.vmem %s0, %s817
        %p819 = scmp.lt.s32.totalorder %s40, 1
        %s820 = scalar_select %p819, %s40, 1
        %s821 = scalar_lea.vmem %s6, %s820
        %p822 = scmp.lt.s32.totalorder %s40, 1
        %s823 = scalar_select %p822, %s40, 1
        %s824 = scalar_lea.vmem %s7, %s823
        %p825 = scmp.lt.s32.totalorder %s40, 1
        %s826 = scalar_select %p825, %s40, 1
        %s827 = smul.addr %s826, 16
        %s828 = smul.addr %s827, 4
        %s829 = scalar_lea.vmem %s8, %s828
        %p830 = scmp.lt.s32.totalorder %s40, 1
        %s831 = scalar_select %p830, %s40, 1
        %s832 = smul.addr %s831, 2
        %s833 = scalar_lea.vmem %s9, %s832
        %p834 = scmp.lt.s32.totalorder %s40, 1
        %s835 = scalar_select %p834, %s40, 1
        %s836 = smul.addr %s835, 8
        %s837 = smul.addr %s836, 4
        %s838 = scalar_lea.vmem %s10, %s837
        %p839 = scmp.lt.s32.totalorder %s40, 1
        %s840 = scalar_select %p839, %s40, 1
        %s841 = scalar_lea.vmem %s11, %s840
        %p842 = scmp.lt.s32.totalorder %s40, 1
        %s843 = scalar_select %p842, %s40, 1
        %s844 = scalar_lea.vmem %s12, %s843
        %p845 = scmp.lt.s32.totalorder %s40, 1
        %s846 = scalar_select %p845, %s40, 1
        %s847 = scalar_lea.vmem %s13, %s846
        %p848 = scmp.lt.s32.totalorder %s40, 1
        %s849 = scalar_select %p848, %s40, 1
        %s850 = smul.addr %s849, 16
        %s851 = smul.addr %s850, 4
        %s852 = scalar_lea.vmem %s14, %s851
        %p853 = scmp.lt.s32.totalorder %s40, 1
        %s854 = scalar_select %p853, %s40, 1
        %s855 = smul.addr %s854, 2
        %s856 = scalar_lea.vmem %s15, %s855
        %p857 = scmp.lt.s32.totalorder %s40, 1
        %s858 = scalar_select %p857, %s40, 1
        %s859 = smul.addr %s858, 32
        %s860 = smul.addr %s859, 4
        %s861 = scalar_lea.vmem %s16, %s860
        %p862 = scmp.lt.s32.totalorder %s40, 1
        %s863 = scalar_select %p862, %s40, 1
        %s864 = scalar_lea.vmem %s17, %s863
        %p866 = scmp.eq.s32.totalorder %s40, 0
        // Predicated region
        $region105: #{clip_encode_image.1} parent=103 // pred_check
          %p867 = pneg %p866
        $region106: #{clip_encode_image.1} parent=103 // pred_check_branch
          %869 = sbr.rel (%p867) target = $region108
        $region107: #{clip_encode_image.1} parent=103 // pred_region
          %v870 = vld [vmem:[%s818] sm:$0xff]
          %v871 = vld [vmem:[%s818 + $0x8] sm:$0xff]
          %v872 = vld [vmem:[%s818 + $0x10] sm:$0xff]
          %v873 = vld [vmem:[%s818 + $0x18] sm:$0xff]
          %v874 = vld [vmem:[%s818 + $0x20] sm:$0xff]
          %v875 = vld [vmem:[%s818 + $0x28] sm:$0xff]
          %v876 = vld [vmem:[%s818 + $0x30] sm:$0x3]
          %v877 = vld [vmem:[%s818 + $0x38] sm:$0x3]
          %v878 = vld [vmem:[%s818 + $0x40] sm:$0x3]
          %v879 = vld [vmem:[%s818 + $0x48] sm:$0x3]
          %v880 = vld [vmem:[%s818 + $0x50] sm:$0x3]
          %v881 = vld [vmem:[%s818 + $0x58] sm:$0x3]
          %v882 = vld [vmem:[%s2] sm:$0xf]
          %v883 = vld [vmem:[%s2 + $0x4] sm:$0xf]
          %v884 = vld [vmem:[%s2 + $0x8] sm:$0xf]
          %v885 = vld [vmem:[%s2 + $0xc] sm:$0xf]
          %v886 = vld [vmem:[%s2 + $0x10] sm:$0xf]
          %v887 = vld [vmem:[%s2 + $0x14] sm:$0xf]
          %v888 = vld [vmem:[%s2 + $0x18] sm:$0xf]
          %v889 = vld [vmem:[%s2 + $0x1c] sm:$0xf]
          %v890 = vld [vmem:[%s2 + $0x20] sm:$0xf]
          %v891 = vld [vmem:[%s2 + $0x24] sm:$0xf]
          %v892 = vld [vmem:[%s2 + $0x28] sm:$0xf]
          %v893 = vld [vmem:[%s2 + $0x2c] sm:$0xf]
          %v894 = vld [vmem:[%s2 + $0x30] sm:$0xf]
          %v895 = vld [vmem:[%s2 + $0x34] sm:$0xf]
          %v896 = vld [vmem:[%s2 + $0x38] sm:$0xf]
          %v897 = vld [vmem:[%s2 + $0x3c] sm:$0xf]
          %v898 = vld [vmem:[%s2 + $0x40] sm:$0xf]
          %v899 = vld [vmem:[%s2 + $0x44] sm:$0xf]
          %v900 = vld [vmem:[%s2 + $0x48] sm:$0xf]
          %v901 = vld [vmem:[%s2 + $0x4c] sm:$0xf]
          %v902 = vld [vmem:[%s2 + $0x50] sm:$0xf]
          %v903 = vld [vmem:[%s2 + $0x54] sm:$0xf]
          %v904 = vld [vmem:[%s2 + $0x58] sm:$0xf]
          %v905 = vld [vmem:[%s2 + $0x5c] sm:$0xf]
          %v906 = vld [vmem:[%s2 + $0x60] sm:$0xf]
          %v907 = vld [vmem:[%s2 + $0x64] sm:$0xf]
          %v908 = vld [vmem:[%s2 + $0x68] sm:$0xf]
          %v909 = vld [vmem:[%s2 + $0x6c] sm:$0xf]
          %v910 = vld [vmem:[%s2 + $0x70] sm:$0xf]
          %v911 = vld [vmem:[%s2 + $0x74] sm:$0xf]
          %v912 = vld [vmem:[%s2 + $0x78] sm:$0xf]
          %v913 = vld [vmem:[%s2 + $0x7c] sm:$0xf]
          %v914 = vld [vmem:[%s2 + $0x80] sm:$0xf]
          %v915 = vld [vmem:[%s2 + $0x84] sm:$0xf]
          %v916 = vld [vmem:[%s2 + $0x88] sm:$0xf]
          %v917 = vld [vmem:[%s2 + $0x8c] sm:$0xf]
          %v918 = vld [vmem:[%s2 + $0x90] sm:$0xf]
          %v919 = vld [vmem:[%s2 + $0x94] sm:$0xf]
          %v920 = vld [vmem:[%s2 + $0x98] sm:$0xf]
          %v921 = vld [vmem:[%s2 + $0x9c] sm:$0xf]
          %v922 = vld [vmem:[%s2 + $0xa0] sm:$0xf]
          %v923 = vld [vmem:[%s2 + $0xa4] sm:$0xf]
          %v924 = vld [vmem:[%s2 + $0xa8] sm:$0xf]
          %v925 = vld [vmem:[%s2 + $0xac] sm:$0xf]
          %v926 = vld [vmem:[%s2 + $0xb0] sm:$0xf]
          %v927 = vld [vmem:[%s2 + $0xb4] sm:$0xf]
          %v928 = vld [vmem:[%s2 + $0xb8] sm:$0xf]
          %v929 = vld [vmem:[%s2 + $0xbc] sm:$0xf]
          %v930 = vld [vmem:[%s2 + $0xc0] sm:$0xf]
          %v931 = vld [vmem:[%s2 + $0xc4] sm:$0xf]
          %v932 = vld [vmem:[%s2 + $0xc8] sm:$0xf]
          %v933 = vld [vmem:[%s2 + $0xcc] sm:$0xf]
          %v934 = vld [vmem:[%s2 + $0xd0] sm:$0xf]
          %v935 = vld [vmem:[%s2 + $0xd4] sm:$0xf]
          %v936 = vld [vmem:[%s2 + $0xd8] sm:$0xf]
          %v937 = vld [vmem:[%s2 + $0xdc] sm:$0xf]
          %v938 = vld [vmem:[%s2 + $0xe0] sm:$0xf]
          %v939 = vld [vmem:[%s2 + $0xe4] sm:$0xf]
          %v940 = vld [vmem:[%s2 + $0xe8] sm:$0xf]
          %v941 = vld [vmem:[%s2 + $0xec] sm:$0xf]
          %v942 = vld [vmem:[%s2 + $0xf0] sm:$0xf]
          %v943 = vld [vmem:[%s2 + $0xf4] sm:$0xf]
          %v944 = vld [vmem:[%s2 + $0xf8] sm:$0xf]
          %v945 = vld [vmem:[%s2 + $0xfc] sm:$0xf]
          %v946 = vld [vmem:[%s2 + $0x100] sm:$0xf]
          %v947 = vld [vmem:[%s2 + $0x104] sm:$0xf]
          %v948 = vld [vmem:[%s2 + $0x108] sm:$0xf]
          %v949 = vld [vmem:[%s2 + $0x10c] sm:$0xf]
          %v950 = vld [vmem:[%s2 + $0x110] sm:$0xf]
          %v951 = vld [vmem:[%s2 + $0x114] sm:$0xf]
          %v952 = vld [vmem:[%s2 + $0x118] sm:$0xf]
          %v953 = vld [vmem:[%s2 + $0x11c] sm:$0xf]
          %v954 = vld [vmem:[%s2 + $0x120] sm:$0xf]
          %v955 = vld [vmem:[%s2 + $0x124] sm:$0xf]
          %v956 = vld [vmem:[%s2 + $0x128] sm:$0xf]
          %v957 = vld [vmem:[%s2 + $0x12c] sm:$0xf]
          %v958 = vld [vmem:[%s2 + $0x130] sm:$0xf]
          %v959 = vld [vmem:[%s2 + $0x134] sm:$0xf]
          %v960 = vld [vmem:[%s2 + $0x138] sm:$0xf]
          %v961 = vld [vmem:[%s2 + $0x13c] sm:$0xf]
          %v962 = vld [vmem:[%s2 + $0x140] sm:$0xf]
          %v963 = vld [vmem:[%s2 + $0x144] sm:$0xf]
          %v964 = vld [vmem:[%s2 + $0x148] sm:$0xf]
          %v965 = vld [vmem:[%s2 + $0x14c] sm:$0xf]
          %v966 = vld [vmem:[%s2 + $0x150] sm:$0xf]
          %v967 = vld [vmem:[%s2 + $0x154] sm:$0xf]
          %v968 = vld [vmem:[%s2 + $0x158] sm:$0xf]
          %v969 = vld [vmem:[%s2 + $0x15c] sm:$0xf]
          %v970 = vld [vmem:[%s2 + $0x160] sm:$0xf]
          %v971 = vld [vmem:[%s2 + $0x164] sm:$0xf]
          %v972 = vld [vmem:[%s2 + $0x168] sm:$0xf]
          %v973 = vld [vmem:[%s2 + $0x16c] sm:$0xf]
          %v974 = vld [vmem:[%s2 + $0x170] sm:$0xf]
          %v975 = vld [vmem:[%s2 + $0x174] sm:$0xf]
          %v976 = vld [vmem:[%s2 + $0x178] sm:$0xf]
          %v977 = vld [vmem:[%s2 + $0x17c] sm:$0xf]
          %v978 = vpack.c.bf16 %v876, %v870
          %v979 = vpack.c.bf16 %v877, %v871
          %v980 = vpack.c.bf16 %v878, %v872
          %v981 = vpack.c.bf16 %v879, %v873
          %v982 = vpack.c.bf16 %v880, %v874
          %v983 = vpack.c.bf16 %v881, %v875
          %v984 = vld [vmem:[%s3] sm:$0xff]
          %v985 = vld [vmem:[%s3 + $0x8] sm:$0x3]
          %v1082 = vunpack.c.l.b16 %v882
          %v1083 = vunpack.c.l.b16 %v883
          %v1084 = vunpack.c.l.b16 %v884
          %v1085 = vunpack.c.l.b16 %v885
          %v1086 = vunpack.c.l.b16 %v886
          %v1087 = vunpack.c.l.b16 %v887
          %v1088 = vunpack.c.l.b16 %v888
          %v1089 = vunpack.c.l.b16 %v889
          %v1090 = vunpack.c.l.b16 %v890
          %v1091 = vunpack.c.l.b16 %v891
          %v1092 = vunpack.c.l.b16 %v892
          %v1093 = vunpack.c.l.b16 %v893
          %v1094 = vunpack.c.l.b16 %v894
          %v1095 = vunpack.c.l.b16 %v895
          %v1096 = vunpack.c.l.b16 %v896
          %v1097 = vunpack.c.l.b16 %v897
          %v1098 = vunpack.c.l.b16 %v898
          %v1099 = vunpack.c.l.b16 %v899
          %v1100 = vunpack.c.l.b16 %v900
          %v1101 = vunpack.c.l.b16 %v901
          %v1102 = vunpack.c.l.b16 %v902
          %v1103 = vunpack.c.l.b16 %v903
          %v1104 = vunpack.c.l.b16 %v904
          %v1105 = vunpack.c.l.b16 %v905
          %v1106 = vunpack.c.l.b16 %v906
          %v1107 = vunpack.c.l.b16 %v907
          %v1108 = vunpack.c.l.b16 %v908
          %v1109 = vunpack.c.l.b16 %v909
          %v1110 = vunpack.c.l.b16 %v910
          %v1111 = vunpack.c.l.b16 %v911
          %v1112 = vunpack.c.l.b16 %v912
          %v1113 = vunpack.c.l.b16 %v913
          %v1114 = vunpack.c.l.b16 %v914
          %v1115 = vunpack.c.l.b16 %v915
          %v1116 = vunpack.c.l.b16 %v916
          %v1117 = vunpack.c.l.b16 %v917
          %v1118 = vunpack.c.l.b16 %v918
          %v1119 = vunpack.c.l.b16 %v919
          %v1120 = vunpack.c.l.b16 %v920
          %v1121 = vunpack.c.l.b16 %v921
          %v1122 = vunpack.c.l.b16 %v922
          %v1123 = vunpack.c.l.b16 %v923
          %v1124 = vunpack.c.l.b16 %v924
          %v1125 = vunpack.c.l.b16 %v925
          %v1126 = vunpack.c.l.b16 %v926
          %v1127 = vunpack.c.l.b16 %v927
          %v1128 = vunpack.c.l.b16 %v928
          %v1129 = vunpack.c.l.b16 %v929
          %v1130 = vunpack.c.l.b16 %v930
          %v1131 = vunpack.c.l.b16 %v931
          %v1132 = vunpack.c.l.b16 %v932
          %v1133 = vunpack.c.l.b16 %v933
          %v1134 = vunpack.c.l.b16 %v934
          %v1135 = vunpack.c.l.b16 %v935
          %v1136 = vunpack.c.l.b16 %v936
          %v1137 = vunpack.c.l.b16 %v937
          %v1138 = vunpack.c.l.b16 %v938
          %v1139 = vunpack.c.l.b16 %v939
          %v1140 = vunpack.c.l.b16 %v940
          %v1141 = vunpack.c.l.b16 %v941
          %v1142 = vunpack.c.l.b16 %v942
          %v1143 = vunpack.c.l.b16 %v943
          %v1144 = vunpack.c.l.b16 %v944
          %v1145 = vunpack.c.l.b16 %v945
          %v1146 = vunpack.c.l.b16 %v946
          %v1147 = vunpack.c.l.b16 %v947
          %v1148 = vunpack.c.l.b16 %v948
          %v1149 = vunpack.c.l.b16 %v949
          %v1150 = vunpack.c.l.b16 %v950
          %v1151 = vunpack.c.l.b16 %v951
          %v1152 = vunpack.c.l.b16 %v952
          %v1153 = vunpack.c.l.b16 %v953
          %v1154 = vunpack.c.l.b16 %v954
          %v1155 = vunpack.c.l.b16 %v955
          %v1156 = vunpack.c.l.b16 %v956
          %v1157 = vunpack.c.l.b16 %v957
          %v1158 = vunpack.c.l.b16 %v958
          %v1159 = vunpack.c.l.b16 %v959
          %v1160 = vunpack.c.l.b16 %v960
          %v1161 = vunpack.c.l.b16 %v961
          %v1162 = vunpack.c.l.b16 %v962
          %v1163 = vunpack.c.l.b16 %v963
          %v1164 = vunpack.c.l.b16 %v964
          %v1165 = vunpack.c.l.b16 %v965
          %v1166 = vunpack.c.l.b16 %v966
          %v1167 = vunpack.c.l.b16 %v967
          %v1168 = vunpack.c.l.b16 %v968
          %v1169 = vunpack.c.l.b16 %v969
          %v1170 = vunpack.c.l.b16 %v970
          %v1171 = vunpack.c.l.b16 %v971
          %v1172 = vunpack.c.l.b16 %v972
          %v1173 = vunpack.c.l.b16 %v973
          %v1174 = vunpack.c.l.b16 %v974
          %v1175 = vunpack.c.l.b16 %v975
          %v1176 = vunpack.c.l.b16 %v976
          %v1177 = vunpack.c.l.b16 %v977
          %v1178 = vpack.c.b16 %v1083, %v1082
          %v1179 = vpack.c.b16 %v1085, %v1084
          %v1180 = vpack.c.b16 %v1087, %v1086
          %v1181 = vpack.c.b16 %v1089, %v1088
          %v1182 = vpack.c.b16 %v1091, %v1090
          %v1183 = vpack.c.b16 %v1093, %v1092
          %v1184 = vpack.c.b16 %v1095, %v1094
          %v1185 = vpack.c.b16 %v1097, %v1096
          %v1186 = vpack.c.b16 %v1099, %v1098
          %v1187 = vpack.c.b16 %v1101, %v1100
          %v1188 = vpack.c.b16 %v1103, %v1102
          %v1189 = vpack.c.b16 %v1105, %v1104
          %v1190 = vpack.c.b16 %v1107, %v1106
          %v1191 = vpack.c.b16 %v1109, %v1108
          %v1192 = vpack.c.b16 %v1111, %v1110
          %v1193 = vpack.c.b16 %v1113, %v1112
          %v1194 = vpack.c.b16 %v1115, %v1114
          %v1195 = vpack.c.b16 %v1117, %v1116
          %v1196 = vpack.c.b16 %v1119, %v1118
          %v1197 = vpack.c.b16 %v1121, %v1120
          %v1198 = vpack.c.b16 %v1123, %v1122
          %v1199 = vpack.c.b16 %v1125, %v1124
          %v1200 = vpack.c.b16 %v1127, %v1126
          %v1201 = vpack.c.b16 %v1129, %v1128
          %v1202 = vpack.c.b16 %v1131, %v1130
          %v1203 = vpack.c.b16 %v1133, %v1132
          %v1204 = vpack.c.b16 %v1135, %v1134
          %v1205 = vpack.c.b16 %v1137, %v1136
          %v1206 = vpack.c.b16 %v1139, %v1138
          %v1207 = vpack.c.b16 %v1141, %v1140
          %v1208 = vpack.c.b16 %v1143, %v1142
          %v1209 = vpack.c.b16 %v1145, %v1144
          %v1210 = vpack.c.b16 %v1147, %v1146
          %v1211 = vpack.c.b16 %v1149, %v1148
          %v1212 = vpack.c.b16 %v1151, %v1150
          %v1213 = vpack.c.b16 %v1153, %v1152
          %v1214 = vpack.c.b16 %v1155, %v1154
          %v1215 = vpack.c.b16 %v1157, %v1156
          %v1216 = vpack.c.b16 %v1159, %v1158
          %v1217 = vpack.c.b16 %v1161, %v1160
          %v1218 = vpack.c.b16 %v1163, %v1162
          %v1219 = vpack.c.b16 %v1165, %v1164
          %v1220 = vpack.c.b16 %v1167, %v1166
          %v1221 = vpack.c.b16 %v1169, %v1168
          %v1222 = vpack.c.b16 %v1171, %v1170
          %v1223 = vpack.c.b16 %v1173, %v1172
          %v1224 = vpack.c.b16 %v1175, %v1174
          %v1225 = vpack.c.b16 %v1177, %v1176
          %1274 = vmatprep.subr.bf16.mxu0 0
          %1275 = vmatpush1.bf16.msra.mxu0 %v1178
          %1276 = vmatprep.subr.bf16.mxu0 0
          %1277 = vmatpush1.bf16.msra.mxu0 %v1179
          %1278 = vmatprep.subr.bf16.mxu0 0
          %1279 = vmatpush1.bf16.msra.mxu0 %v1180
          %1280 = vmatprep.subr.bf16.mxu0 0
          %1281 = vmatpush1.bf16.msra.mxu0 %v1181
          %1282 = vmatprep.subr.bf16.mxu0 0
          %1283 = vmatpush1.bf16.msra.mxu0 %v1182
          %1284 = vmatprep.subr.bf16.mxu0 0
          %1285 = vmatpush1.bf16.msra.mxu0 %v1183
          %1286 = vmatprep.subr.bf16.mxu0 0
          %1287 = vmatpush1.bf16.msra.mxu0 %v1184
          %1288 = vmatprep.subr.bf16.mxu0 0
          %1289 = vmatpush1.bf16.msra.mxu0 %v1185
          %1290 = vmatprep.subr.bf16.mxu0 0
          %1291 = vmatpush1.bf16.msra.mxu0 %v1186
          %1292 = vmatprep.subr.bf16.mxu0 0
          %1293 = vmatpush1.bf16.msra.mxu0 %v1187
          %1294 = vmatprep.subr.bf16.mxu0 0
          %1295 = vmatpush1.bf16.msra.mxu0 %v1188
          %1296 = vmatprep.subr.bf16.mxu0 0
          %1297 = vmatpush1.bf16.msra.mxu0 %v1189
          %1298 = vmatprep.subr.bf16.mxu0 0
          %1299 = vmatpush1.bf16.msra.mxu0 %v1190
          %1300 = vmatprep.subr.bf16.mxu0 0
          %1301 = vmatpush1.bf16.msra.mxu0 %v1191
          %1302 = vmatprep.subr.bf16.mxu0 0
          %1303 = vmatpush1.bf16.msra.mxu0 %v1192
          %1304 = vmatprep.subr.bf16.mxu0 0
          %1305 = vmatpush1.bf16.msra.mxu0 %v1193
          %1306 = vmatprep.mubr.bf16.mxu0 %v979
          %1307 = vmatmul.mubr.bf16.gmra.mrb[0].mxu0 %v978
          %v1308 = vpop.f32.mrb[0].mxu0
          %v1309 = vadd.f32 %v984, %v1308
          %v1310 = vpop.f32.mrb[0].mxu0
          %v1311 = vpop.f32.mrb[0].mxu0
          %v1312 = vadd.f32 %v985, %v1311
          %v1313 = vpop.f32.mrb[0].mxu0
          %1314 = vdwg.mxu0
          %1315 = vmatprep.subr.bf16.mxu0 0
          %1316 = vmatpush1.bf16.msra.mxu0 %v1194
          %1317 = vmatprep.subr.bf16.mxu0 0
          %1318 = vmatpush1.bf16.msra.mxu0 %v1195
          %1319 = vmatprep.subr.bf16.mxu0 0
          %1320 = vmatpush1.bf16.msra.mxu0 %v1196
          %1321 = vmatprep.subr.bf16.mxu0 0
          %1322 = vmatpush1.bf16.msra.mxu0 %v1197
          %1323 = vmatprep.subr.bf16.mxu0 0
          %1324 = vmatpush1.bf16.msra.mxu0 %v1198
          %1325 = vmatprep.subr.bf16.mxu0 0
          %1326 = vmatpush1.bf16.msra.mxu0 %v1199
          %1327 = vmatprep.subr.bf16.mxu0 0
          %1328 = vmatpush1.bf16.msra.mxu0 %v1200
          %1329 = vmatprep.subr.bf16.mxu0 0
          %1330 = vmatpush1.bf16.msra.mxu0 %v1201
          %1331 = vmatprep.subr.bf16.mxu0 0
          %1332 = vmatpush1.bf16.msra.mxu0 %v1202
          %1333 = vmatprep.subr.bf16.mxu0 0
          %1334 = vmatpush1.bf16.msra.mxu0 %v1203
          %1335 = vmatprep.subr.bf16.mxu0 0
          %1336 = vmatpush1.bf16.msra.mxu0 %v1204
          %1337 = vmatprep.subr.bf16.mxu0 0
          %1338 = vmatpush1.bf16.msra.mxu0 %v1205
          %1339 = vmatprep.subr.bf16.mxu0 0
          %1340 = vmatpush1.bf16.msra.mxu0 %v1206
          %1341 = vmatprep.subr.bf16.mxu0 0
          %1342 = vmatpush1.bf16.msra.mxu0 %v1207
          %1343 = vmatprep.subr.bf16.mxu0 0
          %1344 = vmatpush1.bf16.msra.mxu0 %v1208
          %1345 = vmatprep.subr.bf16.mxu0 0
          %1346 = vmatpush1.bf16.msra.mxu0 %v1209
          %1347 = vmatprep.mubr.bf16.mxu0 %v981
          %1348 = vmatmul.mubr.bf16.gmra.mrb[0].mxu0 %v980
          %v1349 = vpop.f32.mrb[0].mxu0
          %v1350 = vadd.f32 %v1309, %v1349
          %v1351 = vpop.f32.mrb[0].mxu0
          %v1352 = vpop.f32.mrb[0].mxu0
          %v1353 = vadd.f32 %v1312, %v1352
          %v1354 = vpop.f32.mrb[0].mxu0
          %1355 = vdwg.mxu0
          %1356 = vmatprep.subr.bf16.mxu0 0
          %1357 = vmatpush1.bf16.msra.mxu0 %v1210
          %1358 = vmatprep.subr.bf16.mxu0 0
          %1359 = vmatpush1.bf16.msra.mxu0 %v1211
          %1360 = vmatprep.subr.bf16.mxu0 0
          %1361 = vmatpush1.bf16.msra.mxu0 %v1212
          %1362 = vmatprep.subr.bf16.mxu0 0
          %1363 = vmatpush1.bf16.msra.mxu0 %v1213
          %1364 = vmatprep.subr.bf16.mxu0 0
          %1365 = vmatpush1.bf16.msra.mxu0 %v1214
          %1366 = vmatprep.subr.bf16.mxu0 0
          %1367 = vmatpush1.bf16.msra.mxu0 %v1215
          %1368 = vmatprep.subr.bf16.mxu0 0
          %1369 = vmatpush1.bf16.msra.mxu0 %v1216
          %1370 = vmatprep.subr.bf16.mxu0 0
          %1371 = vmatpush1.bf16.msra.mxu0 %v1217
          %1372 = vmatprep.subr.bf16.mxu0 0
          %1373 = vmatpush1.bf16.msra.mxu0 %v1218
          %1374 = vmatprep.subr.bf16.mxu0 0
          %1375 = vmatpush1.bf16.msra.mxu0 %v1219
          %1376 = vmatprep.subr.bf16.mxu0 0
          %1377 = vmatpush1.bf16.msra.mxu0 %v1220
          %1378 = vmatprep.subr.bf16.mxu0 0
          %1379 = vmatpush1.bf16.msra.mxu0 %v1221
          %1380 = vmatprep.subr.bf16.mxu0 0
          %1381 = vmatpush1.bf16.msra.mxu0 %v1222
          %1382 = vmatprep.subr.bf16.mxu0 0
          %1383 = vmatpush1.bf16.msra.mxu0 %v1223
          %1384 = vmatprep.subr.bf16.mxu0 0
          %1385 = vmatpush1.bf16.msra.mxu0 %v1224
          %1386 = vmatprep.subr.bf16.mxu0 0
          %1387 = vmatpush1.bf16.msra.mxu0 %v1225
          %1388 = vmatprep.mubr.bf16.mxu0 %v983
          %1389 = vmatmul.mubr.bf16.gmra.mrb[0].mxu0 %v982
          %v1390 = vpop.f32.mrb[0].mxu0
          %v1391 = vadd.f32 %v1350, %v1390
          %v1392 = vpop.f32.mrb[0].mxu0
          %v1393 = vpop.f32.mrb[0].mxu0
          %v1394 = vadd.f32 %v1353, %v1393
          %v1395 = vpop.f32.mrb[0].mxu0
          %1396 = vdwg.mxu0
          %v1397 = vld [vmem:[%s4] sm:$0x1]
          %v1398 = vld [vmem:[%s5] sm:$0x1]
          %vm1399 = vcmask 523264
          %v1400 = vsel %vm1399, %v1391, 0.0
          %1401 = vadd.xlane.f32.xlu0 %v1400
          %v1402 = vpop.xlane.xlu0 %1401
          %vm1403 = vcmask 517120
          %v1404 = vsel %vm1403, %v1394, 0.0
          %1405 = vadd.xlane.f32.xlu0 %v1404
          %v1406 = vpop.xlane.xlu0 %1405
          %v1407 = vrcp.pop 64.0
          %v1408 = vmul.f32 %v1402, %v1407
          %v1409 = vmul.f32 %v1406, %v1407
          %v1410 = vsub.f32 %v1391, %v1408
          %v1411 = vsub.f32 %v1394, %v1409
          %v1412 = vmul.f32 %v1410, %v1410
          %v1413 = vmul.f32 %v1411, %v1411
          %v1414 = vsel %vm1399, %v1412, 0.0
          %1415 = vadd.xlane.f32.xlu0 %v1414
          %v1416 = vpop.xlane.xlu0 %1415
          %v1417 = vsel %vm1403, %v1413, 0.0
          %1418 = vadd.xlane.f32.xlu0 %v1417
          %v1419 = vpop.xlane.xlu0 %1418
          %v1420 = vmul.f32 %v1416, %v1407
          %v1421 = vmul.f32 %v1419, %v1407
          %v1422 = vadd.f32 %v1420, 1e-05
          %v1423 = vadd.f32 %v1421, 1e-05
          %v1424 = vrsqrt.pop %v1422
          %v1425 = vrsqrt.pop %v1423
          %v1426 = vmul.f32 %v1410, %v1424
          %v1427 = vmul.f32 %v1411, %v1425
          %v1429 = vlaneseq
          %v1430 = vshrl.u32 %v1429, 7
          %v1431 = vsub.s32 0, %v1430
          %v1432 = vrot.slane %v1397, %v1431
          %v1434 = vmul.f32 %v1426, %v1432
          %v1435 = vmul.f32 %v1427, %v1432
          %v1437 = vlaneseq
          %v1438 = vshrl.u32 %v1437, 7
          %v1439 = vsub.s32 0, %v1438
          %v1440 = vrot.slane %v1398, %v1439
          %v1442 = vadd.f32 %v1434, %v1440
          %v1443 = vadd.f32 %v1435, %v1440
          %1444 = vst.msk [vmem:[#allocation2] sm:$0xff] %vm1399, %v1442
          %1445 = vst.msk [vmem:[#allocation2 + $0x8] sm:$0x3] %vm1403, %v1443
        $region108: #{clip_encode_image.1} parent=103 // pred_fallthru
          _
        %v1446 = vld [vmem:[#allocation2] sm:$0xff]
        %v1447 = vld [vmem:[#allocation2 + $0x8] sm:$0x3]
        %v1448 = vld [vmem:[%s821] sm:$0x1]
        %v1449 = vld [vmem:[%s824] sm:$0x1]
        %vm1450 = vcmask 523264
        %v1451 = vsel %vm1450, %v1446, 0.0
        %1452 = vadd.xlane.f32.xlu0 %v1451
        %v1453 = vpop.xlane.xlu0 %1452
        %vm1454 = vcmask 517120
        %v1455 = vsel %vm1454, %v1447, 0.0
        %1456 = vadd.xlane.f32.xlu0 %v1455
        %v1457 = vpop.xlane.xlu0 %1456
        %v1458 = vrcp.pop 64.0
        %v1459 = vmul.f32 %v1453, %v1458
        %v1460 = vmul.f32 %v1457, %v1458
        %v1461 = vsub.f32 %v1446, %v1459
        %v1462 = vsub.f32 %v1447, %v1460
        %v1463 = vmul.f32 %v1461, %v1461
        %v1464 = vmul.f32 %v1462, %v1462
        %v1465 = vsel %vm1450, %v1463, 0.0
        %1466 = vadd.xlane.f32.xlu0 %v1465
        %v1467 = vpop.xlane.xlu0 %1466
        %v1468 = vsel %vm1454, %v1464, 0.0
        %1469 = vadd.xlane.f32.xlu0 %v1468
        %v1470 = vpop.xlane.xlu0 %1469
        %v1471 = vmul.f32 %v1467, %v1458
        %v1472 = vmul.f32 %v1470, %v1458
        %v1473 = vadd.f32 %v1471, 1e-05
        %v1474 = vadd.f32 %v1472, 1e-05
        %v1475 = vrsqrt.pop %v1473
        %v1476 = vrsqrt.pop %v1474
        %v1477 = vmul.f32 %v1461, %v1475
        %v1478 = vmul.f32 %v1462, %v1476
        %v1480 = vlaneseq
        %v1481 = vshrl.u32 %v1480, 7
        %v1482 = vsub.s32 0, %v1481
        %v1483 = vrot.slane %v1448, %v1482
        %v1485 = vmul.f32 %v1477, %v1483
        %v1486 = vmul.f32 %v1478, %v1483
        %v1488 = vlaneseq
        %v1489 = vshrl.u32 %v1488, 7
        %v1490 = vsub.s32 0, %v1489
        %v1491 = vrot.slane %v1449, %v1490
        %v1493 = vadd.f32 %v1485, %v1491
        %v1494 = vadd.f32 %v1486, %v1491
        %v1495 = vld [vmem:[%s829] sm:$0xff]
        %v1496 = vld [vmem:[%s829 + $0x8] sm:$0xff]
        %v1497 = vld [vmem:[%s829 + $0x10] sm:$0xff]
        %v1498 = vld [vmem:[%s829 + $0x18] sm:$0xff]
        %v1499 = vld [vmem:[%s829 + $0x20] sm:$0xff]
        %v1500 = vld [vmem:[%s829 + $0x28] sm:$0xff]
        %v1501 = vld [vmem:[%s829 + $0x30] sm:$0xff]
        %v1502 = vld [vmem:[%s829 + $0x38] sm:$0xff]
        %v1503 = vpack.c.bf16 %v1494, %v1493
        %v1504 = vld [vmem:[%s833] sm:$0x3]
        %v1506 = vlaneseq
        %v1507 = vshrl.u32 %v1506, 7
        %v1508 = vsub.s32 0, %v1507
        %v1509 = vrot.slane %v1504, %v1508
        %v1510 = vlaneseq
        %v1511 = vshrl.u32 %v1510, 7
        %v1512 = vsub.s32 1, %v1511
        %v1513 = vrot.slane %v1504, %v1512
        %v1524 = vunpack.c.l.b16 %v1495
        %v1525 = vunpack.c.h.b16 %v1495
        %v1526 = vunpack.c.l.b16 %v1496
        %v1527 = vunpack.c.h.b16 %v1496
        %v1528 = vunpack.c.l.b16 %v1497
        %v1529 = vunpack.c.h.b16 %v1497
        %v1530 = vunpack.c.l.b16 %v1498
        %v1531 = vunpack.c.h.b16 %v1498
        %v1532 = vunpack.c.l.b16 %v1499
        %v1533 = vunpack.c.h.b16 %v1499
        %v1534 = vunpack.c.l.b16 %v1500
        %v1535 = vunpack.c.h.b16 %v1500
        %v1536 = vunpack.c.l.b16 %v1501
        %v1537 = vunpack.c.h.b16 %v1501
        %v1538 = vunpack.c.l.b16 %v1502
        %v1539 = vunpack.c.h.b16 %v1502
        %v1540 = vpack.c.b16 %v1526, %v1524
        %v1541 = vpack.c.b16 %v1527, %v1525
        %v1542 = vpack.c.b16 %v1530, %v1528
        %v1543 = vpack.c.b16 %v1531, %v1529
        %v1544 = vpack.c.b16 %v1534, %v1532
        %v1545 = vpack.c.b16 %v1535, %v1533
        %v1546 = vpack.c.b16 %v1538, %v1536
        %v1547 = vpack.c.b16 %v1539, %v1537
        %v1557 = vsel %vm1450, %v1503, 0
        %1559 = vmatprep.subr.bf16.mxu0 %v1541
        %1560 = vmatpush1.bf16.msra.mxu0 %v1540
        %1561 = vmatprep.subr.bf16.mxu0 %v1543
        %1562 = vmatpush1.bf16.msra.mxu0 %v1542
        %1563 = vmatprep.subr.bf16.mxu0 %v1545
        %1564 = vmatpush1.bf16.msra.mxu0 %v1544
        %1565 = vmatprep.subr.bf16.mxu0 %v1547
        %1566 = vmatpush1.bf16.msra.mxu0 %v1546
        %1567 = vmatprep.subr.bf16.mxu0 0
        %1568 = vmatpush1.bf16.msra.mxu0 0
        %1569 = vmatprep.subr.bf16.mxu0 0
        %1570 = vmatpush1.bf16.msra.mxu0 0
        %1571 = vmatprep.subr.bf16.mxu0 0
        %1572 = vmatpush1.bf16.msra.mxu0 0
        %1573 = vmatprep.subr.bf16.mxu0 0
        %1574 = vmatpush1.bf16.msra.mxu0 0
        %1575 = vmatprep.subr.bf16.mxu0 0
        %1576 = vmatpush1.bf16.msra.mxu0 0
        %1577 = vmatprep.subr.bf16.mxu0 0
        %1578 = vmatpush1.bf16.msra.mxu0 0
        %1579 = vmatprep.subr.bf16.mxu0 0
        %1580 = vmatpush1.bf16.msra.mxu0 0
        %1581 = vmatprep.subr.bf16.mxu0 0
        %1582 = vmatpush1.bf16.msra.mxu0 0
        %1583 = vmatprep.subr.bf16.mxu0 0
        %1584 = vmatpush1.bf16.msra.mxu0 0
        %1585 = vmatprep.subr.bf16.mxu0 0
        %1586 = vmatpush1.bf16.msra.mxu0 0
        %1587 = vmatprep.subr.bf16.mxu0 0
        %1588 = vmatpush1.bf16.msra.mxu0 0
        %1589 = vmatprep.subr.bf16.mxu0 0
        %1590 = vmatpush1.bf16.msra.mxu0 0
        %1591 = vmatprep.mubr.bf16.mxu0 0
        %1592 = vmatmul.mubr.bf16.gmra.mrb[0].mxu0 %v1557
        %v1593 = vpop.f32.mrb[0].mxu0
        %v1594 = vadd.f32 %v1509, %v1593
        %v1595 = vpop.f32.mrb[0].mxu0
        %v1596 = vadd.f32 %v1513, %v1595
        %v1597 = vpop.f32.mrb[0].mxu0
        %v1598 = vadd.f32 %v1509, %v1597
        %v1599 = vpop.f32.mrb[0].mxu0
        %v1600 = vadd.f32 %v1513, %v1599
        %1601 = vdwg.mxu0
        %1604 = vrot.lane.b32.xlu0 %v1594, 112
        %v1605 = vpop.permute.xlu0 %1604
        %1606 = vrot.lane.b32.xlu0 %v1598, 112
        %v1607 = vpop.permute.xlu0 %1606
        %1610 = vrot.lane.b32.xlu0 %v1594, 96
        %v1611 = vpop.permute.xlu0 %1610
        %1612 = vrot.lane.b32.xlu0 %v1598, 96
        %v1613 = vpop.permute.xlu0 %1612
        %1616 = vrot.lane.b32.xlu0 %v1594, 80
        %v1617 = vpop.permute.xlu0 %1616
        %1618 = vrot.lane.b32.xlu0 %v1598, 80
        %v1619 = vpop.permute.xlu0 %1618
        %v1622 = vpack.c.bf16 %v1598, %v1594
        %v1623 = vpack.c.bf16 %v1607, %v1605
        %v1624 = vpack.c.bf16 %v1613, %v1611
        %v1625 = vpack.c.bf16 %v1619, %v1617
        %1628 = vrot.lane.b32.xlu0 %v1596, 112
        %v1629 = vpop.permute.xlu0 %1628
        %1630 = vrot.lane.b32.xlu0 %v1600, 112
        %v1631 = vpop.permute.xlu0 %1630
        %1634 = vrot.lane.b32.xlu0 %v1596, 96
        %v1635 = vpop.permute.xlu0 %1634
        %1636 = vrot.lane.b32.xlu0 %v1600, 96
        %v1637 = vpop.permute.xlu0 %1636
        %1640 = vrot.lane.b32.xlu0 %v1596, 80
        %v1641 = vpop.permute.xlu0 %1640
        %1642 = vrot.lane.b32.xlu0 %v1600, 80
        %v1643 = vpop.permute.xlu0 %1642
        %v1646 = vpack.c.bf16 %v1600, %v1596
        %v1647 = vpack.c.bf16 %v1631, %v1629
        %v1648 = vpack.c.bf16 %v1637, %v1635
        %v1649 = vpack.c.bf16 %v1643, %v1641
        %1651 = vrot.lane.b32.xlu0 %v1622, 64
        %v1652 = vpop.permute.xlu0 %1651
        %vm1653 = vcmask 130048
        %v1655 = vsel %vm1653, %v1622, 0
        %v1658 = vsel %vm1653, %v1652, 0
        %1660 = vmatprep.subr.bf16.mxu0 0
        %1661 = vmatpush1.bf16.xpose.msra.mxu0 %v1658
        %1662 = vmatprep.subr.bf16.mxu0 0
        %1663 = vmatpush1.bf16.xpose.msra.mxu0 0
        %1664 = vmatprep.subr.bf16.mxu0 0
        %1665 = vmatpush1.bf16.xpose.msra.mxu0 0
        %1666 = vmatprep.subr.bf16.mxu0 0
        %1667 = vmatpush1.bf16.xpose.msra.mxu0 0
        %1668 = vmatprep.subr.bf16.mxu0 0
        %1669 = vmatpush1.bf16.xpose.msra.mxu0 0
        %1670 = vmatprep.subr.bf16.mxu0 0
        %1671 = vmatpush1.bf16.xpose.msra.mxu0 0
        %1672 = vmatprep.subr.bf16.mxu0 0
        %1673 = vmatpush1.bf16.xpose.msra.mxu0 0
        %1674 = vmatprep.subr.bf16.mxu0 0
        %1675 = vmatpush1.bf16.xpose.msra.mxu0 0
        %1676 = vmatprep.subr.bf16.mxu0 0
        %1677 = vmatpush1.bf16.xpose.msra.mxu0 0
        %1678 = vmatprep.subr.bf16.mxu0 0
        %1679 = vmatpush1.bf16.xpose.msra.mxu0 0
        %1680 = vmatprep.subr.bf16.mxu0 0
        %1681 = vmatpush1.bf16.xpose.msra.mxu0 0
        %1682 = vmatprep.subr.bf16.mxu0 0
        %1683 = vmatpush1.bf16.xpose.msra.mxu0 0
        %1684 = vmatprep.subr.bf16.mxu0 0
        %1685 = vmatpush1.bf16.xpose.msra.mxu0 0
        %1686 = vmatprep.subr.bf16.mxu0 0
        %1687 = vmatpush1.bf16.xpose.msra.mxu0 0
        %1688 = vmatprep.subr.bf16.mxu0 0
        %1689 = vmatpush1.bf16.xpose.msra.mxu0 0
        %1690 = vmatprep.subr.bf16.mxu0 0
        %1691 = vmatpush1.bf16.xpose.msra.mxu0 0
        %1692 = vmatprep.mubr.bf16.mxu0 0
        %1693 = vmatmul.mubr.bf16.gmra.mrb[0].mxu0 %v1655
        %v1694 = vpop.f32.mrb[0].mxu0
        %v1695 = vadd.f32 0.0, %v1694
        %v1696 = vpop.f32.mrb[0].mxu0
        %v1697 = vpop.f32.mrb[0].mxu0
        %v1698 = vadd.f32 0.0, %v1697
        %v1699 = vpop.f32.mrb[0].mxu0
        %1700 = vdwg.mxu0
        %1702 = vrot.lane.b32.xlu0 %v1623, 64
        %v1703 = vpop.permute.xlu0 %1702
        %v1705 = vsel %vm1653, %v1623, 0
        %v1708 = vsel %vm1653, %v1703, 0
        %1710 = vmatprep.subr.bf16.mxu0 0
        %1711 = vmatpush1.bf16.xpose.msra.mxu0 %v1708
        %1712 = vmatprep.subr.bf16.mxu0 0
        %1713 = vmatpush1.bf16.xpose.msra.mxu0 0
        %1714 = vmatprep.subr.bf16.mxu0 0
        %1715 = vmatpush1.bf16.xpose.msra.mxu0 0
        %1716 = vmatprep.subr.bf16.mxu0 0
        %1717 = vmatpush1.bf16.xpose.msra.mxu0 0
        %1718 = vmatprep.subr.bf16.mxu0 0
        %1719 = vmatpush1.bf16.xpose.msra.mxu0 0
        %1720 = vmatprep.subr.bf16.mxu0 0
        %1721 = vmatpush1.bf16.xpose.msra.mxu0 0
        %1722 = vmatprep.subr.bf16.mxu0 0
        %1723 = vmatpush1.bf16.xpose.msra.mxu0 0
        %1724 = vmatprep.subr.bf16.mxu0 0
        %1725 = vmatpush1.bf16.xpose.msra.mxu0 0
        %1726 = vmatprep.subr.bf16.mxu0 0
        %1727 = vmatpush1.bf16.xpose.msra.mxu0 0
        %1728 = vmatprep.subr.bf16.mxu0 0
        %1729 = vmatpush1.bf16.xpose.msra.mxu0 0
        %1730 = vmatprep.subr.bf16.mxu0 0
        %1731 = vmatpush1.bf16.xpose.msra.mxu0 0
        %1732 = vmatprep.subr.bf16.mxu0 0
        %1733 = vmatpush1.bf16.xpose.msra.mxu0 0
        %1734 = vmatprep.subr.bf16.mxu0 0
        %1735 = vmatpush1.bf16.xpose.msra.mxu0 0
        %1736 = vmatprep.subr.bf16.mxu0 0
        %1737 = vmatpush1.bf16.xpose.msra.mxu0 0
        %1738 = vmatprep.subr.bf16.mxu0 0
        %1739 = vmatpush1.bf16.xpose.msra.mxu0 0
        %1740 = vmatprep.subr.bf16.mxu0 0
        %1741 = vmatpush1.bf16.xpose.msra.mxu0 0
        %1742 = vmatprep.mubr.bf16.mxu0 0
        %1743 = vmatmul.mubr.bf16.gmra.mrb[0].mxu0 %v1705
        %v1744 = vpop.f32.mrb[0].mxu0
        %v1745 = vadd.f32 0.0, %v1744
        %v1746 = vpop.f32.mrb[0].mxu0
        %v1747 = vpop.f32.mrb[0].mxu0
        %v1748 = vadd.f32 0.0, %v1747
        %v1749 = vpop.f32.mrb[0].mxu0
        %1750 = vdwg.mxu0
        %1752 = vrot.lane.b32.xlu0 %v1624, 64
        %v1753 = vpop.permute.xlu0 %1752
        %v1755 = vsel %vm1653, %v1624, 0
        %v1758 = vsel %vm1653, %v1753, 0
        %1760 = vmatprep.subr.bf16.mxu0 0
        %1761 = vmatpush1.bf16.xpose.msra.mxu0 %v1758
        %1762 = vmatprep.subr.bf16.mxu0 0
        %1763 = vmatpush1.bf16.xpose.msra.mxu0 0
        %1764 = vmatprep.subr.bf16.mxu0 0
        %1765 = vmatpush1.bf16.xpose.msra.mxu0 0
        %1766 = vmatprep.subr.bf16.mxu0 0
        %1767 = vmatpush1.bf16.xpose.msra.mxu0 0
        %1768 = vmatprep.subr.bf16.mxu0 0
        %1769 = vmatpush1.bf16.xpose.msra.mxu0 0
        %1770 = vmatprep.subr.bf16.mxu0 0
        %1771 = vmatpush1.bf16.xpose.msra.mxu0 0
        %1772 = vmatprep.subr.bf16.mxu0 0
        %1773 = vmatpush1.bf16.xpose.msra.mxu0 0
        %1774 = vmatprep.subr.bf16.mxu0 0
        %1775 = vmatpush1.bf16.xpose.msra.mxu0 0
        %1776 = vmatprep.subr.bf16.mxu0 0
        %1777 = vmatpush1.bf16.xpose.msra.mxu0 0
        %1778 = vmatprep.subr.bf16.mxu0 0
        %1779 = vmatpush1.bf16.xpose.msra.mxu0 0
        %1780 = vmatprep.subr.bf16.mxu0 0
        %1781 = vmatpush1.bf16.xpose.msra.mxu0 0
        %1782 = vmatprep.subr.bf16.mxu0 0
        %1783 = vmatpush1.bf16.xpose.msra.mxu0 0
        %1784 = vmatprep.subr.bf16.mxu0 0
        %1785 = vmatpush1.bf16.xpose.msra.mxu0 0
        %1786 = vmatprep.subr.bf16.mxu0 0
        %1787 = vmatpush1.bf16.xpose.msra.mxu0 0
        %1788 = vmatprep.subr.bf16.mxu0 0
        %1789 = vmatpush1.bf16.xpose.msra.mxu0 0
        %1790 = vmatprep.subr.bf16.mxu0 0
        %1791 = vmatpush1.bf16.xpose.msra.mxu0 0
        %1792 = vmatprep.mubr.bf16.mxu0 0
        %1793 = vmatmul.mubr.bf16.gmra.mrb[0].mxu0 %v1755
        %v1794 = vpop.f32.mrb[0].mxu0
        %v1795 = vadd.f32 0.0, %v1794
        %v1796 = vpop.f32.mrb[0].mxu0
        %v1797 = vpop.f32.mrb[0].mxu0
        %v1798 = vadd.f32 0.0, %v1797
        %v1799 = vpop.f32.mrb[0].mxu0
        %1800 = vdwg.mxu0
        %1802 = vrot.lane.b32.xlu0 %v1625, 64
        %v1803 = vpop.permute.xlu0 %1802
        %v1805 = vsel %vm1653, %v1625, 0
        %v1808 = vsel %vm1653, %v1803, 0
        %1810 = vmatprep.subr.bf16.mxu0 0
        %1811 = vmatpush1.bf16.xpose.msra.mxu0 %v1808
        %1812 = vmatprep.subr.bf16.mxu0 0
        %1813 = vmatpush1.bf16.xpose.msra.mxu0 0
        %1814 = vmatprep.subr.bf16.mxu0 0
        %1815 = vmatpush1.bf16.xpose.msra.mxu0 0
        %1816 = vmatprep.subr.bf16.mxu0 0
        %1817 = vmatpush1.bf16.xpose.msra.mxu0 0
        %1818 = vmatprep.subr.bf16.mxu0 0
        %1819 = vmatpush1.bf16.xpose.msra.mxu0 0
        %1820 = vmatprep.subr.bf16.mxu0 0
        %1821 = vmatpush1.bf16.xpose.msra.mxu0 0
        %1822 = vmatprep.subr.bf16.mxu0 0
        %1823 = vmatpush1.bf16.xpose.msra.mxu0 0
        %1824 = vmatprep.subr.bf16.mxu0 0
        %1825 = vmatpush1.bf16.xpose.msra.mxu0 0
        %1826 = vmatprep.subr.bf16.mxu0 0
        %1827 = vmatpush1.bf16.xpose.msra.mxu0 0
        %1828 = vmatprep.subr.bf16.mxu0 0
        %1829 = vmatpush1.bf16.xpose.msra.mxu0 0
        %1830 = vmatprep.subr.bf16.mxu0 0
        %1831 = vmatpush1.bf16.xpose.msra.mxu0 0
        %1832 = vmatprep.subr.bf16.mxu0 0
        %1833 = vmatpush1.bf16.xpose.msra.mxu0 0
        %1834 = vmatprep.subr.bf16.mxu0 0
        %1835 = vmatpush1.bf16.xpose.msra.mxu0 0
        %1836 = vmatprep.subr.bf16.mxu0 0
        %1837 = vmatpush1.bf16.xpose.msra.mxu0 0
        %1838 = vmatprep.subr.bf16.mxu0 0
        %1839 = vmatpush1.bf16.xpose.msra.mxu0 0
        %1840 = vmatprep.subr.bf16.mxu0 0
        %1841 = vmatpush1.bf16.xpose.msra.mxu0 0
        %1842 = vmatprep.mubr.bf16.mxu0 0
        %1843 = vmatmul.mubr.bf16.gmra.mrb[0].mxu0 %v1805
        %v1844 = vpop.f32.mrb[0].mxu0
        %v1845 = vadd.f32 0.0, %v1844
        %v1846 = vpop.f32.mrb[0].mxu0
        %v1847 = vpop.f32.mrb[0].mxu0
        %v1848 = vadd.f32 0.0, %v1847
        %v1849 = vpop.f32.mrb[0].mxu0
        %1850 = vdwg.mxu0
        %v1851 = vmul.f32 %v1695, 0.25
        %v1852 = vmul.f32 %v1698, 0.25
        %v1853 = vmul.f32 %v1745, 0.25
        %v1854 = vmul.f32 %v1748, 0.25
        %v1855 = vmul.f32 %v1795, 0.25
        %v1856 = vmul.f32 %v1798, 0.25
        %v1857 = vmul.f32 %v1845, 0.25
        %v1858 = vmul.f32 %v1848, 0.25
        %v1859 = vld [vmem:[%s1] sm:$0xff]
        %v1860 = vld [vmem:[%s1 + $0x8] sm:$0x3]
        %v1861 = vadd.f32 %v1851, %v1859
        %v1862 = vadd.f32 %v1852, %v1860
        %v1863 = vadd.f32 %v1853, %v1859
        %v1864 = vadd.f32 %v1854, %v1860
        %v1865 = vadd.f32 %v1855, %v1859
        %v1866 = vadd.f32 %v1856, %v1860
        %v1867 = vadd.f32 %v1857, %v1859
        %v1868 = vadd.f32 %v1858, %v1860
        %vm1869 = vcmask 80896
        %v1870 = vsel %vm1869, %v1861, -inf
        %1871 = vmax.xlane.f32.xlu0 %v1870
        %v1872 = vpop.xlane.xlu0 %1871
        %vm1873 = vcmask 74752
        %v1874 = vsel %vm1873, %v1862, -inf
        %1875 = vmax.xlane.f32.xlu0 %v1874
        %v1876 = vpop.xlane.xlu0 %1875
        %v1877 = vsel %vm1869, %v1863, -inf
        %1878 = vmax.xlane.f32.xlu0 %v1877
        %v1879 = vpop.xlane.xlu0 %1878
        %v1880 = vsel %vm1873, %v1864, -inf
        %1881 = vmax.xlane.f32.xlu0 %v1880
        %v1882 = vpop.xlane.xlu0 %1881
        %v1883 = vsel %vm1869, %v1865, -inf
        %1884 = vmax.xlane.f32.xlu0 %v1883
        %v1885 = vpop.xlane.xlu0 %1884
        %v1886 = vsel %vm1873, %v1866, -inf
        %1887 = vmax.xlane.f32.xlu0 %v1886
        %v1888 = vpop.xlane.xlu0 %1887
        %v1889 = vsel %vm1869, %v1867, -inf
        %1890 = vmax.xlane.f32.xlu0 %v1889
        %v1891 = vpop.xlane.xlu0 %1890
        %v1892 = vsel %vm1873, %v1868, -inf
        %1893 = vmax.xlane.f32.xlu0 %v1892
        %v1894 = vpop.xlane.xlu0 %1893
        %v1895 = vsub.f32 %v1861, %v1872
        %v1896 = vsub.f32 %v1862, %v1876
        %v1897 = vsub.f32 %v1863, %v1879
        %v1898 = vsub.f32 %v1864, %v1882
        %v1899 = vsub.f32 %v1865, %v1885
        %v1900 = vsub.f32 %v1866, %v1888
        %v1901 = vsub.f32 %v1867, %v1891
        %v1902 = vsub.f32 %v1868, %v1894
        %v1903 = vmul.f32 %v1895, 1.442695
        %v1904 = vpow.pop %v1903
        %v1905 = vmul.f32 %v1896, 1.442695
        %v1906 = vpow.pop %v1905
        %v1907 = vmul.f32 %v1897, 1.442695
        %v1908 = vpow.pop %v1907
        %v1909 = vmul.f32 %v1898, 1.442695
        %v1910 = vpow.pop %v1909
        %v1911 = vmul.f32 %v1899, 1.442695
        %v1912 = vpow.pop %v1911
        %v1913 = vmul.f32 %v1900, 1.442695
        %v1914 = vpow.pop %v1913
        %v1915 = vmul.f32 %v1901, 1.442695
        %v1916 = vpow.pop %v1915
        %v1917 = vmul.f32 %v1902, 1.442695
        %v1918 = vpow.pop %v1917
        %v1919 = vsel %vm1869, %v1904, 0.0
        %1920 = vadd.xlane.f32.xlu0 %v1919
        %v1921 = vpop.xlane.xlu0 %1920
        %v1922 = vsel %vm1873, %v1906, 0.0
        %1923 = vadd.xlane.f32.xlu0 %v1922
        %v1924 = vpop.xlane.xlu0 %1923
        %v1925 = vsel %vm1869, %v1908, 0.0
        %1926 = vadd.xlane.f32.xlu0 %v1925
        %v1927 = vpop.xlane.xlu0 %1926
        %v1928 = vsel %vm1873, %v1910, 0.0
        %1929 = vadd.xlane.f32.xlu0 %v1928
        %v1930 = vpop.xlane.xlu0 %1929
        %v1931 = vsel %vm1869, %v1912, 0.0
        %1932 = vadd.xlane.f32.xlu0 %v1931
        %v1933 = vpop.xlane.xlu0 %1932
        %v1934 = vsel %vm1873, %v1914, 0.0
        %1935 = vadd.xlane.f32.xlu0 %v1934
        %v1936 = vpop.xlane.xlu0 %1935
        %v1937 = vsel %vm1869, %v1916, 0.0
        %1938 = vadd.xlane.f32.xlu0 %v1937
        %v1939 = vpop.xlane.xlu0 %1938
        %v1940 = vsel %vm1873, %v1918, 0.0
        %1941 = vadd.xlane.f32.xlu0 %v1940
        %v1942 = vpop.xlane.xlu0 %1941
        %v1943 = vrcp.pop %v1921
        %v1944 = vrcp.pop %v1924
        %v1945 = vrcp.pop %v1927
        %v1946 = vrcp.pop %v1930
        %v1947 = vrcp.pop %v1933
        %v1948 = vrcp.pop %v1936
        %v1949 = vrcp.pop %v1939
        %v1950 = vrcp.pop %v1942
        %v1951 = vmul.f32 %v1904, %v1943
        %v1952 = vmul.f32 %v1906, %v1944
        %v1953 = vmul.f32 %v1908, %v1945
        %v1954 = vmul.f32 %v1910, %v1946
        %v1955 = vmul.f32 %v1912, %v1947
        %v1956 = vmul.f32 %v1914, %v1948
        %v1957 = vmul.f32 %v1916, %v1949
        %v1958 = vmul.f32 %v1918, %v1950
        %v1959 = vpack.c.bf16 %v1952, %v1951
        %v1960 = vpack.c.bf16 %v1954, %v1953
        %v1961 = vpack.c.bf16 %v1956, %v1955
        %v1962 = vpack.c.bf16 %v1958, %v1957
        %v1964 = vsel %vm1869, %v1959, 0
        %vm1966 = vcmask 1044480
        %v1968 = vsel %vm1966, %v1646, 0
        %1970 = vmatprep.subr.bf16.mxu0 0
        %1971 = vmatpush1.bf16.msra.mxu0 %v1968
        %1972 = vmatprep.subr.bf16.mxu0 0
        %1973 = vmatpush1.bf16.msra.mxu0 0
        %1974 = vmatprep.subr.bf16.mxu0 0
        %1975 = vmatpush1.bf16.msra.mxu0 0
        %1976 = vmatprep.subr.bf16.mxu0 0
        %1977 = vmatpush1.bf16.msra.mxu0 0
        %1978 = vmatprep.subr.bf16.mxu0 0
        %1979 = vmatpush1.bf16.msra.mxu0 0
        %1980 = vmatprep.subr.bf16.mxu0 0
        %1981 = vmatpush1.bf16.msra.mxu0 0
        %1982 = vmatprep.subr.bf16.mxu0 0
        %1983 = vmatpush1.bf16.msra.mxu0 0
        %1984 = vmatprep.subr.bf16.mxu0 0
        %1985 = vmatpush1.bf16.msra.mxu0 0
        %1986 = vmatprep.subr.bf16.mxu0 0
        %1987 = vmatpush1.bf16.msra.mxu0 0
        %1988 = vmatprep.subr.bf16.mxu0 0
        %1989 = vmatpush1.bf16.msra.mxu0 0
        %1990 = vmatprep.subr.bf16.mxu0 0
        %1991 = vmatpush1.bf16.msra.mxu0 0
        %1992 = vmatprep.subr.bf16.mxu0 0
        %1993 = vmatpush1.bf16.msra.mxu0 0
        %1994 = vmatprep.subr.bf16.mxu0 0
        %1995 = vmatpush1.bf16.msra.mxu0 0
        %1996 = vmatprep.subr.bf16.mxu0 0
        %1997 = vmatpush1.bf16.msra.mxu0 0
        %1998 = vmatprep.subr.bf16.mxu0 0
        %1999 = vmatpush1.bf16.msra.mxu0 0
        %2000 = vmatprep.subr.bf16.mxu0 0
        %2001 = vmatpush1.bf16.msra.mxu0 0
        %2002 = vmatprep.mubr.bf16.mxu0 0
        %2003 = vmatmul.mubr.bf16.gmra.mrb[0].mxu0 %v1964
        %v2004 = vpop.f32.mrb[0].mxu0
        %v2005 = vadd.f32 0.0, %v2004
        %v2006 = vpop.f32.mrb[0].mxu0
        %v2007 = vpop.f32.mrb[0].mxu0
        %v2008 = vadd.f32 0.0, %v2007
        %v2009 = vpop.f32.mrb[0].mxu0
        %2010 = vdwg.mxu0
        %v2012 = vsel %vm1869, %v1960, 0
        %v2015 = vsel %vm1966, %v1647, 0
        %2017 = vmatprep.subr.bf16.mxu0 0
        %2018 = vmatpush1.bf16.msra.mxu0 %v2015
        %2019 = vmatprep.subr.bf16.mxu0 0
        %2020 = vmatpush1.bf16.msra.mxu0 0
        %2021 = vmatprep.subr.bf16.mxu0 0
        %2022 = vmatpush1.bf16.msra.mxu0 0
        %2023 = vmatprep.subr.bf16.mxu0 0
        %2024 = vmatpush1.bf16.msra.mxu0 0
        %2025 = vmatprep.subr.bf16.mxu0 0
        %2026 = vmatpush1.bf16.msra.mxu0 0
        %2027 = vmatprep.subr.bf16.mxu0 0
        %2028 = vmatpush1.bf16.msra.mxu0 0
        %2029 = vmatprep.subr.bf16.mxu0 0
        %2030 = vmatpush1.bf16.msra.mxu0 0
        %2031 = vmatprep.subr.bf16.mxu0 0
        %2032 = vmatpush1.bf16.msra.mxu0 0
        %2033 = vmatprep.subr.bf16.mxu0 0
        %2034 = vmatpush1.bf16.msra.mxu0 0
        %2035 = vmatprep.subr.bf16.mxu0 0
        %2036 = vmatpush1.bf16.msra.mxu0 0
        %2037 = vmatprep.subr.bf16.mxu0 0
        %2038 = vmatpush1.bf16.msra.mxu0 0
        %2039 = vmatprep.subr.bf16.mxu0 0
        %2040 = vmatpush1.bf16.msra.mxu0 0
        %2041 = vmatprep.subr.bf16.mxu0 0
        %2042 = vmatpush1.bf16.msra.mxu0 0
        %2043 = vmatprep.subr.bf16.mxu0 0
        %2044 = vmatpush1.bf16.msra.mxu0 0
        %2045 = vmatprep.subr.bf16.mxu0 0
        %2046 = vmatpush1.bf16.msra.mxu0 0
        %2047 = vmatprep.subr.bf16.mxu0 0
        %2048 = vmatpush1.bf16.msra.mxu0 0
        %2049 = vmatprep.mubr.bf16.mxu0 0
        %2050 = vmatmul.mubr.bf16.gmra.mrb[0].mxu0 %v2012
        %v2051 = vpop.f32.mrb[0].mxu0
        %v2052 = vadd.f32 0.0, %v2051
        %v2053 = vpop.f32.mrb[0].mxu0
        %v2054 = vpop.f32.mrb[0].mxu0
        %v2055 = vadd.f32 0.0, %v2054
        %v2056 = vpop.f32.mrb[0].mxu0
        %2057 = vdwg.mxu0
        %v2059 = vsel %vm1869, %v1961, 0
        %v2062 = vsel %vm1966, %v1648, 0
        %2064 = vmatprep.subr.bf16.mxu0 0
        %2065 = vmatpush1.bf16.msra.mxu0 %v2062
        %2066 = vmatprep.subr.bf16.mxu0 0
        %2067 = vmatpush1.bf16.msra.mxu0 0
        %2068 = vmatprep.subr.bf16.mxu0 0
        %2069 = vmatpush1.bf16.msra.mxu0 0
        %2070 = vmatprep.subr.bf16.mxu0 0
        %2071 = vmatpush1.bf16.msra.mxu0 0
        %2072 = vmatprep.subr.bf16.mxu0 0
        %2073 = vmatpush1.bf16.msra.mxu0 0
        %2074 = vmatprep.subr.bf16.mxu0 0
        %2075 = vmatpush1.bf16.msra.mxu0 0
        %2076 = vmatprep.subr.bf16.mxu0 0
        %2077 = vmatpush1.bf16.msra.mxu0 0
        %2078 = vmatprep.subr.bf16.mxu0 0
        %2079 = vmatpush1.bf16.msra.mxu0 0
        %2080 = vmatprep.subr.bf16.mxu0 0
        %2081 = vmatpush1.bf16.msra.mxu0 0
        %2082 = vmatprep.subr.bf16.mxu0 0
        %2083 = vmatpush1.bf16.msra.mxu0 0
        %2084 = vmatprep.subr.bf16.mxu0 0
        %2085 = vmatpush1.bf16.msra.mxu0 0
        %2086 = vmatprep.subr.bf16.mxu0 0
        %2087 = vmatpush1.bf16.msra.mxu0 0
        %2088 = vmatprep.subr.bf16.mxu0 0
        %2089 = vmatpush1.bf16.msra.mxu0 0
        %2090 = vmatprep.subr.bf16.mxu0 0
        %2091 = vmatpush1.bf16.msra.mxu0 0
        %2092 = vmatprep.subr.bf16.mxu0 0
        %2093 = vmatpush1.bf16.msra.mxu0 0
        %2094 = vmatprep.subr.bf16.mxu0 0
        %2095 = vmatpush1.bf16.msra.mxu0 0
        %2096 = vmatprep.mubr.bf16.mxu0 0
        %2097 = vmatmul.mubr.bf16.gmra.mrb[0].mxu0 %v2059
        %v2098 = vpop.f32.mrb[0].mxu0
        %v2099 = vadd.f32 0.0, %v2098
        %v2100 = vpop.f32.mrb[0].mxu0
        %v2101 = vpop.f32.mrb[0].mxu0
        %v2102 = vadd.f32 0.0, %v2101
        %v2103 = vpop.f32.mrb[0].mxu0
        %2104 = vdwg.mxu0
        %v2106 = vsel %vm1869, %v1962, 0
        %v2109 = vsel %vm1966, %v1649, 0
        %2111 = vmatprep.subr.bf16.mxu0 0
        %2112 = vmatpush1.bf16.msra.mxu0 %v2109
        %2113 = vmatprep.subr.bf16.mxu0 0
        %2114 = vmatpush1.bf16.msra.mxu0 0
        %2115 = vmatprep.subr.bf16.mxu0 0
        %2116 = vmatpush1.bf16.msra.mxu0 0
        %2117 = vmatprep.subr.bf16.mxu0 0
        %2118 = vmatpush1.bf16.msra.mxu0 0
        %2119 = vmatprep.subr.bf16.mxu0 0
        %2120 = vmatpush1.bf16.msra.mxu0 0
        %2121 = vmatprep.subr.bf16.mxu0 0
        %2122 = vmatpush1.bf16.msra.mxu0 0
        %2123 = vmatprep.subr.bf16.mxu0 0
        %2124 = vmatpush1.bf16.msra.mxu0 0
        %2125 = vmatprep.subr.bf16.mxu0 0
        %2126 = vmatpush1.bf16.msra.mxu0 0
        %2127 = vmatprep.subr.bf16.mxu0 0
        %2128 = vmatpush1.bf16.msra.mxu0 0
        %2129 = vmatprep.subr.bf16.mxu0 0
        %2130 = vmatpush1.bf16.msra.mxu0 0
        %2131 = vmatprep.subr.bf16.mxu0 0
        %2132 = vmatpush1.bf16.msra.mxu0 0
        %2133 = vmatprep.subr.bf16.mxu0 0
        %2134 = vmatpush1.bf16.msra.mxu0 0
        %2135 = vmatprep.subr.bf16.mxu0 0
        %2136 = vmatpush1.bf16.msra.mxu0 0
        %2137 = vmatprep.subr.bf16.mxu0 0
        %2138 = vmatpush1.bf16.msra.mxu0 0
        %2139 = vmatprep.subr.bf16.mxu0 0
        %2140 = vmatpush1.bf16.msra.mxu0 0
        %2141 = vmatprep.subr.bf16.mxu0 0
        %2142 = vmatpush1.bf16.msra.mxu0 0
        %2143 = vmatprep.mubr.bf16.mxu0 0
        %2144 = vmatmul.mubr.bf16.gmra.mrb[0].mxu0 %v2106
        %v2145 = vpop.f32.mrb[0].mxu0
        %v2146 = vadd.f32 0.0, %v2145
        %v2147 = vpop.f32.mrb[0].mxu0
        %v2148 = vpop.f32.mrb[0].mxu0
        %v2149 = vadd.f32 0.0, %v2148
        %v2150 = vpop.f32.mrb[0].mxu0
        %2151 = vdwg.mxu0
        %2154 = vrot.lane.b32.xlu0 %v2052, 16
        %v2155 = vpop.permute.xlu0 %2154
        %2156 = vrot.lane.b32.xlu0 %v2055, 16
        %v2157 = vpop.permute.xlu0 %2156
        %2162 = vrot.lane.b32.xlu0 %v2099, 32
        %v2163 = vpop.permute.xlu0 %2162
        %2164 = vrot.lane.b32.xlu0 %v2102, 32
        %v2165 = vpop.permute.xlu0 %2164
        %2170 = vrot.lane.b32.xlu0 %v2146, 48
        %v2171 = vpop.permute.xlu0 %2170
        %2172 = vrot.lane.b32.xlu0 %v2149, 48
        %v2173 = vpop.permute.xlu0 %2172
        %v2176 = vsel %vm1653, %v2005, %v2155
        %v2177 = vsel %vm1653, %v2008, %v2157
        %vm2178 = vcmask 261120
        %v2179 = vsel %vm2178, %v2176, %v2163
        %v2180 = vsel %vm2178, %v2177, %v2165
        %vm2181 = vcmask 392192
        %v2182 = vsel %vm2181, %v2179, %v2171
        %v2183 = vsel %vm2181, %v2180, %v2173
        %v2184 = vld [vmem:[%s838] sm:$0xf]
        %v2185 = vld [vmem:[%s838 + $0x4] sm:$0xf]
        %v2186 = vld [vmem:[%s838 + $0x8] sm:$0xf]
        %v2187 = vld [vmem:[%s838 + $0xc] sm:$0xf]
        %v2188 = vld [vmem:[%s838 + $0x10] sm:$0xf]
        %v2189 = vld [vmem:[%s838 + $0x14] sm:$0xf]
        %v2190 = vld [vmem:[%s838 + $0x18] sm:$0xf]
        %v2191 = vld [vmem:[%s838 + $0x1c] sm:$0xf]
        %v2192 = vpack.c.bf16 %v2183, %v2182
        %v2201 = vunpack.c.l.b16 %v2184
        %v2202 = vunpack.c.l.b16 %v2185
        %v2203 = vunpack.c.l.b16 %v2186
        %v2204 = vunpack.c.l.b16 %v2187
        %v2205 = vunpack.c.l.b16 %v2188
        %v2206 = vunpack.c.l.b16 %v2189
        %v2207 = vunpack.c.l.b16 %v2190
        %v2208 = vunpack.c.l.b16 %v2191
        %v2209 = vpack.c.b16 %v2202, %v2201
        %v2210 = vpack.c.b16 %v2204, %v2203
        %v2211 = vpack.c.b16 %v2206, %v2205
        %v2212 = vpack.c.b16 %v2208, %v2207
        %v2218 = vsel %vm1450, %v2192, 0
        %2220 = vmatprep.subr.bf16.mxu0 0
        %2221 = vmatpush1.bf16.msra.mxu0 %v2209
        %2222 = vmatprep.subr.bf16.mxu0 0
        %2223 = vmatpush1.bf16.msra.mxu0 %v2210
        %2224 = vmatprep.subr.bf16.mxu0 0
        %2225 = vmatpush1.bf16.msra.mxu0 %v2211
        %2226 = vmatprep.subr.bf16.mxu0 0
        %2227 = vmatpush1.bf16.msra.mxu0 %v2212
        %2228 = vmatprep.subr.bf16.mxu0 0
        %2229 = vmatpush1.bf16.msra.mxu0 0
        %2230 = vmatprep.subr.bf16.mxu0 0
        %2231 = vmatpush1.bf16.msra.mxu0 0
        %2232 = vmatprep.subr.bf16.mxu0 0
        %2233 = vmatpush1.bf16.msra.mxu0 0
        %2234 = vmatprep.subr.bf16.mxu0 0
        %2235 = vmatpush1.bf16.msra.mxu0 0
        %2236 = vmatprep.subr.bf16.mxu0 0
        %2237 = vmatpush1.bf16.msra.mxu0 0
        %2238 = vmatprep.subr.bf16.mxu0 0
        %2239 = vmatpush1.bf16.msra.mxu0 0
        %2240 = vmatprep.subr.bf16.mxu0 0
        %2241 = vmatpush1.bf16.msra.mxu0 0
        %2242 = vmatprep.subr.bf16.mxu0 0
        %2243 = vmatpush1.bf16.msra.mxu0 0
        %2244 = vmatprep.subr.bf16.mxu0 0
        %2245 = vmatpush1.bf16.msra.mxu0 0
        %2246 = vmatprep.subr.bf16.mxu0 0
        %2247 = vmatpush1.bf16.msra.mxu0 0
        %2248 = vmatprep.subr.bf16.mxu0 0
        %2249 = vmatpush1.bf16.msra.mxu0 0
        %2250 = vmatprep.subr.bf16.mxu0 0
        %2251 = vmatpush1.bf16.msra.mxu0 0
        %2252 = vmatprep.mubr.bf16.mxu0 0
        %2253 = vmatmul.mubr.bf16.gmra.mrb[0].mxu0 %v2218
        %v2254 = vpop.f32.mrb[0].mxu0
        %v2255 = vadd.f32 0.0, %v2254
        %v2256 = vpop.f32.mrb[0].mxu0
        %v2257 = vpop.f32.mrb[0].mxu0
        %v2258 = vadd.f32 0.0, %v2257
        %v2259 = vpop.f32.mrb[0].mxu0
        %2260 = vdwg.mxu0
        %v2261 = vadd.f32 %v1446, %v2255
        %v2262 = vadd.f32 %v1447, %v2258
        %v2263 = vld [vmem:[%s841] sm:$0x1]
        %v2265 = vlaneseq
        %v2266 = vshrl.u32 %v2265, 7
        %v2267 = vsub.s32 0, %v2266
        %v2268 = vrot.slane %v2263, %v2267
        %v2270 = vadd.f32 %v2261, %v2268
        %v2271 = vadd.f32 %v2262, %v2268
        %v2272 = vld [vmem:[%s844] sm:$0x1]
        %v2273 = vld [vmem:[%s847] sm:$0x1]
        %v2274 = vsel %vm1450, %v2270, 0.0
        %2275 = vadd.xlane.f32.xlu0 %v2274
        %v2276 = vpop.xlane.xlu0 %2275
        %v2277 = vsel %vm1454, %v2271, 0.0
        %2278 = vadd.xlane.f32.xlu0 %v2277
        %v2279 = vpop.xlane.xlu0 %2278
        %v2280 = vmul.f32 %v2276, %v1458
        %v2281 = vmul.f32 %v2279, %v1458
        %v2282 = vsub.f32 %v2270, %v2280
        %v2283 = vsub.f32 %v2271, %v2281
        %v2284 = vmul.f32 %v2282, %v2282
        %v2285 = vmul.f32 %v2283, %v2283
        %v2286 = vsel %vm1450, %v2284, 0.0
        %2287 = vadd.xlane.f32.xlu0 %v2286
        %v2288 = vpop.xlane.xlu0 %2287
        %v2289 = vsel %vm1454, %v2285, 0.0
        %2290 = vadd.xlane.f32.xlu0 %v2289
        %v2291 = vpop.xlane.xlu0 %2290
        %v2292 = vmul.f32 %v2288, %v1458
        %v2293 = vmul.f32 %v2291, %v1458
        %v2294 = vadd.f32 %v2292, 1e-05
        %v2295 = vadd.f32 %v2293, 1e-05
        %v2296 = vrsqrt.pop %v2294
        %v2297 = vrsqrt.pop %v2295
        %v2298 = vmul.f32 %v2282, %v2296
        %v2299 = vmul.f32 %v2283, %v2297
        %v2301 = vlaneseq
        %v2302 = vshrl.u32 %v2301, 7
        %v2303 = vsub.s32 0, %v2302
        %v2304 = vrot.slane %v2272, %v2303
        %v2306 = vmul.f32 %v2298, %v2304
        %v2307 = vmul.f32 %v2299, %v2304
        %v2309 = vlaneseq
        %v2310 = vshrl.u32 %v2309, 7
        %v2311 = vsub.s32 0, %v2310
        %v2312 = vrot.slane %v2273, %v2311
        %v2314 = vadd.f32 %v2306, %v2312
        %v2315 = vadd.f32 %v2307, %v2312
        %v2316 = vld [vmem:[%s852] sm:$0xff]
        %v2317 = vld [vmem:[%s852 + $0x8] sm:$0xff]
        %v2318 = vld [vmem:[%s852 + $0x10] sm:$0xff]
        %v2319 = vld [vmem:[%s852 + $0x18] sm:$0xff]
        %v2320 = vld [vmem:[%s852 + $0x20] sm:$0xff]
        %v2321 = vld [vmem:[%s852 + $0x28] sm:$0xff]
        %v2322 = vld [vmem:[%s852 + $0x30] sm:$0xff]
        %v2323 = vld [vmem:[%s852 + $0x38] sm:$0xff]
        %v2324 = vpack.c.bf16 %v2315, %v2314
        %v2325 = vld [vmem:[%s856] sm:$0x3]
        %v2327 = vlaneseq
        %v2328 = vshrl.u32 %v2327, 7
        %v2329 = vsub.s32 0, %v2328
        %v2330 = vrot.slane %v2325, %v2329
        %v2331 = vlaneseq
        %v2332 = vshrl.u32 %v2331, 7
        %v2333 = vsub.s32 1, %v2332
        %v2334 = vrot.slane %v2325, %v2333
        %v2345 = vunpack.c.l.b16 %v2316
        %v2346 = vunpack.c.h.b16 %v2316
        %v2347 = vunpack.c.l.b16 %v2317
        %v2348 = vunpack.c.h.b16 %v2317
        %v2349 = vunpack.c.l.b16 %v2318
        %v2350 = vunpack.c.h.b16 %v2318
        %v2351 = vunpack.c.l.b16 %v2319
        %v2352 = vunpack.c.h.b16 %v2319
        %v2353 = vunpack.c.l.b16 %v2320
        %v2354 = vunpack.c.h.b16 %v2320
        %v2355 = vunpack.c.l.b16 %v2321
        %v2356 = vunpack.c.h.b16 %v2321
        %v2357 = vunpack.c.l.b16 %v2322
        %v2358 = vunpack.c.h.b16 %v2322
        %v2359 = vunpack.c.l.b16 %v2323
        %v2360 = vunpack.c.h.b16 %v2323
        %v2361 = vpack.c.b16 %v2347, %v2345
        %v2362 = vpack.c.b16 %v2348, %v2346
        %v2363 = vpack.c.b16 %v2351, %v2349
        %v2364 = vpack.c.b16 %v2352, %v2350
        %v2365 = vpack.c.b16 %v2355, %v2353
        %v2366 = vpack.c.b16 %v2356, %v2354
        %v2367 = vpack.c.b16 %v2359, %v2357
        %v2368 = vpack.c.b16 %v2360, %v2358
        %v2378 = vsel %vm1450, %v2324, 0
        %2380 = vmatprep.subr.bf16.mxu0 %v2362
        %2381 = vmatpush1.bf16.msra.mxu0 %v2361
        %2382 = vmatprep.subr.bf16.mxu0 %v2364
        %2383 = vmatpush1.bf16.msra.mxu0 %v2363
        %2384 = vmatprep.subr.bf16.mxu0 %v2366
        %2385 = vmatpush1.bf16.msra.mxu0 %v2365
        %2386 = vmatprep.subr.bf16.mxu0 %v2368
        %2387 = vmatpush1.bf16.msra.mxu0 %v2367
        %2388 = vmatprep.subr.bf16.mxu0 0
        %2389 = vmatpush1.bf16.msra.mxu0 0
        %2390 = vmatprep.subr.bf16.mxu0 0
        %2391 = vmatpush1.bf16.msra.mxu0 0
        %2392 = vmatprep.subr.bf16.mxu0 0
        %2393 = vmatpush1.bf16.msra.mxu0 0
        %2394 = vmatprep.subr.bf16.mxu0 0
        %2395 = vmatpush1.bf16.msra.mxu0 0
        %2396 = vmatprep.subr.bf16.mxu0 0
        %2397 = vmatpush1.bf16.msra.mxu0 0
        %2398 = vmatprep.subr.bf16.mxu0 0
        %2399 = vmatpush1.bf16.msra.mxu0 0
        %2400 = vmatprep.subr.bf16.mxu0 0
        %2401 = vmatpush1.bf16.msra.mxu0 0
        %2402 = vmatprep.subr.bf16.mxu0 0
        %2403 = vmatpush1.bf16.msra.mxu0 0
        %2404 = vmatprep.subr.bf16.mxu0 0
        %2405 = vmatpush1.bf16.msra.mxu0 0
        %2406 = vmatprep.subr.bf16.mxu0 0
        %2407 = vmatpush1.bf16.msra.mxu0 0
        %2408 = vmatprep.subr.bf16.mxu0 0
        %2409 = vmatpush1.bf16.msra.mxu0 0
        %2410 = vmatprep.subr.bf16.mxu0 0
        %2411 = vmatpush1.bf16.msra.mxu0 0
        %2412 = vmatprep.mubr.bf16.mxu0 0
        %2413 = vmatmul.mubr.bf16.gmra.mrb[0].mxu0 %v2378
        %v2414 = vpop.f32.mrb[0].mxu0
        %v2415 = vadd.f32 %v2330, %v2414
        %v2416 = vpop.f32.mrb[0].mxu0
        %v2417 = vadd.f32 %v2334, %v2416
        %v2418 = vpop.f32.mrb[0].mxu0
        %v2419 = vadd.f32 %v2330, %v2418
        %v2420 = vpop.f32.mrb[0].mxu0
        %v2421 = vadd.f32 %v2334, %v2420
        %2422 = vdwg.mxu0
        %v2423 = vmul.f32 %v2415, -1.702
        %v2424 = vmul.f32 %v2417, -1.702
        %v2425 = vmul.f32 %v2419, -1.702
        %v2426 = vmul.f32 %v2421, -1.702
        %v2427 = vmul.f32 %v2423, 1.442695
        %v2428 = vpow.pop %v2427
        %v2429 = vmul.f32 %v2424, 1.442695
        %v2430 = vpow.pop %v2429
        %v2431 = vmul.f32 %v2425, 1.442695
        %v2432 = vpow.pop %v2431
        %v2433 = vmul.f32 %v2426, 1.442695
        %v2434 = vpow.pop %v2433
        %v2435 = vadd.f32 %v2428, 1.0
        %v2436 = vadd.f32 %v2430, 1.0
        %v2437 = vadd.f32 %v2432, 1.0
        %v2438 = vadd.f32 %v2434, 1.0
        %v2439 = vrcp.pop %v2435
        %v2440 = vrcp.pop %v2436
        %v2441 = vrcp.pop %v2437
        %v2442 = vrcp.pop %v2438
        %v2443 = vmul.f32 %v2415, %v2439
        %v2444 = vmul.f32 %v2417, %v2440
        %v2445 = vmul.f32 %v2419, %v2441
        %v2446 = vmul.f32 %v2421, %v2442
        %v2447 = vld [vmem:[%s861] sm:$0xf]
        %v2448 = vld [vmem:[%s861 + $0x4] sm:$0xf]
        %v2449 = vld [vmem:[%s861 + $0x8] sm:$0xf]
        %v2450 = vld [vmem:[%s861 + $0xc] sm:$0xf]
        %v2451 = vld [vmem:[%s861 + $0x10] sm:$0xf]
        %v2452 = vld [vmem:[%s861 + $0x14] sm:$0xf]
        %v2453 = vld [vmem:[%s861 + $0x18] sm:$0xf]
        %v2454 = vld [vmem:[%s861 + $0x1c] sm:$0xf]
        %v2455 = vld [vmem:[%s861 + $0x20] sm:$0xf]
        %v2456 = vld [vmem:[%s861 + $0x24] sm:$0xf]
        %v2457 = vld [vmem:[%s861 + $0x28] sm:$0xf]
        %v2458 = vld [vmem:[%s861 + $0x2c] sm:$0xf]
        %v2459 = vld [vmem:[%s861 + $0x30] sm:$0xf]
        %v2460 = vld [vmem:[%s861 + $0x34] sm:$0xf]
        %v2461 = vld [vmem:[%s861 + $0x38] sm:$0xf]
        %v2462 = vld [vmem:[%s861 + $0x3c] sm:$0xf]
        %v2463 = vld [vmem:[%s861 + $0x40] sm:$0xf]
        %v2464 = vld [vmem:[%s861 + $0x44] sm:$0xf]
        %v2465 = vld [vmem:[%s861 + $0x48] sm:$0xf]
        %v2466 = vld [vmem:[%s861 + $0x4c] sm:$0xf]
        %v2467 = vld [vmem:[%s861 + $0x50] sm:$0xf]
        %v2468 = vld [vmem:[%s861 + $0x54] sm:$0xf]
        %v2469 = vld [vmem:[%s861 + $0x58] sm:$0xf]
        %v2470 = vld [vmem:[%s861 + $0x5c] sm:$0xf]
        %v2471 = vld [vmem:[%s861 + $0x60] sm:$0xf]
        %v2472 = vld [vmem:[%s861 + $0x64] sm:$0xf]
        %v2473 = vld [vmem:[%s861 + $0x68] sm:$0xf]
        %v2474 = vld [vmem:[%s861 + $0x6c] sm:$0xf]
        %v2475 = vld [vmem:[%s861 + $0x70] sm:$0xf]
        %v2476 = vld [vmem:[%s861 + $0x74] sm:$0xf]
        %v2477 = vld [vmem:[%s861 + $0x78] sm:$0xf]
        %v2478 = vld [vmem:[%s861 + $0x7c] sm:$0xf]
        %v2479 = vpack.c.bf16 %v2445, %v2443
        %v2480 = vpack.c.bf16 %v2446, %v2444
        %v2481 = vld [vmem:[%s864] sm:$0x1]
        %v2483 = vlaneseq
        %v2484 = vshrl.u32 %v2483, 7
        %v2485 = vsub.s32 0, %v2484
        %v2486 = vrot.slane %v2481, %v2485
        %v2520 = vunpack.c.l.b16 %v2447
        %v2521 = vunpack.c.l.b16 %v2448
        %v2522 = vunpack.c.l.b16 %v2449
        %v2523 = vunpack.c.l.b16 %v2450
        %v2524 = vunpack.c.l.b16 %v2451
        %v2525 = vunpack.c.l.b16 %v2452
        %v2526 = vunpack.c.l.b16 %v2453
        %v2527 = vunpack.c.l.b16 %v2454
        %v2528 = vunpack.c.l.b16 %v2455
        %v2529 = vunpack.c.l.b16 %v2456
        %v2530 = vunpack.c.l.b16 %v2457
        %v2531 = vunpack.c.l.b16 %v2458
        %v2532 = vunpack.c.l.b16 %v2459
        %v2533 = vunpack.c.l.b16 %v2460
        %v2534 = vunpack.c.l.b16 %v2461
        %v2535 = vunpack.c.l.b16 %v2462
        %v2536 = vunpack.c.l.b16 %v2463
        %v2537 = vunpack.c.l.b16 %v2464
        %v2538 = vunpack.c.l.b16 %v2465
        %v2539 = vunpack.c.l.b16 %v2466
        %v2540 = vunpack.c.l.b16 %v2467
        %v2541 = vunpack.c.l.b16 %v2468
        %v2542 = vunpack.c.l.b16 %v2469
        %v2543 = vunpack.c.l.b16 %v2470
        %v2544 = vunpack.c.l.b16 %v2471
        %v2545 = vunpack.c.l.b16 %v2472
        %v2546 = vunpack.c.l.b16 %v2473
        %v2547 = vunpack.c.l.b16 %v2474
        %v2548 = vunpack.c.l.b16 %v2475
        %v2549 = vunpack.c.l.b16 %v2476
        %v2550 = vunpack.c.l.b16 %v2477
        %v2551 = vunpack.c.l.b16 %v2478
        %v2552 = vpack.c.b16 %v2521, %v2520
        %v2553 = vpack.c.b16 %v2523, %v2522
        %v2554 = vpack.c.b16 %v2525, %v2524
        %v2555 = vpack.c.b16 %v2527, %v2526
        %v2556 = vpack.c.b16 %v2529, %v2528
        %v2557 = vpack.c.b16 %v2531, %v2530
        %v2558 = vpack.c.b16 %v2533, %v2532
        %v2559 = vpack.c.b16 %v2535, %v2534
        %v2560 = vpack.c.b16 %v2537, %v2536
        %v2561 = vpack.c.b16 %v2539, %v2538
        %v2562 = vpack.c.b16 %v2541, %v2540
        %v2563 = vpack.c.b16 %v2543, %v2542
        %v2564 = vpack.c.b16 %v2545, %v2544
        %v2565 = vpack.c.b16 %v2547, %v2546
        %v2566 = vpack.c.b16 %v2549, %v2548
        %v2567 = vpack.c.b16 %v2551, %v2550
        %2584 = vmatprep.subr.bf16.mxu0 0
        %2585 = vmatpush1.bf16.msra.mxu0 %v2552
        %2586 = vmatprep.subr.bf16.mxu0 0
        %2587 = vmatpush1.bf16.msra.mxu0 %v2553
        %2588 = vmatprep.subr.bf16.mxu0 0
        %2589 = vmatpush1.bf16.msra.mxu0 %v2554
        %2590 = vmatprep.subr.bf16.mxu0 0
        %2591 = vmatpush1.bf16.msra.mxu0 %v2555
        %2592 = vmatprep.subr.bf16.mxu0 0
        %2593 = vmatpush1.bf16.msra.mxu0 %v2556
        %2594 = vmatprep.subr.bf16.mxu0 0
        %2595 = vmatpush1.bf16.msra.mxu0 %v2557
        %2596 = vmatprep.subr.bf16.mxu0 0
        %2597 = vmatpush1.bf16.msra.mxu0 %v2558
        %2598 = vmatprep.subr.bf16.mxu0 0
        %2599 = vmatpush1.bf16.msra.mxu0 %v2559
        %2600 = vmatprep.subr.bf16.mxu0 0
        %2601 = vmatpush1.bf16.msra.mxu0 %v2560
        %2602 = vmatprep.subr.bf16.mxu0 0
        %2603 = vmatpush1.bf16.msra.mxu0 %v2561
        %2604 = vmatprep.subr.bf16.mxu0 0
        %2605 = vmatpush1.bf16.msra.mxu0 %v2562
        %2606 = vmatprep.subr.bf16.mxu0 0
        %2607 = vmatpush1.bf16.msra.mxu0 %v2563
        %2608 = vmatprep.subr.bf16.mxu0 0
        %2609 = vmatpush1.bf16.msra.mxu0 %v2564
        %2610 = vmatprep.subr.bf16.mxu0 0
        %2611 = vmatpush1.bf16.msra.mxu0 %v2565
        %2612 = vmatprep.subr.bf16.mxu0 0
        %2613 = vmatpush1.bf16.msra.mxu0 %v2566
        %2614 = vmatprep.subr.bf16.mxu0 0
        %2615 = vmatpush1.bf16.msra.mxu0 %v2567
        %2616 = vmatprep.mubr.bf16.mxu0 %v2480
        %2617 = vmatmul.mubr.bf16.gmra.mrb[0].mxu0 %v2479
        %v2618 = vpop.f32.mrb[0].mxu0
        %v2619 = vadd.f32 %v2486, %v2618
        %v2620 = vpop.f32.mrb[0].mxu0
        %v2621 = vpop.f32.mrb[0].mxu0
        %v2622 = vadd.f32 %v2486, %v2621
        %v2623 = vpop.f32.mrb[0].mxu0
        %2624 = vdwg.mxu0
        %v2625 = vadd.f32 %v2270, %v2619
        %v2626 = vadd.f32 %v2271, %v2622
        %2627 = vst.msk [vmem:[#allocation2] sm:$0xff] %vm1450, %v2625
        %2628 = vst.msk [vmem:[#allocation2 + $0x8] sm:$0x3] %vm1454, %v2626
        %p2629 = scmp.eq.s32.totalorder %s40, 1
        // Predicated region
        $region109: #{clip_encode_image.1} parent=103 // pred_check
          %p2630 = pneg %p2629
        $region110: #{clip_encode_image.1} parent=103 // pred_check_branch
          %2632 = sbr.rel (%p2630) target = $region112
        $region111: #{clip_encode_image.1} parent=103 // pred_region
          %v2634 = vrot.slane %v2625, 4
          %vm2636 = vcmask 1040384
          %v2637 = vsel %vm2636, %v2625, %v2634
          %v2638 = vld [vmem:[%s18] sm:$0x1]
          %v2639 = vld [vmem:[%s19] sm:$0x1]
          %v2640 = vsel %vm1454, %v2637, 0.0
          %2641 = vadd.xlane.f32.xlu0 %v2640
          %v2642 = vpop.xlane.xlu0 %2641
          %v2643 = vmul.f32 %v2642, %v1458
          %v2644 = vsub.f32 %v2637, %v2643
          %v2645 = vmul.f32 %v2644, %v2644
          %v2646 = vsel %vm1454, %v2645, 0.0
          %2647 = vadd.xlane.f32.xlu0 %v2646
          %v2648 = vpop.xlane.xlu0 %2647
          %v2649 = vmul.f32 %v2648, %v1458
          %v2650 = vadd.f32 %v2649, 1e-05
          %v2651 = vrsqrt.pop %v2650
          %v2652 = vmul.f32 %v2644, %v2651
          %v2654 = vlaneseq
          %v2655 = vshrl.u32 %v2654, 7
          %v2656 = vsub.s32 0, %v2655
          %v2657 = vrot.slane %v2638, %v2656
          %v2659 = vmul.f32 %v2652, %v2657
          %v2661 = vlaneseq
          %v2662 = vshrl.u32 %v2661, 7
          %v2663 = vsub.s32 0, %v2662
          %v2664 = vrot.slane %v2639, %v2663
          %v2666 = vadd.f32 %v2659, %v2664
          %v2667 = vld [vmem:[%s20] sm:$0xf]
          %v2668 = vld [vmem:[%s20 + $0x4] sm:$0xf]
          %v2669 = vld [vmem:[%s20 + $0x8] sm:$0xf]
          %v2670 = vld [vmem:[%s20 + $0xc] sm:$0xf]
          %v2671 = vld [vmem:[%s20 + $0x10] sm:$0xf]
          %v2672 = vld [vmem:[%s20 + $0x14] sm:$0xf]
          %v2673 = vld [vmem:[%s20 + $0x18] sm:$0xf]
          %v2674 = vld [vmem:[%s20 + $0x1c] sm:$0xf]
          %v2675 = vpack.c.bf16 %v2666, %v2666
          %v2684 = vunpack.c.l.b16 %v2667
          %v2685 = vunpack.c.l.b16 %v2668
          %v2686 = vunpack.c.l.b16 %v2669
          %v2687 = vunpack.c.l.b16 %v2670
          %v2688 = vunpack.c.l.b16 %v2671
          %v2689 = vunpack.c.l.b16 %v2672
          %v2690 = vunpack.c.l.b16 %v2673
          %v2691 = vunpack.c.l.b16 %v2674
          %v2692 = vpack.c.b16 %v2685, %v2684
          %v2693 = vpack.c.b16 %v2687, %v2686
          %v2694 = vpack.c.b16 %v2689, %v2688
          %v2695 = vpack.c.b16 %v2691, %v2690
          %v2701 = vsel %vm1450, %v2675, 0
          %2703 = vmatprep.subr.bf16.mxu0 0
          %2704 = vmatpush1.bf16.msra.mxu0 %v2692
          %2705 = vmatprep.subr.bf16.mxu0 0
          %2706 = vmatpush1.bf16.msra.mxu0 %v2693
          %2707 = vmatprep.subr.bf16.mxu0 0
          %2708 = vmatpush1.bf16.msra.mxu0 %v2694
          %2709 = vmatprep.subr.bf16.mxu0 0
          %2710 = vmatpush1.bf16.msra.mxu0 %v2695
          %2711 = vmatprep.subr.bf16.mxu0 0
          %2712 = vmatpush1.bf16.msra.mxu0 0
          %2713 = vmatprep.subr.bf16.mxu0 0
          %2714 = vmatpush1.bf16.msra.mxu0 0
          %2715 = vmatprep.subr.bf16.mxu0 0
          %2716 = vmatpush1.bf16.msra.mxu0 0
          %2717 = vmatprep.subr.bf16.mxu0 0
          %2718 = vmatpush1.bf16.msra.mxu0 0
          %2719 = vmatprep.subr.bf16.mxu0 0
          %2720 = vmatpush1.bf16.msra.mxu0 0
          %2721 = vmatprep.subr.bf16.mxu0 0
          %2722 = vmatpush1.bf16.msra.mxu0 0
          %2723 = vmatprep.subr.bf16.mxu0 0
          %2724 = vmatpush1.bf16.msra.mxu0 0
          %2725 = vmatprep.subr.bf16.mxu0 0
          %2726 = vmatpush1.bf16.msra.mxu0 0
          %2727 = vmatprep.subr.bf16.mxu0 0
          %2728 = vmatpush1.bf16.msra.mxu0 0
          %2729 = vmatprep.subr.bf16.mxu0 0
          %2730 = vmatpush1.bf16.msra.mxu0 0
          %2731 = vmatprep.subr.bf16.mxu0 0
          %2732 = vmatpush1.bf16.msra.mxu0 0
          %2733 = vmatprep.subr.bf16.mxu0 0
          %2734 = vmatpush1.bf16.msra.mxu0 0
          %2735 = vmatprep.mubr.bf16.mxu0 0
          %2736 = vmatmul.mubr.bf16.gmra.mrb[0].mxu0 %v2701
          %v2737 = vpop.f32.mrb[0].mxu0
          %v2738 = vadd.f32 0.0, %v2737
          %v2739 = vpop.f32.mrb[0].mxu0
          %v2740 = vpop.f32.mrb[0].mxu0
          %v2741 = vpop.f32.mrb[0].mxu0
          %2742 = vdwg.mxu0
          %2743 = vst [vmem:[%s813] sm:$0x3] %v2738
        $region112: #{clip_encode_image.1} parent=103 // pred_fallthru
          _
        %s2744 = sand.u32 %s561, 1
        %s2745 = scalar_lea.sflag [#allocation4], %s2744
        %s2746 = sand.u32 %s561, 1
        %s2747 = smul.addr %s2746, 2
        %s2748 = scalar_lea.vmem [#allocation3], %s2747
        // Predicated region
        $region113: #{clip_encode_image.1} parent=103 // pred_check
          %p2749 = pneg %p571
        $region114: #{clip_encode_image.1} parent=103 // pred_check_branch
          %2751 = sbr.rel (%p2749) target = $region116
        $region115: #{clip_encode_image.1} parent=103 // pred_region
          %s2753 = ssub.s32 32, 32
          %2754 = vsyncadd %s2745, %s2753
          %s2755 = smul.addr %s39, 32
          %s2756 = scalar_lea.hbm %s21, %s2755
          %s2758 = sshll.u32 %s2748, 4
          %s2759 = int_to_ptr.vmem [resolvable:$true] %s2758
          %2761 = dma.vmem_to_hbm [thread:$0]  %s2759, 32, %s2756, %s2745
        $region116: #{clip_encode_image.1} parent=103 // pred_fallthru
          _
      $region104: #{clip_encode_image.1} parent=5 // pred_fallthru
        _
      %p2762 = scmp.le.s32.totalorder 2, %s30
      // Predicated region
      $region117: #{clip_encode_image.1} parent=5 // pred_check
        %p2763 = pneg %p2762
      $region118: #{clip_encode_image.1} parent=5 // pred_check_branch
        %2765 = sbr.rel (%p2763) target = $region120
      $region119: #{clip_encode_image.1} parent=5 // pred_region
        %s2766 = ssub.s32 %s30, 2
        // Predicated region
        $region121: #{clip_encode_image.1} parent=119 // pred_check
          %p2767 = pneg %p577
        $region122: #{clip_encode_image.1} parent=119 // pred_check_branch
          %2769 = sbr.rel (%p2767) target = $region124
        $region123: #{clip_encode_image.1} parent=119 // pred_region
          %s2770 = sand.u32 %s562, 1
          %s2771 = scalar_lea.sflag [#allocation4], %s2770
          %s2772 = sand.u32 %s562, 1
          %s2773 = smul.addr %s2772, 2
          %s2774 = scalar_lea.vmem [#allocation3], %s2773
          %2775 = dma.done %s2771, 32
        $region124: #{clip_encode_image.1} parent=119 // pred_fallthru
          _
      $region120: #{clip_encode_image.1} parent=5 // pred_fallthru
        _
    $region6: #{clip_encode_image.1} parent=1 // loop_footer
      %s34 = sadd.s32 1, %s30
    $region7: #{clip_encode_image.1} parent=1 // loop_footer_branch
      %29 = sbr.rel target = $region3
    $region8: #{clip_encode_image.1} parent=1 // loop_exit
      _
    %2776 = vsyncpa [#allocation4], 1
    %s2777 = scalar_lea.sflag [#allocation4], 1
    %2778 = vsyncpa %s2777, 1

</llo_original>
